<compile_context>
chip_gen: v5e
topology: v5e:2x2
jax: 0.10.0
libtpu: 0.0.40
codegen_flags: <defaults>
</compile_context>

<pallas_src>
import jax
import jax.numpy as jnp
import numpy as np
from jax import lax
from jax.experimental import pallas as pl
from jax.experimental.pallas import tpu as pltpu


def _bottleneck_kernel(x_ref, w1_ref, w2_ref, w3_ref,
                       b1_ref, b2_ref, b3_ref,
                       o_ref, acc_ref):
    # x_ref : (1, H, W, Cin) f32     w1 : (Cin, P) bf16   w2 : (3, 3, P, P) bf16
    # w3 : (P, 4P) bf16              bN : (1, Cn) f32     o_ref : (1, H, W, 4P)
    # acc_ref : (H*W, P) f32 VMEM scratch (conv2 accumulator)
    _, H, W, Cin = x_ref.shape
    P = w1_ref.shape[1]
    HW = H * W

    # ---- conv1 (1x1) + folded-BN bias + ReLU --------------------------------
    x2d = x_ref[0].reshape(HW, Cin)
    y1 = jnp.dot(x2d.astype(jnp.bfloat16), w1_ref[...],
                 preferred_element_type=jnp.float32)
    y1 = jnp.maximum(y1 + b1_ref[...], 0.0)                    # (HW, P) f32

    # ---- conv2 (3x3, stride=1, pad=1) + folded-BN bias + ReLU ---------------
    # Each of the 9 taps is a sublane rotation (XLU) of the flattened activation
    # matrix; out-of-bounds (conv zero-padding) contributions are masked out.
    row = lax.broadcasted_iota(jnp.int32, (H, W, P), 0).reshape(HW, P)
    col = lax.broadcasted_iota(jnp.int32, (H, W, P), 1).reshape(HW, P)

    first = True
    for dh in range(3):
        for dw in range(3):
            off = (dh - 1) * W + (dw - 1)          # flat source offset
            if off == 0:
                tap = y1
            else:
                # tap[i] = y1_flat[i + off]  (modulo wrap, fixed by the mask)
                tap = pltpu.roll(y1, shift=(-off) % HW, axis=0)
            conds = []
            if dh == 0:
                conds.append(row >= 1)
            elif dh == 2:
                conds.append(row <= H - 2)
            if dw == 0:
                conds.append(col >= 1)
            elif dw == 2:
                conds.append(col <= W - 2)
            if conds:
                m = conds[0]
                for c in conds[1:]:
                    m = jnp.logical_and(m, c)
                tap = jnp.where(m, tap, 0.0)
            partial = jnp.dot(tap.astype(jnp.bfloat16), w2_ref[dh, dw],
                              preferred_element_type=jnp.float32)
            if first:
                acc_ref[...] = partial
                first = False
            else:
                acc_ref[...] += partial

    y2 = jnp.maximum(acc_ref[...] + b2_ref[...], 0.0)          # (HW, P) f32

    # ---- conv3 (1x1) + folded-BN bias + residual + ReLU ---------------------
    y3 = jnp.dot(y2.astype(jnp.bfloat16), w3_ref[...],
                 preferred_element_type=jnp.float32) + b3_ref[...]
    # Re-read the input block from the ref for the residual (keeps the
    # conv1-time value dead instead of live across the whole kernel).
    out = jnp.maximum(y3 + x_ref[0].reshape(HW, Cin), 0.0)
    o_ref[0] = out.reshape(H, W, Cin)


def bottleneck_pallas(x_nhwc, w1, w2, w3, b1, b2, b3):
    """x_nhwc f32; w* bf16 with BN scale folded in; b* f32 (1, C)."""
    N, H, W, Cin = x_nhwc.shape
    P = w1.shape[1]
    Cout = w3.shape[1]
    assert Cout == Cin, "residual add requires inplanes == 4*planes (downsample=None)"

    def full_spec(a):
        nd = a.ndim
        return pl.BlockSpec(a.shape, lambda n, nd=nd: (0,) * nd)

    return pl.pallas_call(
        _bottleneck_kernel,
        out_shape=jax.ShapeDtypeStruct((N, H, W, Cout), jnp.float32),
        grid=(N,),
        in_specs=[
            pl.BlockSpec((1, H, W, Cin), lambda n: (n, 0, 0, 0)),   # x
            full_spec(w1), full_spec(w2), full_spec(w3),
            full_spec(b1), full_spec(b2), full_spec(b3),
        ],
        out_specs=pl.BlockSpec((1, H, W, Cout), lambda n: (n, 0, 0, 0)),
        scratch_shapes=[pltpu.VMEM((H * W, P), jnp.float32)],
        compiler_params=pltpu.CompilerParams(
            dimension_semantics=("parallel",)),   # no cross-iteration carry
    )(x_nhwc, w1, w2, w3, b1, b2, b3)


def _ref_bottleneck(x, w1, w2, w3, b1, b2, b3):
    """Pure-JAX NHWC reference using the same folded bf16 weights / f32 accum."""
    H, W = x.shape[1], x.shape[2]
    f32 = jnp.float32
    y1 = jnp.einsum('nhwc,cp->nhwp', x.astype(jnp.bfloat16), w1,
                    preferred_element_type=f32) + b1
    y1 = jnp.maximum(y1, 0.0)
    y1p = jnp.pad(y1, ((0, 0), (1, 1), (1, 1), (0, 0)))
    acc = jnp.zeros(y1.shape, f32)
    for dh in range(3):
        for dw in range(3):
            acc = acc + jnp.einsum(
                'nhwc,cp->nhwp',
                y1p[:, dh:dh + H, dw:dw + W, :].astype(jnp.bfloat16),
                w2[dh, dw], preferred_element_type=f32)
    y2 = jnp.maximum(acc + b2, 0.0)
    y3 = jnp.einsum('nhwc,cp->nhwp', y2.astype(jnp.bfloat16), w3,
                    preferred_element_type=f32) + b3
    return jnp.maximum(y3 + x, 0.0)


def _fold_bn(gamma, beta, mean, var, eps=1e-5):
    scale = gamma / jnp.sqrt(var + eps)
    shift = beta - mean * scale
    return scale, shift


if __name__ == "__main__":
    key = jax.random.PRNGKey(0)
    N, H, W = 2, 16, 16
    planes = 32
    inplanes = planes * 4          # 128 -> identity residual is shape-compatible

    keys = jax.random.split(key, 8)

    # Input in PyTorch NCHW convention, transposed to NHWC for the kernel.
    x_nchw = jax.random.normal(keys[0], (N, inplanes, H, W), jnp.float32)
    x_nhwc = jnp.transpose(x_nchw, (0, 2, 3, 1))

    # Conv weights in PyTorch layout (Cout, Cin, kH, kW), then to matmul form.
    w1_t = jax.random.normal(keys[1], (planes, inplanes, 1, 1), jnp.float32) * 0.1
    w2_t = jax.random.normal(keys[2], (planes, planes, 3, 3), jnp.float32) * 0.1
    w3_t = jax.random.normal(keys[3], (planes * 4, planes, 1, 1), jnp.float32) * 0.1

    w1 = w1_t[:, :, 0, 0].T                       # (Cin, P)
    w2 = jnp.transpose(w2_t, (2, 3, 1, 0))        # (3, 3, P, P)
    w3 = w3_t[:, :, 0, 0].T                       # (P, 4P)

    # BatchNorm parameters (inference mode), folded to per-channel scale/shift.
    def bn_params(k, c):
        kg, kb, km, kv = jax.random.split(k, 4)
        gamma = 1.0 + 0.1 * jax.random.normal(kg, (c,), jnp.float32)
        beta = 0.1 * jax.random.normal(kb, (c,), jnp.float32)
        mean = 0.1 * jax.random.normal(km, (c,), jnp.float32)
        var = jnp.abs(jax.random.normal(kv, (c,), jnp.float32)) + 0.5
        return _fold_bn(gamma, beta, mean, var)

    s1, sh1 = bn_params(keys[4], planes)
    s2, sh2 = bn_params(keys[5], planes)
    s3, sh3 = bn_params(keys[6], planes * 4)

    # Fold the BN scales into the conv weights (output-channel scaling) and
    # cast the weights to bf16; keep biases / residual path in f32.
    w1f = (w1 * s1[None, :]).astype(jnp.bfloat16)
    w2f = (w2 * s2[None, None, None, :]).astype(jnp.bfloat16)
    w3f = (w3 * s3[None, :]).astype(jnp.bfloat16)
    b1 = sh1.reshape(1, -1).astype(jnp.float32)
    b2 = sh2.reshape(1, -1).astype(jnp.float32)
    b3 = sh3.reshape(1, -1).astype(jnp.float32)

    out = bottleneck_pallas(x_nhwc, w1f, w2f, w3f, b1, b2, b3)
    out = jax.block_until_ready(out)

    ref = _ref_bottleneck(x_nhwc, w1f, w2f, w3f, b1, b2, b3)
    np.testing.assert_allclose(np.asarray(out), np.asarray(ref),
                               rtol=1e-3, atol=1e-3)

    print("KERNEL_OK")
</pallas_src>

<mosaic_0001>
module attributes {stable_mosaic.version = 11 : i64} {
  func.func @_bottleneck_kernel(%arg0: i32, %arg1: memref<1x16x16x128xf32, #tpu.memory_space<vmem>>, %arg2: memref<128x32xbf16, #tpu.memory_space<vmem>>, %arg3: memref<3x3x32x32xbf16, #tpu.memory_space<vmem>>, %arg4: memref<32x128xbf16, #tpu.memory_space<vmem>>, %arg5: memref<1x32xf32, #tpu.memory_space<vmem>>, %arg6: memref<1x32xf32, #tpu.memory_space<vmem>>, %arg7: memref<1x128xf32, #tpu.memory_space<vmem>>, %arg8: memref<1x16x16x128xf32, #tpu.memory_space<vmem>>, %arg9: memref<256x32xf32, #tpu.memory_space<vmem>>) attributes {dimension_semantics = [#tpu.dimension_semantics<parallel>], iteration_bounds = array<i64: 2>, scalar_prefetch = 0 : i64, scratch_operands = 1 : i64, tpu.core_type = #tpu.core_type<tc>, window_params = [{transform_indices = @transform_0, window_bounds = array<i64: 1, 16, 16, 128>}, {pipeline_mode = #tpu.pipeline_mode<synchronous>, transform_indices = @transform_1, window_bounds = array<i64: 128, 32>}, {pipeline_mode = #tpu.pipeline_mode<synchronous>, transform_indices = @transform_2, window_bounds = array<i64: 3, 3, 32, 32>}, {pipeline_mode = #tpu.pipeline_mode<synchronous>, transform_indices = @transform_3, window_bounds = array<i64: 32, 128>}, {pipeline_mode = #tpu.pipeline_mode<synchronous>, transform_indices = @transform_4, window_bounds = array<i64: 1, 32>}, {pipeline_mode = #tpu.pipeline_mode<synchronous>, transform_indices = @transform_5, window_bounds = array<i64: 1, 32>}, {pipeline_mode = #tpu.pipeline_mode<synchronous>, transform_indices = @transform_6, window_bounds = array<i64: 1, 128>}, {transform_indices = @transform_7, window_bounds = array<i64: 1, 16, 16, 128>}]} {
    %c0 = arith.constant 0 : index
    %c0_0 = arith.constant 0 : index
    %c0_1 = arith.constant 0 : index
    %c0_2 = arith.constant 0 : index
    %0 = vector.load %arg1[%c0, %c0_0, %c0_1, %c0_2] : memref<1x16x16x128xf32, #tpu.memory_space<vmem>>, vector<1x16x16x128xf32>
    %1 = vector.shape_cast %0 : vector<1x16x16x128xf32> to vector<16x16x128xf32>
    %2 = vector.shape_cast %1 : vector<16x16x128xf32> to vector<256x128xf32>
    %3 = arith.truncf %2 : vector<256x128xf32> to vector<256x128xbf16>
    %c0_3 = arith.constant 0 : index
    %c0_4 = arith.constant 0 : index
    %4 = vector.load %arg2[%c0_3, %c0_4] : memref<128x32xbf16, #tpu.memory_space<vmem>>, vector<128x32xbf16>
    %cst = arith.constant dense<0.000000e+00> : vector<256x32xf32>
    %5 = tpu.matmul %3, %4, %cst {dimension_numbers = #tpu.dot_dimension_numbers<[1], [0], [0], [1], [0, 0, 1, 1], [], []>} : vector<256x128xbf16>, vector<128x32xbf16>, vector<256x32xf32> -> vector<256x32xf32>
    %c0_5 = arith.constant 0 : index
    %c0_6 = arith.constant 0 : index
    %6 = vector.load %arg5[%c0_5, %c0_6] : memref<1x32xf32, #tpu.memory_space<vmem>>, vector<1x32xf32>
    %7 = vector.broadcast %6 : vector<1x32xf32> to vector<256x32xf32>
    %8 = arith.addf %5, %7 : vector<256x32xf32>
    %cst_7 = arith.constant 0.000000e+00 : f32
    %9 = vector.broadcast %cst_7 : f32 to vector<256x32xf32>
    %10 = arith.maximumf %8, %9 : vector<256x32xf32>
    %11 = tpu.iota {dimensions = array<i32: 0>} : vector<16x16x32xi32>
    %12 = vector.shape_cast %11 : vector<16x16x32xi32> to vector<256x32xi32>
    %13 = tpu.iota {dimensions = array<i32: 1>} : vector<16x16x32xi32>
    %14 = vector.shape_cast %13 : vector<16x16x32xi32> to vector<256x32xi32>
    %c17_i32 = arith.constant 17 : i32
    %15 = tpu.dynamic_rotate %10 by %c17_i32 dim 0 : vector<256x32xf32>, i32 -> vector<256x32xf32>
    %c1_i32 = arith.constant 1 : i32
    %16 = vector.broadcast %c1_i32 : i32 to vector<256x32xi32>
    %17 = arith.cmpi sge, %12, %16 : vector<256x32xi32>
    %c1_i32_8 = arith.constant 1 : i32
    %18 = vector.broadcast %c1_i32_8 : i32 to vector<256x32xi32>
    %19 = arith.cmpi sge, %14, %18 : vector<256x32xi32>
    %20 = arith.andi %17, %19 : vector<256x32xi1>
    %cst_9 = arith.constant 0.000000e+00 : f32
    %21 = vector.broadcast %cst_9 : f32 to vector<256x32xf32>
    %22 = arith.select %20, %15, %21 : vector<256x32xi1>, vector<256x32xf32>
    %23 = arith.truncf %22 : vector<256x32xf32> to vector<256x32xbf16>
    %c0_10 = arith.constant 0 : index
    %c0_11 = arith.constant 0 : index
    %c0_12 = arith.constant 0 : index
    %c0_13 = arith.constant 0 : index
    %24 = vector.load %arg3[%c0_10, %c0_11, %c0_12, %c0_13] : memref<3x3x32x32xbf16, #tpu.memory_space<vmem>>, vector<1x1x32x32xbf16>
    %25 = vector.shape_cast %24 : vector<1x1x32x32xbf16> to vector<32x32xbf16>
    %cst_14 = arith.constant dense<0.000000e+00> : vector<256x32xf32>
    %26 = tpu.matmul %23, %25, %cst_14 {dimension_numbers = #tpu.dot_dimension_numbers<[1], [0], [0], [1], [0, 0, 1, 1], [], []>} : vector<256x32xbf16>, vector<32x32xbf16>, vector<256x32xf32> -> vector<256x32xf32>
    %c0_15 = arith.constant 0 : index
    %c0_16 = arith.constant 0 : index
    %27 = vector.load %arg9[%c0_15, %c0_16] : memref<256x32xf32, #tpu.memory_space<vmem>>, vector<256x32xf32>
    tpu.vector_store %arg9[%c0_15, %c0_16], %26 {strides = array<i32>} : memref<256x32xf32, #tpu.memory_space<vmem>>, vector<256x32xf32>,
    %c16_i32 = arith.constant 16 : i32
    %28 = tpu.dynamic_rotate %10 by %c16_i32 dim 0 : vector<256x32xf32>, i32 -> vector<256x32xf32>
    %c1_i32_17 = arith.constant 1 : i32
    %29 = vector.broadcast %c1_i32_17 : i32 to vector<256x32xi32>
    %30 = arith.cmpi sge, %12, %29 : vector<256x32xi32>
    %cst_18 = arith.constant 0.000000e+00 : f32
    %31 = vector.broadcast %cst_18 : f32 to vector<256x32xf32>
    %32 = arith.select %30, %28, %31 : vector<256x32xi1>, vector<256x32xf32>
    %33 = arith.truncf %32 : vector<256x32xf32> to vector<256x32xbf16>
    %c0_19 = arith.constant 0 : index
    %c1 = arith.constant 1 : index
    %c0_20 = arith.constant 0 : index
    %c0_21 = arith.constant 0 : index
    %34 = vector.load %arg3[%c0_19, %c1, %c0_20, %c0_21] : memref<3x3x32x32xbf16, #tpu.memory_space<vmem>>, vector<1x1x32x32xbf16>
    %35 = vector.shape_cast %34 : vector<1x1x32x32xbf16> to vector<32x32xbf16>
    %cst_22 = arith.constant dense<0.000000e+00> : vector<256x32xf32>
    %36 = tpu.matmul %33, %35, %cst_22 {dimension_numbers = #tpu.dot_dimension_numbers<[1], [0], [0], [1], [0, 0, 1, 1], [], []>} : vector<256x32xbf16>, vector<32x32xbf16>, vector<256x32xf32> -> vector<256x32xf32>
    %c0_23 = arith.constant 0 : index
    %c0_24 = arith.constant 0 : index
    %37 = vector.load %arg9[%c0_23, %c0_24] : memref<256x32xf32, #tpu.memory_space<vmem>>, vector<256x32xf32>
    %38 = arith.addf %37, %36 : vector<256x32xf32>
    %c0_25 = arith.constant 0 : index
    %c0_26 = arith.constant 0 : index
    %39 = vector.load %arg9[%c0_25, %c0_26] : memref<256x32xf32, #tpu.memory_space<vmem>>, vector<256x32xf32>
    tpu.vector_store %arg9[%c0_25, %c0_26], %38 {strides = array<i32>} : memref<256x32xf32, #tpu.memory_space<vmem>>, vector<256x32xf32>,
    %c15_i32 = arith.constant 15 : i32
    %40 = tpu.dynamic_rotate %10 by %c15_i32 dim 0 : vector<256x32xf32>, i32 -> vector<256x32xf32>
    %c1_i32_27 = arith.constant 1 : i32
    %41 = vector.broadcast %c1_i32_27 : i32 to vector<256x32xi32>
    %42 = arith.cmpi sge, %12, %41 : vector<256x32xi32>
    %c14_i32 = arith.constant 14 : i32
    %43 = vector.broadcast %c14_i32 : i32 to vector<256x32xi32>
    %44 = arith.cmpi sle, %14, %43 : vector<256x32xi32>
    %45 = arith.andi %42, %44 : vector<256x32xi1>
    %cst_28 = arith.constant 0.000000e+00 : f32
    %46 = vector.broadcast %cst_28 : f32 to vector<256x32xf32>
    %47 = arith.select %45, %40, %46 : vector<256x32xi1>, vector<256x32xf32>
    %48 = arith.truncf %47 : vector<256x32xf32> to vector<256x32xbf16>
    %c0_29 = arith.constant 0 : index
    %c2 = arith.constant 2 : index
    %c0_30 = arith.constant 0 : index
    %c0_31 = arith.constant 0 : index
    %49 = vector.load %arg3[%c0_29, %c2, %c0_30, %c0_31] : memref<3x3x32x32xbf16, #tpu.memory_space<vmem>>, vector<1x1x32x32xbf16>
    %50 = vector.shape_cast %49 : vector<1x1x32x32xbf16> to vector<32x32xbf16>
    %cst_32 = arith.constant dense<0.000000e+00> : vector<256x32xf32>
    %51 = tpu.matmul %48, %50, %cst_32 {dimension_numbers = #tpu.dot_dimension_numbers<[1], [0], [0], [1], [0, 0, 1, 1], [], []>} : vector<256x32xbf16>, vector<32x32xbf16>, vector<256x32xf32> -> vector<256x32xf32>
    %c0_33 = arith.constant 0 : index
    %c0_34 = arith.constant 0 : index
    %52 = vector.load %arg9[%c0_33, %c0_34] : memref<256x32xf32, #tpu.memory_space<vmem>>, vector<256x32xf32>
    %53 = arith.addf %52, %51 : vector<256x32xf32>
    %c0_35 = arith.constant 0 : index
    %c0_36 = arith.constant 0 : index
    %54 = vector.load %arg9[%c0_35, %c0_36] : memref<256x32xf32, #tpu.memory_space<vmem>>, vector<256x32xf32>
    tpu.vector_store %arg9[%c0_35, %c0_36], %53 {strides = array<i32>} : memref<256x32xf32, #tpu.memory_space<vmem>>, vector<256x32xf32>,
    %c1_i32_37 = arith.constant 1 : i32
    %55 = tpu.dynamic_rotate %10 by %c1_i32_37 dim 0 : vector<256x32xf32>, i32 -> vector<256x32xf32>
    %c1_i32_38 = arith.constant 1 : i32
    %56 = vector.broadcast %c1_i32_38 : i32 to vector<256x32xi32>
    %57 = arith.cmpi sge, %14, %56 : vector<256x32xi32>
    %cst_39 = arith.constant 0.000000e+00 : f32
    %58 = vector.broadcast %cst_39 : f32 to vector<256x32xf32>
    %59 = arith.select %57, %55, %58 : vector<256x32xi1>, vector<256x32xf32>
    %60 = arith.truncf %59 : vector<256x32xf32> to vector<256x32xbf16>
    %c1_40 = arith.constant 1 : index
    %c0_41 = arith.constant 0 : index
    %c0_42 = arith.constant 0 : index
    %c0_43 = arith.constant 0 : index
    %61 = vector.load %arg3[%c1_40, %c0_41, %c0_42, %c0_43] : memref<3x3x32x32xbf16, #tpu.memory_space<vmem>>, vector<1x1x32x32xbf16>
    %62 = vector.shape_cast %61 : vector<1x1x32x32xbf16> to vector<32x32xbf16>
    %cst_44 = arith.constant dense<0.000000e+00> : vector<256x32xf32>
    %63 = tpu.matmul %60, %62, %cst_44 {dimension_numbers = #tpu.dot_dimension_numbers<[1], [0], [0], [1], [0, 0, 1, 1], [], []>} : vector<256x32xbf16>, vector<32x32xbf16>, vector<256x32xf32> -> vector<256x32xf32>
    %c0_45 = arith.constant 0 : index
    %c0_46 = arith.constant 0 : index
    %64 = vector.load %arg9[%c0_45, %c0_46] : memref<256x32xf32, #tpu.memory_space<vmem>>, vector<256x32xf32>
    %65 = arith.addf %64, %63 : vector<256x32xf32>
    %c0_47 = arith.constant 0 : index
    %c0_48 = arith.constant 0 : index
    %66 = vector.load %arg9[%c0_47, %c0_48] : memref<256x32xf32, #tpu.memory_space<vmem>>, vector<256x32xf32>
    tpu.vector_store %arg9[%c0_47, %c0_48], %65 {strides = array<i32>} : memref<256x32xf32, #tpu.memory_space<vmem>>, vector<256x32xf32>,
    %67 = arith.truncf %10 : vector<256x32xf32> to vector<256x32xbf16>
    %c1_49 = arith.constant 1 : index
    %c1_50 = arith.constant 1 : index
    %c0_51 = arith.constant 0 : index
    %c0_52 = arith.constant 0 : index
    %68 = vector.load %arg3[%c1_49, %c1_50, %c0_51, %c0_52] : memref<3x3x32x32xbf16, #tpu.memory_space<vmem>>, vector<1x1x32x32xbf16>
    %69 = vector.shape_cast %68 : vector<1x1x32x32xbf16> to vector<32x32xbf16>
    %cst_53 = arith.constant dense<0.000000e+00> : vector<256x32xf32>
    %70 = tpu.matmul %67, %69, %cst_53 {dimension_numbers = #tpu.dot_dimension_numbers<[1], [0], [0], [1], [0, 0, 1, 1], [], []>} : vector<256x32xbf16>, vector<32x32xbf16>, vector<256x32xf32> -> vector<256x32xf32>
    %c0_54 = arith.constant 0 : index
    %c0_55 = arith.constant 0 : index
    %71 = vector.load %arg9[%c0_54, %c0_55] : memref<256x32xf32, #tpu.memory_space<vmem>>, vector<256x32xf32>
    %72 = arith.addf %71, %70 : vector<256x32xf32>
    %c0_56 = arith.constant 0 : index
    %c0_57 = arith.constant 0 : index
    %73 = vector.load %arg9[%c0_56, %c0_57] : memref<256x32xf32, #tpu.memory_space<vmem>>, vector<256x32xf32>
    tpu.vector_store %arg9[%c0_56, %c0_57], %72 {strides = array<i32>} : memref<256x32xf32, #tpu.memory_space<vmem>>, vector<256x32xf32>,
    %c255_i32 = arith.constant 255 : i32
    %74 = tpu.dynamic_rotate %10 by %c255_i32 dim 0 : vector<256x32xf32>, i32 -> vector<256x32xf32>
    %c14_i32_58 = arith.constant 14 : i32
    %75 = vector.broadcast %c14_i32_58 : i32 to vector<256x32xi32>
    %76 = arith.cmpi sle, %14, %75 : vector<256x32xi32>
    %cst_59 = arith.constant 0.000000e+00 : f32
    %77 = vector.broadcast %cst_59 : f32 to vector<256x32xf32>
    %78 = arith.select %76, %74, %77 : vector<256x32xi1>, vector<256x32xf32>
    %79 = arith.truncf %78 : vector<256x32xf32> to vector<256x32xbf16>
    %c1_60 = arith.constant 1 : index
    %c2_61 = arith.constant 2 : index
    %c0_62 = arith.constant 0 : index
    %c0_63 = arith.constant 0 : index
    %80 = vector.load %arg3[%c1_60, %c2_61, %c0_62, %c0_63] : memref<3x3x32x32xbf16, #tpu.memory_space<vmem>>, vector<1x1x32x32xbf16>
    %81 = vector.shape_cast %80 : vector<1x1x32x32xbf16> to vector<32x32xbf16>
    %cst_64 = arith.constant dense<0.000000e+00> : vector<256x32xf32>
    %82 = tpu.matmul %79, %81, %cst_64 {dimension_numbers = #tpu.dot_dimension_numbers<[1], [0], [0], [1], [0, 0, 1, 1], [], []>} : vector<256x32xbf16>, vector<32x32xbf16>, vector<256x32xf32> -> vector<256x32xf32>
    %c0_65 = arith.constant 0 : index
    %c0_66 = arith.constant 0 : index
    %83 = vector.load %arg9[%c0_65, %c0_66] : memref<256x32xf32, #tpu.memory_space<vmem>>, vector<256x32xf32>
    %84 = arith.addf %83, %82 : vector<256x32xf32>
    %c0_67 = arith.constant 0 : index
    %c0_68 = arith.constant 0 : index
    %85 = vector.load %arg9[%c0_67, %c0_68] : memref<256x32xf32, #tpu.memory_space<vmem>>, vector<256x32xf32>
    tpu.vector_store %arg9[%c0_67, %c0_68], %84 {strides = array<i32>} : memref<256x32xf32, #tpu.memory_space<vmem>>, vector<256x32xf32>,
    %c241_i32 = arith.constant 241 : i32
    %86 = tpu.dynamic_rotate %10 by %c241_i32 dim 0 : vector<256x32xf32>, i32 -> vector<256x32xf32>
    %c14_i32_69 = arith.constant 14 : i32
    %87 = vector.broadcast %c14_i32_69 : i32 to vector<256x32xi32>
    %88 = arith.cmpi sle, %12, %87 : vector<256x32xi32>
    %c1_i32_70 = arith.constant 1 : i32
    %89 = vector.broadcast %c1_i32_70 : i32 to vector<256x32xi32>
    %90 = arith.cmpi sge, %14, %89 : vector<256x32xi32>
    %91 = arith.andi %88, %90 : vector<256x32xi1>
    %cst_71 = arith.constant 0.000000e+00 : f32
    %92 = vector.broadcast %cst_71 : f32 to vector<256x32xf32>
    %93 = arith.select %91, %86, %92 : vector<256x32xi1>, vector<256x32xf32>
    %94 = arith.truncf %93 : vector<256x32xf32> to vector<256x32xbf16>
    %c2_72 = arith.constant 2 : index
    %c0_73 = arith.constant 0 : index
    %c0_74 = arith.constant 0 : index
    %c0_75 = arith.constant 0 : index
    %95 = vector.load %arg3[%c2_72, %c0_73, %c0_74, %c0_75] : memref<3x3x32x32xbf16, #tpu.memory_space<vmem>>, vector<1x1x32x32xbf16>
    %96 = vector.shape_cast %95 : vector<1x1x32x32xbf16> to vector<32x32xbf16>
    %cst_76 = arith.constant dense<0.000000e+00> : vector<256x32xf32>
    %97 = tpu.matmul %94, %96, %cst_76 {dimension_numbers = #tpu.dot_dimension_numbers<[1], [0], [0], [1], [0, 0, 1, 1], [], []>} : vector<256x32xbf16>, vector<32x32xbf16>, vector<256x32xf32> -> vector<256x32xf32>
    %c0_77 = arith.constant 0 : index
    %c0_78 = arith.constant 0 : index
    %98 = vector.load %arg9[%c0_77, %c0_78] : memref<256x32xf32, #tpu.memory_space<vmem>>, vector<256x32xf32>
    %99 = arith.addf %98, %97 : vector<256x32xf32>
    %c0_79 = arith.constant 0 : index
    %c0_80 = arith.constant 0 : index
    %100 = vector.load %arg9[%c0_79, %c0_80] : memref<256x32xf32, #tpu.memory_space<vmem>>, vector<256x32xf32>
    tpu.vector_store %arg9[%c0_79, %c0_80], %99 {strides = array<i32>} : memref<256x32xf32, #tpu.memory_space<vmem>>, vector<256x32xf32>,
    %c240_i32 = arith.constant 240 : i32
    %101 = tpu.dynamic_rotate %10 by %c240_i32 dim 0 : vector<256x32xf32>, i32 -> vector<256x32xf32>
    %c14_i32_81 = arith.constant 14 : i32
    %102 = vector.broadcast %c14_i32_81 : i32 to vector<256x32xi32>
    %103 = arith.cmpi sle, %12, %102 : vector<256x32xi32>
    %cst_82 = arith.constant 0.000000e+00 : f32
    %104 = vector.broadcast %cst_82 : f32 to vector<256x32xf32>
    %105 = arith.select %103, %101, %104 : vector<256x32xi1>, vector<256x32xf32>
    %106 = arith.truncf %105 : vector<256x32xf32> to vector<256x32xbf16>
    %c2_83 = arith.constant 2 : index
    %c1_84 = arith.constant 1 : index
    %c0_85 = arith.constant 0 : index
    %c0_86 = arith.constant 0 : index
    %107 = vector.load %arg3[%c2_83, %c1_84, %c0_85, %c0_86] : memref<3x3x32x32xbf16, #tpu.memory_space<vmem>>, vector<1x1x32x32xbf16>
    %108 = vector.shape_cast %107 : vector<1x1x32x32xbf16> to vector<32x32xbf16>
    %cst_87 = arith.constant dense<0.000000e+00> : vector<256x32xf32>
    %109 = tpu.matmul %106, %108, %cst_87 {dimension_numbers = #tpu.dot_dimension_numbers<[1], [0], [0], [1], [0, 0, 1, 1], [], []>} : vector<256x32xbf16>, vector<32x32xbf16>, vector<256x32xf32> -> vector<256x32xf32>
    %c0_88 = arith.constant 0 : index
    %c0_89 = arith.constant 0 : index
    %110 = vector.load %arg9[%c0_88, %c0_89] : memref<256x32xf32, #tpu.memory_space<vmem>>, vector<256x32xf32>
    %111 = arith.addf %110, %109 : vector<256x32xf32>
    %c0_90 = arith.constant 0 : index
    %c0_91 = arith.constant 0 : index
    %112 = vector.load %arg9[%c0_90, %c0_91] : memref<256x32xf32, #tpu.memory_space<vmem>>, vector<256x32xf32>
    tpu.vector_store %arg9[%c0_90, %c0_91], %111 {strides = array<i32>} : memref<256x32xf32, #tpu.memory_space<vmem>>, vector<256x32xf32>,
    %c239_i32 = arith.constant 239 : i32
    %113 = tpu.dynamic_rotate %10 by %c239_i32 dim 0 : vector<256x32xf32>, i32 -> vector<256x32xf32>
    %c14_i32_92 = arith.constant 14 : i32
    %114 = vector.broadcast %c14_i32_92 : i32 to vector<256x32xi32>
    %115 = arith.cmpi sle, %12, %114 : vector<256x32xi32>
    %c14_i32_93 = arith.constant 14 : i32
    %116 = vector.broadcast %c14_i32_93 : i32 to vector<256x32xi32>
    %117 = arith.cmpi sle, %14, %116 : vector<256x32xi32>
    %118 = arith.andi %115, %117 : vector<256x32xi1>
    %cst_94 = arith.constant 0.000000e+00 : f32
    %119 = vector.broadcast %cst_94 : f32 to vector<256x32xf32>
    %120 = arith.select %118, %113, %119 : vector<256x32xi1>, vector<256x32xf32>
    %121 = arith.truncf %120 : vector<256x32xf32> to vector<256x32xbf16>
    %c2_95 = arith.constant 2 : index
    %c2_96 = arith.constant 2 : index
    %c0_97 = arith.constant 0 : index
    %c0_98 = arith.constant 0 : index
    %122 = vector.load %arg3[%c2_95, %c2_96, %c0_97, %c0_98] : memref<3x3x32x32xbf16, #tpu.memory_space<vmem>>, vector<1x1x32x32xbf16>
    %123 = vector.shape_cast %122 : vector<1x1x32x32xbf16> to vector<32x32xbf16>
    %cst_99 = arith.constant dense<0.000000e+00> : vector<256x32xf32>
    %124 = tpu.matmul %121, %123, %cst_99 {dimension_numbers = #tpu.dot_dimension_numbers<[1], [0], [0], [1], [0, 0, 1, 1], [], []>} : vector<256x32xbf16>, vector<32x32xbf16>, vector<256x32xf32> -> vector<256x32xf32>
    %c0_100 = arith.constant 0 : index
    %c0_101 = arith.constant 0 : index
    %125 = vector.load %arg9[%c0_100, %c0_101] : memref<256x32xf32, #tpu.memory_space<vmem>>, vector<256x32xf32>
    %126 = arith.addf %125, %124 : vector<256x32xf32>
    %c0_102 = arith.constant 0 : index
    %c0_103 = arith.constant 0 : index
    %127 = vector.load %arg9[%c0_102, %c0_103] : memref<256x32xf32, #tpu.memory_space<vmem>>, vector<256x32xf32>
    tpu.vector_store %arg9[%c0_102, %c0_103], %126 {strides = array<i32>} : memref<256x32xf32, #tpu.memory_space<vmem>>, vector<256x32xf32>,
    %c0_104 = arith.constant 0 : index
    %c0_105 = arith.constant 0 : index
    %128 = vector.load %arg9[%c0_104, %c0_105] : memref<256x32xf32, #tpu.memory_space<vmem>>, vector<256x32xf32>
    %c0_106 = arith.constant 0 : index
    %c0_107 = arith.constant 0 : index
    %129 = vector.load %arg6[%c0_106, %c0_107] : memref<1x32xf32, #tpu.memory_space<vmem>>, vector<1x32xf32>
    %130 = vector.broadcast %129 : vector<1x32xf32> to vector<256x32xf32>
    %131 = arith.addf %128, %130 : vector<256x32xf32>
    %cst_108 = arith.constant 0.000000e+00 : f32
    %132 = vector.broadcast %cst_108 : f32 to vector<256x32xf32>
    %133 = arith.maximumf %131, %132 : vector<256x32xf32>
    %134 = arith.truncf %133 : vector<256x32xf32> to vector<256x32xbf16>
    %c0_109 = arith.constant 0 : index
    %c0_110 = arith.constant 0 : index
    %135 = vector.load %arg4[%c0_109, %c0_110] : memref<32x128xbf16, #tpu.memory_space<vmem>>, vector<32x128xbf16>
    %cst_111 = arith.constant dense<0.000000e+00> : vector<256x128xf32>
    %136 = tpu.matmul %134, %135, %cst_111 {dimension_numbers = #tpu.dot_dimension_numbers<[1], [0], [0], [1], [0, 0, 1, 1], [], []>} : vector<256x32xbf16>, vector<32x128xbf16>, vector<256x128xf32> -> vector<256x128xf32>
    %c0_112 = arith.constant 0 : index
    %c0_113 = arith.constant 0 : index
    %137 = vector.load %arg7[%c0_112, %c0_113] : memref<1x128xf32, #tpu.memory_space<vmem>>, vector<1x128xf32>
    %138 = vector.broadcast %137 : vector<1x128xf32> to vector<256x128xf32>
    %139 = arith.addf %136, %138 : vector<256x128xf32>
    %c0_114 = arith.constant 0 : index
    %c0_115 = arith.constant 0 : index
    %c0_116 = arith.constant 0 : index
    %c0_117 = arith.constant 0 : index
    %140 = vector.load %arg1[%c0_114, %c0_115, %c0_116, %c0_117] : memref<1x16x16x128xf32, #tpu.memory_space<vmem>>, vector<1x16x16x128xf32>
    %141 = vector.shape_cast %140 : vector<1x16x16x128xf32> to vector<16x16x128xf32>
    %142 = vector.shape_cast %141 : vector<16x16x128xf32> to vector<256x128xf32>
    %143 = arith.addf %139, %142 : vector<256x128xf32>
    %cst_118 = arith.constant 0.000000e+00 : f32
    %144 = vector.broadcast %cst_118 : f32 to vector<256x128xf32>
    %145 = arith.maximumf %143, %144 : vector<256x128xf32>
    %146 = vector.shape_cast %145 : vector<256x128xf32> to vector<16x16x128xf32>
    %c0_119 = arith.constant 0 : index
    %c0_120 = arith.constant 0 : index
    %c0_121 = arith.constant 0 : index
    %c0_122 = arith.constant 0 : index
    %147 = vector.load %arg8[%c0_119, %c0_120, %c0_121, %c0_122] : memref<1x16x16x128xf32, #tpu.memory_space<vmem>>, vector<1x16x16x128xf32>
    %148 = vector.shape_cast %147 : vector<1x16x16x128xf32> to vector<16x16x128xf32>
    %149 = vector.shape_cast %146 : vector<16x16x128xf32> to vector<1x16x16x128xf32>
    tpu.vector_store %arg8[%c0_119, %c0_120, %c0_121, %c0_122], %149 {strides = array<i32>} : memref<1x16x16x128xf32, #tpu.memory_space<vmem>>, vector<1x16x16x128xf32>,
    return
  }
  func.func @transform_0(%arg0: i32) -> (i32, i32, i32, i32) {
    %c0_i32 = arith.constant 0 : i32
    %c0_i32_0 = arith.constant 0 : i32
    %c0_i32_1 = arith.constant 0 : i32
    %c0_i32_2 = arith.constant 0 : i32
    return %arg0, %c0_i32, %c0_i32_0, %c0_i32_1 : i32, i32, i32, i32
  }
  func.func @transform_1(%arg0: i32) -> (i32, i32) {
    %c0_i32 = arith.constant 0 : i32
    %c0_i32_0 = arith.constant 0 : i32
    %c0_i32_1 = arith.constant 0 : i32
    return %c0_i32, %c0_i32_0 : i32, i32
  }
  func.func @transform_2(%arg0: i32) -> (i32, i32, i32, i32) {
    %c0_i32 = arith.constant 0 : i32
    %c0_i32_0 = arith.constant 0 : i32
    %c0_i32_1 = arith.constant 0 : i32
    %c0_i32_2 = arith.constant 0 : i32
    %c0_i32_3 = arith.constant 0 : i32
    return %c0_i32, %c0_i32_0, %c0_i32_1, %c0_i32_2 : i32, i32, i32, i32
  }
  func.func @transform_3(%arg0: i32) -> (i32, i32) {
    %c0_i32 = arith.constant 0 : i32
    %c0_i32_0 = arith.constant 0 : i32
    %c0_i32_1 = arith.constant 0 : i32
    return %c0_i32, %c0_i32_0 : i32, i32
  }
  func.func @transform_4(%arg0: i32) -> (i32, i32) {
    %c0_i32 = arith.constant 0 : i32
    %c0_i32_0 = arith.constant 0 : i32
    %c0_i32_1 = arith.constant 0 : i32
    return %c0_i32, %c0_i32_0 : i32, i32
  }
  func.func @transform_5(%arg0: i32) -> (i32, i32) {
    %c0_i32 = arith.constant 0 : i32
    %c0_i32_0 = arith.constant 0 : i32
    %c0_i32_1 = arith.constant 0 : i32
    return %c0_i32, %c0_i32_0 : i32, i32
  }
  func.func @transform_6(%arg0: i32) -> (i32, i32) {
    %c0_i32 = arith.constant 0 : i32
    %c0_i32_0 = arith.constant 0 : i32
    %c0_i32_1 = arith.constant 0 : i32
    return %c0_i32, %c0_i32_0 : i32, i32
  }
  func.func @transform_7(%arg0: i32) -> (i32, i32, i32, i32) {
    %c0_i32 = arith.constant 0 : i32
    %c0_i32_0 = arith.constant 0 : i32
    %c0_i32_1 = arith.constant 0 : i32
    %c0_i32_2 = arith.constant 0 : i32
    return %arg0, %c0_i32, %c0_i32_0, %c0_i32_1 : i32, i32, i32, i32
  }
}

</mosaic_0001>

<llo_original>
// kernel: tpu_custom_call.1
$region0: #{tpu_custom_call.1}
  #allocation0 [shape = 'u32[]', space=smem, size = 0x4, offset = 0x4, fixed_abs, tag = 'smem constant byte address 0x4 - core index']
  #allocation1 [shape = 'u32[72,128]{1,0:T(1,128)}', space=vmem, size = 0x9000, scoped, tag = 'internal scratch']
  #allocation2 [shape = 'f32[256,32]{1,0:T(8,128)}', space=vmem, size = 0x20000, scoped, tag = 'scratch operand']
  %s0 = inlined_call_operand.hbm [shape: f32[2,16,16,128], index: 0, kind: input, shape index: {}]
  %s1 = inlined_call_operand.vmem [shape: bf16[128,32], index: 1, kind: input, shape index: {}]
  %s2 = inlined_call_operand.hbm [shape: bf16[3,3,32,32], index: 2, kind: input, shape index: {}]
  %s3 = inlined_call_operand.vmem [shape: bf16[32,128], index: 3, kind: input, shape index: {}]
  %s4 = inlined_call_operand.vmem [shape: f32[1,32], index: 4, kind: input, shape index: {}]
  %s5 = inlined_call_operand.vmem [shape: f32[1,32], index: 5, kind: input, shape index: {}]
  %s6 = inlined_call_operand.vmem [shape: f32[1,128], index: 6, kind: input, shape index: {}]
  %s7 = inlined_call_operand.hbm [shape: f32[2,16,16,128], index: 7, kind: output, shape index: {}]
  %s8 = sld [smem:[#allocation0]]
  $region69: #{tpu_custom_call.1} parent=0
    _
  %s10 = ssub.s32 1, %s8
  %s11 = scalar_select 0, %s10, %s8
  $region1: #{tpu_custom_call.1} parent=0
    #allocation3 [shape = 'u8[262144]{0}', space=vmem, size = 0x40000, scoped, tag = 'input window, operand 0']
    #allocation4 [shape = 's32[2]{0}', space=sflag, size = 0x8, scoped, tag = 'scoped memory for tpu_custom_call.1']
    #allocation5 [shape = 's32[2]{0}', space=sflag, size = 0x8, scoped, tag = 'scoped memory for tpu_custom_call.1']
    #allocation6 [shape = 'u8[73728]{0}', space=vmem, size = 0x12000, scoped, tag = 'input window, operand 2, single buffered']
    #allocation7 [shape = 's32[1]{0}', space=sflag, size = 0x4, scoped, tag = 'scoped memory for tpu_custom_call.1']
    #allocation8 [shape = 'u8[262144]{0}', space=vmem, size = 0x40000, scoped, tag = 'output window, operand 0']
    %12 = vsyncpa [#allocation4], 0
    %s13 = scalar_lea.sflag [#allocation4], 1
    %14 = vsyncpa %s13, 0
    %15 = vsyncpa [#allocation7], 0
    %16 = vsyncpa [#allocation5], 0
    %s17 = scalar_lea.sflag [#allocation5], 1
    %18 = vsyncpa %s17, 0
    loop: start=0, step=1, limit=4
    $region2: #{tpu_custom_call.1} parent=1 // loop_pre_header
      _
    $region3: #{tpu_custom_call.1} parent=1 // loop_header
      %s20 = sphi 0, %s24
      %p21 = scmp.ge.s32.totalorder %s20, 4
      %s30 = sphi 0, %s32
      %s33 = sphi 0, %s30
      %s34 = sphi 0, %s33
      %s50 = sphi 0, %s34
      %s54 = sphi 0, %s54
      %s56 = sphi 0, %s54
      %s57 = sphi 0, %s56
      %s71 = sphi 0, %s57
      %s75 = sphi 0, %s75
      %s77 = sphi 0, %s75
      %s78 = sphi 0, %s77
      %s92 = sphi 0, %s78
      %s96 = sphi 0, %s96
      %s98 = sphi 0, %s96
      %s99 = sphi 0, %s98
      %s113 = sphi 0, %s99
      %s117 = sphi 0, %s117
      %s119 = sphi 0, %s117
      %s120 = sphi 0, %s119
      %s134 = sphi 0, %s120
      %s138 = sphi 0, %s138
      %s140 = sphi 0, %s138
      %s141 = sphi 0, %s140
      %s155 = sphi 0, %s141
      %s159 = sphi 0, %s159
      %s161 = sphi 0, %s159
      %s162 = sphi 0, %s161
      %s176 = sphi 0, %s162
      %s182 = sphi 0, %s184
      %s185 = sphi 0, %s182
      %s186 = sphi 0, %s185
      %s202 = sphi 0, %s186
    $region4: #{tpu_custom_call.1} parent=1 // loop_header_branch
      %23 = sbr.rel (%p21) target = $region8
    $region5: #{tpu_custom_call.1} parent=1 // loop_body
      %s25 = ssub.s32 %s20, 1
      %s26 = ssub.s32 %s20, 2
      %s27 = sadd.s32 %s20, 1
      %s28 = ssub.s32 %s20, %s27
      %p29 = scmp.eq.s32.totalorder %s28, 0
      %s31 = sadd.s32 %s30, 1
      %s32 = scalar_select %p29, %s30, %s31
      %p35 = pneg %p29
      %p36 = scmp.eq.s32.totalorder %s20, 1
      %p37 = por %p35, %p36
      %p38 = scmp.ne.s32.totalorder %s30, %s33
      %p39 = scmp.eq.s32.totalorder %s20, 0
      %p40 = por %p38, %p39
      %p41 = scmp.ne.s32.totalorder %s30, %s33
      %p42 = scmp.eq.s32.totalorder %s25, 1
      %p43 = por %p41, %p42
      %p44 = scmp.ne.s32.totalorder %s33, %s34
      %p45 = scmp.eq.s32.totalorder %s25, 0
      %p46 = por %p44, %p45
      %p47 = scmp.ne.s32.totalorder %s33, %s34
      %p48 = scmp.eq.s32.totalorder %s26, 1
      %p49 = por %p47, %p48
      %p51 = scmp.ne.s32.totalorder %s34, %s50
      %p52 = scmp.eq.s32.totalorder %s26, 0
      %p53 = por %p51, %p52
      %s55 = sadd.s32 %s54, 1
      %p58 = scmp.eq.s32.totalorder %s20, 1
      %p59 = scmp.ne.s32.totalorder %s54, %s56
      %p60 = scmp.eq.s32.totalorder %s20, 0
      %p61 = por %p59, %p60
      %p62 = scmp.ne.s32.totalorder %s54, %s56
      %p63 = scmp.eq.s32.totalorder %s25, 1
      %p64 = por %p62, %p63
      %p65 = scmp.ne.s32.totalorder %s56, %s57
      %p66 = scmp.eq.s32.totalorder %s25, 0
      %p67 = por %p65, %p66
      %p68 = scmp.ne.s32.totalorder %s56, %s57
      %p69 = scmp.eq.s32.totalorder %s26, 1
      %p70 = por %p68, %p69
      %p72 = scmp.ne.s32.totalorder %s57, %s71
      %p73 = scmp.eq.s32.totalorder %s26, 0
      %p74 = por %p72, %p73
      %s76 = sadd.s32 %s75, 1
      %p79 = scmp.eq.s32.totalorder %s20, 1
      %p80 = scmp.ne.s32.totalorder %s75, %s77
      %p81 = scmp.eq.s32.totalorder %s20, 0
      %p82 = por %p80, %p81
      %p83 = scmp.ne.s32.totalorder %s75, %s77
      %p84 = scmp.eq.s32.totalorder %s25, 1
      %p85 = por %p83, %p84
      %p86 = scmp.ne.s32.totalorder %s77, %s78
      %p87 = scmp.eq.s32.totalorder %s25, 0
      %p88 = por %p86, %p87
      %p89 = scmp.ne.s32.totalorder %s77, %s78
      %p90 = scmp.eq.s32.totalorder %s26, 1
      %p91 = por %p89, %p90
      %p93 = scmp.ne.s32.totalorder %s78, %s92
      %p94 = scmp.eq.s32.totalorder %s26, 0
      %p95 = por %p93, %p94
      %s97 = sadd.s32 %s96, 1
      %p100 = scmp.eq.s32.totalorder %s20, 1
      %p101 = scmp.ne.s32.totalorder %s96, %s98
      %p102 = scmp.eq.s32.totalorder %s20, 0
      %p103 = por %p101, %p102
      %p104 = scmp.ne.s32.totalorder %s96, %s98
      %p105 = scmp.eq.s32.totalorder %s25, 1
      %p106 = por %p104, %p105
      %p107 = scmp.ne.s32.totalorder %s98, %s99
      %p108 = scmp.eq.s32.totalorder %s25, 0
      %p109 = por %p107, %p108
      %p110 = scmp.ne.s32.totalorder %s98, %s99
      %p111 = scmp.eq.s32.totalorder %s26, 1
      %p112 = por %p110, %p111
      %p114 = scmp.ne.s32.totalorder %s99, %s113
      %p115 = scmp.eq.s32.totalorder %s26, 0
      %p116 = por %p114, %p115
      %s118 = sadd.s32 %s117, 1
      %p121 = scmp.eq.s32.totalorder %s20, 1
      %p122 = scmp.ne.s32.totalorder %s117, %s119
      %p123 = scmp.eq.s32.totalorder %s20, 0
      %p124 = por %p122, %p123
      %p125 = scmp.ne.s32.totalorder %s117, %s119
      %p126 = scmp.eq.s32.totalorder %s25, 1
      %p127 = por %p125, %p126
      %p128 = scmp.ne.s32.totalorder %s119, %s120
      %p129 = scmp.eq.s32.totalorder %s25, 0
      %p130 = por %p128, %p129
      %p131 = scmp.ne.s32.totalorder %s119, %s120
      %p132 = scmp.eq.s32.totalorder %s26, 1
      %p133 = por %p131, %p132
      %p135 = scmp.ne.s32.totalorder %s120, %s134
      %p136 = scmp.eq.s32.totalorder %s26, 0
      %p137 = por %p135, %p136
      %s139 = sadd.s32 %s138, 1
      %p142 = scmp.eq.s32.totalorder %s20, 1
      %p143 = scmp.ne.s32.totalorder %s138, %s140
      %p144 = scmp.eq.s32.totalorder %s20, 0
      %p145 = por %p143, %p144
      %p146 = scmp.ne.s32.totalorder %s138, %s140
      %p147 = scmp.eq.s32.totalorder %s25, 1
      %p148 = por %p146, %p147
      %p149 = scmp.ne.s32.totalorder %s140, %s141
      %p150 = scmp.eq.s32.totalorder %s25, 0
      %p151 = por %p149, %p150
      %p152 = scmp.ne.s32.totalorder %s140, %s141
      %p153 = scmp.eq.s32.totalorder %s26, 1
      %p154 = por %p152, %p153
      %p156 = scmp.ne.s32.totalorder %s141, %s155
      %p157 = scmp.eq.s32.totalorder %s26, 0
      %p158 = por %p156, %p157
      %s160 = sadd.s32 %s159, 1
      %p163 = scmp.eq.s32.totalorder %s20, 1
      %p164 = scmp.ne.s32.totalorder %s159, %s161
      %p165 = scmp.eq.s32.totalorder %s20, 0
      %p166 = por %p164, %p165
      %p167 = scmp.ne.s32.totalorder %s159, %s161
      %p168 = scmp.eq.s32.totalorder %s25, 1
      %p169 = por %p167, %p168
      %p170 = scmp.ne.s32.totalorder %s161, %s162
      %p171 = scmp.eq.s32.totalorder %s25, 0
      %p172 = por %p170, %p171
      %p173 = scmp.ne.s32.totalorder %s161, %s162
      %p174 = scmp.eq.s32.totalorder %s26, 1
      %p175 = por %p173, %p174
      %p177 = scmp.ne.s32.totalorder %s162, %s176
      %p178 = scmp.eq.s32.totalorder %s26, 0
      %p179 = por %p177, %p178
      %s180 = ssub.s32 %s20, %s27
      %p181 = scmp.eq.s32.totalorder %s180, 0
      %s183 = sadd.s32 %s182, 1
      %s184 = scalar_select %p181, %s182, %s183
      %p187 = pneg %p181
      %p188 = scmp.eq.s32.totalorder %s20, 1
      %p189 = por %p187, %p188
      %p190 = scmp.ne.s32.totalorder %s182, %s185
      %p191 = scmp.eq.s32.totalorder %s20, 0
      %p192 = por %p190, %p191
      %p193 = scmp.ne.s32.totalorder %s182, %s185
      %p194 = scmp.eq.s32.totalorder %s25, 1
      %p195 = por %p193, %p194
      %p196 = scmp.ne.s32.totalorder %s185, %s186
      %p197 = scmp.eq.s32.totalorder %s25, 0
      %p198 = por %p196, %p197
      %p199 = scmp.ne.s32.totalorder %s185, %s186
      %p200 = scmp.eq.s32.totalorder %s26, 1
      %p201 = por %p199, %p200
      %p203 = scmp.ne.s32.totalorder %s186, %s202
      %p204 = scmp.eq.s32.totalorder %s26, 0
      %p205 = por %p203, %p204
      %p206 = scmp.le.s32.totalorder 1, %s20
      %p207 = scmp.lt.s32.totalorder %s20, 3
      %p208 = pnand %p206, %p207
      %p209 = pneg %p208
      // Predicated region
      $region9: #{tpu_custom_call.1} parent=5 // pred_check
        _
      $region10: #{tpu_custom_call.1} parent=5 // pred_check_branch
        %211 = sbr.rel (%p208) target = $region12
      $region11: #{tpu_custom_call.1} parent=5 // pred_region
        %s212 = ssub.s32 %s20, 1
        // Predicated region
        $region13: #{tpu_custom_call.1} parent=11 // pred_check
          %p213 = pneg %p67
        $region14: #{tpu_custom_call.1} parent=11 // pred_check_branch
          %215 = sbr.rel (%p213) target = $region16
        $region15: #{tpu_custom_call.1} parent=11 // pred_region
          _
        $region16: #{tpu_custom_call.1} parent=11 // pred_fallthru
          _
        // Predicated region
        $region17: #{tpu_custom_call.1} parent=11 // pred_check
          %p216 = pneg %p88
        $region18: #{tpu_custom_call.1} parent=11 // pred_check_branch
          %218 = sbr.rel (%p216) target = $region20
        $region19: #{tpu_custom_call.1} parent=11 // pred_region
          %220 = vsyncadd [#allocation7], 0
          %s221 = sshll.u32 %s2, 4
          %s222 = int_to_ptr.hbm [resolvable:$true] %s221
          %s223 = sshll.u32 [#allocation6], 4
          %s224 = int_to_ptr.vmem [resolvable:$true] %s223
          %229 = dma.hbm_to_vmem [thread:$0]  %s222, 2304, %s224, [#allocation7], 64, 64, 4
        $region20: #{tpu_custom_call.1} parent=11 // pred_fallthru
          _
        // Predicated region
        $region21: #{tpu_custom_call.1} parent=11 // pred_check
          %p230 = pneg %p109
        $region22: #{tpu_custom_call.1} parent=11 // pred_check_branch
          %232 = sbr.rel (%p230) target = $region24
        $region23: #{tpu_custom_call.1} parent=11 // pred_region
          _
        $region24: #{tpu_custom_call.1} parent=11 // pred_fallthru
          _
        // Predicated region
        $region25: #{tpu_custom_call.1} parent=11 // pred_check
          %p233 = pneg %p130
        $region26: #{tpu_custom_call.1} parent=11 // pred_check_branch
          %235 = sbr.rel (%p233) target = $region28
        $region27: #{tpu_custom_call.1} parent=11 // pred_region
          _
        $region28: #{tpu_custom_call.1} parent=11 // pred_fallthru
          _
        // Predicated region
        $region29: #{tpu_custom_call.1} parent=11 // pred_check
          %p236 = pneg %p151
        $region30: #{tpu_custom_call.1} parent=11 // pred_check_branch
          %238 = sbr.rel (%p236) target = $region32
        $region31: #{tpu_custom_call.1} parent=11 // pred_region
          _
        $region32: #{tpu_custom_call.1} parent=11 // pred_fallthru
          _
        // Predicated region
        $region33: #{tpu_custom_call.1} parent=11 // pred_check
          %p239 = pneg %p172
        $region34: #{tpu_custom_call.1} parent=11 // pred_check_branch
          %241 = sbr.rel (%p239) target = $region36
        $region35: #{tpu_custom_call.1} parent=11 // pred_region
          _
        $region36: #{tpu_custom_call.1} parent=11 // pred_fallthru
          _
      $region12: #{tpu_custom_call.1} parent=5 // pred_fallthru
        _
      %p242 = scmp.lt.s32.totalorder %s20, 2
      // Predicated region
      $region37: #{tpu_custom_call.1} parent=5 // pred_check
        %p243 = pneg %p242
      $region38: #{tpu_custom_call.1} parent=5 // pred_check_branch
        %245 = sbr.rel (%p243) target = $region40
      $region39: #{tpu_custom_call.1} parent=5 // pred_region
        // Predicated region
        $region41: #{tpu_custom_call.1} parent=39 // pred_check
          %p246 = pneg %p40
        $region42: #{tpu_custom_call.1} parent=39 // pred_check_branch
          %248 = sbr.rel (%p246) target = $region44
        $region43: #{tpu_custom_call.1} parent=39 // pred_region
          %s249 = sand.u32 %s30, 1
          %s250 = scalar_lea.sflag [#allocation4], %s249
          %s251 = sand.u32 %s30, 1
          %s252 = smul.addr %s251, 256
          %s253 = scalar_lea.vmem [#allocation3], %s252
          %255 = vsyncadd %s250, 0
          %s256 = smul.addr %s20, 32
          %s257 = smul.addr %s256, 8
          %s258 = scalar_lea.hbm %s0, %s257
          %s259 = sshll.u32 %s258, 4
          %s260 = int_to_ptr.hbm [resolvable:$true] %s259
          %s261 = sshll.u32 %s253, 4
          %s262 = int_to_ptr.vmem [resolvable:$true] %s261
          %267 = dma.hbm_to_vmem [thread:$0]  %s260, 4096, %s262, %s250, 128, 128, 8
        $region44: #{tpu_custom_call.1} parent=39 // pred_fallthru
          _
      $region40: #{tpu_custom_call.1} parent=5 // pred_fallthru
        _
      %p268 = scmp.le.s32.totalorder 1, %s20
      %p269 = scmp.lt.s32.totalorder %s20, 3
      %p270 = pnand %p268, %p269
      %p271 = pneg %p270
      // Predicated region
      $region45: #{tpu_custom_call.1} parent=5 // pred_check
        _
      $region46: #{tpu_custom_call.1} parent=5 // pred_check_branch
        %273 = sbr.rel (%p270) target = $region48
      $region47: #{tpu_custom_call.1} parent=5 // pred_region
        %s274 = ssub.s32 %s20, 1
        %s275 = sand.u32 %s33, 1
        %s276 = scalar_lea.sflag [#allocation4], %s275
        %s277 = sand.u32 %s33, 1
        %s278 = smul.addr %s277, 256
        %s279 = scalar_lea.vmem [#allocation3], %s278
        // Predicated region
        $region49: #{tpu_custom_call.1} parent=47 // pred_check
          %p280 = pneg %p46
        $region50: #{tpu_custom_call.1} parent=47 // pred_check_branch
          %282 = sbr.rel (%p280) target = $region52
        $region51: #{tpu_custom_call.1} parent=47 // pred_region
          %284 = dma.done %s276, 4096
        $region52: #{tpu_custom_call.1} parent=47 // pred_fallthru
          _
        // Predicated region
        $region53: #{tpu_custom_call.1} parent=47 // pred_check
          %p285 = pneg %p88
        $region54: #{tpu_custom_call.1} parent=47 // pred_check_branch
          %287 = sbr.rel (%p285) target = $region56
        $region55: #{tpu_custom_call.1} parent=47 // pred_region
          %289 = dma.done [#allocation7], 2304
        $region56: #{tpu_custom_call.1} parent=47 // pred_fallthru
          _
        %s290 = sand.u32 %s33, 1
        %s291 = scalar_lea.sflag [#allocation4], %s290
        %s292 = sand.u32 %s33, 1
        %s293 = smul.addr %s292, 256
        %s294 = scalar_lea.vmem [#allocation3], %s293
        %p295 = pneg %p46
        %p296 = pneg %p43
        %p297 = pneg %p67
        %p298 = pneg %p64
        %p299 = pneg %p88
        %p300 = pneg %p85
        %p301 = pneg %p109
        %p302 = pneg %p106
        %p303 = pneg %p130
        %p304 = pneg %p127
        %p305 = pneg %p151
        %p306 = pneg %p148
        %p307 = pneg %p172
        %p308 = pneg %p169
        %p309 = pneg %p198
        %p310 = pneg %p195
        %s311 = sand.u32 %s185, 1
        %s312 = scalar_lea.sflag [#allocation5], %s311
        %s313 = sand.u32 %s185, 1
        %s314 = smul.addr %s313, 256
        %s315 = scalar_lea.vmem [#allocation8], %s314
        %v317 = vld [vmem:[%s279] sm:$0xff]
        %v318 = vld [vmem:[%s279 + $0x8] sm:$0xff]
        %v319 = vld [vmem:[%s279 + $0x10] sm:$0xff]
        %v320 = vld [vmem:[%s279 + $0x18] sm:$0xff]
        %v321 = vld [vmem:[%s279 + $0x20] sm:$0xff]
        %v322 = vld [vmem:[%s279 + $0x28] sm:$0xff]
        %v323 = vld [vmem:[%s279 + $0x30] sm:$0xff]
        %v324 = vld [vmem:[%s279 + $0x38] sm:$0xff]
        %v325 = vld [vmem:[%s279 + $0x40] sm:$0xff]
        %v326 = vld [vmem:[%s279 + $0x48] sm:$0xff]
        %v327 = vld [vmem:[%s279 + $0x50] sm:$0xff]
        %v328 = vld [vmem:[%s279 + $0x58] sm:$0xff]
        %v329 = vld [vmem:[%s279 + $0x60] sm:$0xff]
        %v330 = vld [vmem:[%s279 + $0x68] sm:$0xff]
        %v331 = vld [vmem:[%s279 + $0x70] sm:$0xff]
        %v332 = vld [vmem:[%s279 + $0x78] sm:$0xff]
        %v333 = vld [vmem:[%s279 + $0x80] sm:$0xff]
        %v334 = vld [vmem:[%s279 + $0x88] sm:$0xff]
        %v335 = vld [vmem:[%s279 + $0x90] sm:$0xff]
        %v336 = vld [vmem:[%s279 + $0x98] sm:$0xff]
        %v337 = vld [vmem:[%s279 + $0xa0] sm:$0xff]
        %v338 = vld [vmem:[%s279 + $0xa8] sm:$0xff]
        %v339 = vld [vmem:[%s279 + $0xb0] sm:$0xff]
        %v340 = vld [vmem:[%s279 + $0xb8] sm:$0xff]
        %v341 = vld [vmem:[%s279 + $0xc0] sm:$0xff]
        %v342 = vld [vmem:[%s279 + $0xc8] sm:$0xff]
        %v343 = vld [vmem:[%s279 + $0xd0] sm:$0xff]
        %v344 = vld [vmem:[%s279 + $0xd8] sm:$0xff]
        %v345 = vld [vmem:[%s279 + $0xe0] sm:$0xff]
        %v346 = vld [vmem:[%s279 + $0xe8] sm:$0xff]
        %v347 = vld [vmem:[%s279 + $0xf0] sm:$0xff]
        %v348 = vld [vmem:[%s279 + $0xf8] sm:$0xff]
        %v349 = vpack.c.bf16 %v318, %v317
        %v350 = vpack.c.bf16 %v320, %v319
        %v351 = vpack.c.bf16 %v322, %v321
        %v352 = vpack.c.bf16 %v324, %v323
        %v353 = vpack.c.bf16 %v326, %v325
        %v354 = vpack.c.bf16 %v328, %v327
        %v355 = vpack.c.bf16 %v330, %v329
        %v356 = vpack.c.bf16 %v332, %v331
        %v357 = vpack.c.bf16 %v334, %v333
        %v358 = vpack.c.bf16 %v336, %v335
        %v359 = vpack.c.bf16 %v338, %v337
        %v360 = vpack.c.bf16 %v340, %v339
        %v361 = vpack.c.bf16 %v342, %v341
        %v362 = vpack.c.bf16 %v344, %v343
        %v363 = vpack.c.bf16 %v346, %v345
        %v364 = vpack.c.bf16 %v348, %v347
        %v365 = vld [vmem:[%s1] sm:$0xf]
        %v366 = vld [vmem:[%s1 + $0x4] sm:$0xf]
        %v367 = vld [vmem:[%s1 + $0x8] sm:$0xf]
        %v368 = vld [vmem:[%s1 + $0xc] sm:$0xf]
        %v369 = vld [vmem:[%s1 + $0x10] sm:$0xf]
        %v370 = vld [vmem:[%s1 + $0x14] sm:$0xf]
        %v371 = vld [vmem:[%s1 + $0x18] sm:$0xf]
        %v372 = vld [vmem:[%s1 + $0x1c] sm:$0xf]
        %v373 = vld [vmem:[%s1 + $0x20] sm:$0xf]
        %v374 = vld [vmem:[%s1 + $0x24] sm:$0xf]
        %v375 = vld [vmem:[%s1 + $0x28] sm:$0xf]
        %v376 = vld [vmem:[%s1 + $0x2c] sm:$0xf]
        %v377 = vld [vmem:[%s1 + $0x30] sm:$0xf]
        %v378 = vld [vmem:[%s1 + $0x34] sm:$0xf]
        %v379 = vld [vmem:[%s1 + $0x38] sm:$0xf]
        %v380 = vld [vmem:[%s1 + $0x3c] sm:$0xf]
        %v381 = vld [vmem:[%s4] sm:$0x1]
        %v383 = vperm.slane %v381, 0
        %v401 = vunpack.c.l.b16 %v365
        %v402 = vunpack.c.l.b16 %v366
        %v403 = vunpack.c.l.b16 %v367
        %v404 = vunpack.c.l.b16 %v368
        %v405 = vunpack.c.l.b16 %v369
        %v406 = vunpack.c.l.b16 %v370
        %v407 = vunpack.c.l.b16 %v371
        %v408 = vunpack.c.l.b16 %v372
        %v409 = vunpack.c.l.b16 %v373
        %v410 = vunpack.c.l.b16 %v374
        %v411 = vunpack.c.l.b16 %v375
        %v412 = vunpack.c.l.b16 %v376
        %v413 = vunpack.c.l.b16 %v377
        %v414 = vunpack.c.l.b16 %v378
        %v415 = vunpack.c.l.b16 %v379
        %v416 = vunpack.c.l.b16 %v380
        %v417 = vpack.c.b16 %v402, %v401
        %v418 = vpack.c.b16 %v404, %v403
        %v419 = vpack.c.b16 %v406, %v405
        %v420 = vpack.c.b16 %v408, %v407
        %v421 = vpack.c.b16 %v410, %v409
        %v422 = vpack.c.b16 %v412, %v411
        %v423 = vpack.c.b16 %v414, %v413
        %v424 = vpack.c.b16 %v416, %v415
        %433 = vmatpush.bf16.msra.mxu0 %v424
        %434 = vmatpush.bf16.msra.mxu0 %v423
        %435 = vmatpush.bf16.msra.mxu0 %v422
        %436 = vmatpush.bf16.msra.mxu0 %v421
        %437 = vmatpush.bf16.msra.mxu0 %v420
        %438 = vmatpush.bf16.msra.mxu0 %v419
        %439 = vmatpush.bf16.msra.mxu0 %v418
        %440 = vmatpush.bf16.msra.mxu0 %v417
        %441 = vmatmul.bf16.gmra.mxu0 %v349
        %v442 = vpop.f32.mrf.mxu0
        %v443 = vadd.f32 %v383, %v442
        %v444 = vpop.f32.mrf.mxu0
        %v445 = vadd.f32 %v383, %v444
        %446 = vmatmul.bf16.gmra.mxu0 %v350
        %v447 = vpop.f32.mrf.mxu0
        %v448 = vadd.f32 %v383, %v447
        %v449 = vpop.f32.mrf.mxu0
        %v450 = vadd.f32 %v383, %v449
        %451 = vmatmul.bf16.gmra.mxu0 %v351
        %v452 = vpop.f32.mrf.mxu0
        %v453 = vadd.f32 %v383, %v452
        %v454 = vpop.f32.mrf.mxu0
        %v455 = vadd.f32 %v383, %v454
        %456 = vmatmul.bf16.gmra.mxu0 %v352
        %v457 = vpop.f32.mrf.mxu0
        %v458 = vadd.f32 %v383, %v457
        %v459 = vpop.f32.mrf.mxu0
        %v460 = vadd.f32 %v383, %v459
        %461 = vmatmul.bf16.gmra.mxu0 %v353
        %v462 = vpop.f32.mrf.mxu0
        %v463 = vadd.f32 %v383, %v462
        %v464 = vpop.f32.mrf.mxu0
        %v465 = vadd.f32 %v383, %v464
        %466 = vmatmul.bf16.gmra.mxu0 %v354
        %v467 = vpop.f32.mrf.mxu0
        %v468 = vadd.f32 %v383, %v467
        %v469 = vpop.f32.mrf.mxu0
        %v470 = vadd.f32 %v383, %v469
        %471 = vmatmul.bf16.gmra.mxu0 %v355
        %v472 = vpop.f32.mrf.mxu0
        %v473 = vadd.f32 %v383, %v472
        %v474 = vpop.f32.mrf.mxu0
        %v475 = vadd.f32 %v383, %v474
        %476 = vmatmul.bf16.gmra.mxu0 %v356
        %v477 = vpop.f32.mrf.mxu0
        %v478 = vadd.f32 %v383, %v477
        %v479 = vpop.f32.mrf.mxu0
        %v480 = vadd.f32 %v383, %v479
        %481 = vmatmul.bf16.gmra.mxu0 %v357
        %v482 = vpop.f32.mrf.mxu0
        %v483 = vadd.f32 %v383, %v482
        %v484 = vpop.f32.mrf.mxu0
        %v485 = vadd.f32 %v383, %v484
        %486 = vmatmul.bf16.gmra.mxu0 %v358
        %v487 = vpop.f32.mrf.mxu0
        %v488 = vadd.f32 %v383, %v487
        %v489 = vpop.f32.mrf.mxu0
        %v490 = vadd.f32 %v383, %v489
        %491 = vmatmul.bf16.gmra.mxu0 %v359
        %v492 = vpop.f32.mrf.mxu0
        %v493 = vadd.f32 %v383, %v492
        %v494 = vpop.f32.mrf.mxu0
        %v495 = vadd.f32 %v383, %v494
        %496 = vmatmul.bf16.gmra.mxu0 %v360
        %v497 = vpop.f32.mrf.mxu0
        %v498 = vadd.f32 %v383, %v497
        %v499 = vpop.f32.mrf.mxu0
        %v500 = vadd.f32 %v383, %v499
        %501 = vmatmul.bf16.gmra.mxu0 %v361
        %v502 = vpop.f32.mrf.mxu0
        %v503 = vadd.f32 %v383, %v502
        %v504 = vpop.f32.mrf.mxu0
        %v505 = vadd.f32 %v383, %v504
        %506 = vmatmul.bf16.gmra.mxu0 %v362
        %v507 = vpop.f32.mrf.mxu0
        %v508 = vadd.f32 %v383, %v507
        %v509 = vpop.f32.mrf.mxu0
        %v510 = vadd.f32 %v383, %v509
        %511 = vmatmul.bf16.gmra.mxu0 %v363
        %v512 = vpop.f32.mrf.mxu0
        %v513 = vadd.f32 %v383, %v512
        %v514 = vpop.f32.mrf.mxu0
        %v515 = vadd.f32 %v383, %v514
        %516 = vmatmul.bf16.gmra.mxu0 %v364
        %v517 = vpop.f32.mrf.mxu0
        %v518 = vadd.f32 %v383, %v517
        %v519 = vpop.f32.mrf.mxu0
        %v520 = vadd.f32 %v383, %v519
        %521 = vdwg.mxu0
        %v522 = vmax.f32 %v443, 0.0
        %v523 = vmax.f32 %v445, 0.0
        %v524 = vmax.f32 %v448, 0.0
        %v525 = vmax.f32 %v450, 0.0
        %v526 = vmax.f32 %v453, 0.0
        %v527 = vmax.f32 %v455, 0.0
        %v528 = vmax.f32 %v458, 0.0
        %v529 = vmax.f32 %v460, 0.0
        %v530 = vmax.f32 %v463, 0.0
        %v531 = vmax.f32 %v465, 0.0
        %v532 = vmax.f32 %v468, 0.0
        %v533 = vmax.f32 %v470, 0.0
        %v534 = vmax.f32 %v473, 0.0
        %v535 = vmax.f32 %v475, 0.0
        %v536 = vmax.f32 %v478, 0.0
        %v537 = vmax.f32 %v480, 0.0
        %v538 = vmax.f32 %v483, 0.0
        %v539 = vmax.f32 %v485, 0.0
        %v540 = vmax.f32 %v488, 0.0
        %v541 = vmax.f32 %v490, 0.0
        %v542 = vmax.f32 %v493, 0.0
        %v543 = vmax.f32 %v495, 0.0
        %v544 = vmax.f32 %v498, 0.0
        %v545 = vmax.f32 %v500, 0.0
        %v546 = vmax.f32 %v503, 0.0
        %v547 = vmax.f32 %v505, 0.0
        %v548 = vmax.f32 %v508, 0.0
        %v549 = vmax.f32 %v510, 0.0
        %v550 = vmax.f32 %v513, 0.0
        %v551 = vmax.f32 %v515, 0.0
        %v552 = vmax.f32 %v518, 0.0
        %v553 = vmax.f32 %v520, 0.0
        %v554 = vlaneseq
        %v555 = vshrl.u32 %v554, 7
        %v556 = vadd.s32 %v555, 8
        %v557 = vrot.slane %v522, 7
        %v558 = vrot.slane %v523, 7
        %v559 = vrot.slane %v524, 7
        %v560 = vrot.slane %v525, 7
        %v561 = vrot.slane %v526, 7
        %v562 = vrot.slane %v527, 7
        %v563 = vrot.slane %v528, 7
        %v564 = vrot.slane %v529, 7
        %v565 = vrot.slane %v530, 7
        %v566 = vrot.slane %v531, 7
        %v567 = vrot.slane %v532, 7
        %v568 = vrot.slane %v533, 7
        %v569 = vrot.slane %v534, 7
        %v570 = vrot.slane %v535, 7
        %v571 = vrot.slane %v536, 7
        %v572 = vrot.slane %v537, 7
        %v573 = vrot.slane %v538, 7
        %v574 = vrot.slane %v539, 7
        %v575 = vrot.slane %v540, 7
        %v576 = vrot.slane %v541, 7
        %v577 = vrot.slane %v542, 7
        %v578 = vrot.slane %v543, 7
        %v579 = vrot.slane %v544, 7
        %v580 = vrot.slane %v545, 7
        %v581 = vrot.slane %v546, 7
        %v582 = vrot.slane %v547, 7
        %v583 = vrot.slane %v548, 7
        %v584 = vrot.slane %v549, 7
        %v585 = vrot.slane %v550, 7
        %v586 = vrot.slane %v551, 7
        %v587 = vrot.slane %v553, 7
        %vm588 = vcmp.lt.s32.totalorder %v555, 1
        %v589 = vsel %vm588, %v585, %v586
        %v590 = vsel %vm588, %v584, %v585
        %v591 = vsel %vm588, %v583, %v584
        %v592 = vsel %vm588, %v582, %v583
        %v593 = vsel %vm588, %v581, %v582
        %v594 = vsel %vm588, %v580, %v581
        %v595 = vsel %vm588, %v579, %v580
        %v596 = vsel %vm588, %v578, %v579
        %v597 = vsel %vm588, %v577, %v578
        %v598 = vsel %vm588, %v576, %v577
        %v599 = vsel %vm588, %v575, %v576
        %v600 = vsel %vm588, %v574, %v575
        %v601 = vsel %vm588, %v573, %v574
        %v602 = vsel %vm588, %v572, %v573
        %v603 = vsel %vm588, %v571, %v572
        %v604 = vsel %vm588, %v570, %v571
        %v605 = vsel %vm588, %v569, %v570
        %v606 = vsel %vm588, %v568, %v569
        %v607 = vsel %vm588, %v567, %v568
        %v608 = vsel %vm588, %v566, %v567
        %v609 = vsel %vm588, %v565, %v566
        %v610 = vsel %vm588, %v564, %v565
        %v611 = vsel %vm588, %v563, %v564
        %v612 = vsel %vm588, %v562, %v563
        %v613 = vsel %vm588, %v561, %v562
        %v614 = vsel %vm588, %v560, %v561
        %v615 = vsel %vm588, %v559, %v560
        %v616 = vsel %vm588, %v558, %v559
        %v617 = vsel %vm588, %v557, %v558
        %v618 = vsel %vm588, %v587, %v557
        %vm619 = vcmp.ge.s32.totalorder %v555, 1
        %vm620 = vcmp.ge.s32.totalorder %v556, 1
        %v621 = vsel %vm619, %v618, 0.0
        %v622 = vsel %vm620, %v617, 0.0
        %v623 = vsel %vm619, %v616, 0.0
        %v624 = vsel %vm620, %v615, 0.0
        %v625 = vsel %vm619, %v614, 0.0
        %v626 = vsel %vm620, %v613, 0.0
        %v627 = vsel %vm619, %v612, 0.0
        %v628 = vsel %vm620, %v611, 0.0
        %v629 = vsel %vm619, %v610, 0.0
        %v630 = vsel %vm620, %v609, 0.0
        %v631 = vsel %vm619, %v608, 0.0
        %v632 = vsel %vm620, %v607, 0.0
        %v633 = vsel %vm619, %v606, 0.0
        %v634 = vsel %vm620, %v605, 0.0
        %v635 = vsel %vm619, %v604, 0.0
        %v636 = vsel %vm620, %v603, 0.0
        %v637 = vsel %vm619, %v602, 0.0
        %v638 = vsel %vm620, %v601, 0.0
        %v639 = vsel %vm619, %v600, 0.0
        %v640 = vsel %vm620, %v599, 0.0
        %v641 = vsel %vm619, %v598, 0.0
        %v642 = vsel %vm620, %v597, 0.0
        %v643 = vsel %vm619, %v596, 0.0
        %v644 = vsel %vm620, %v595, 0.0
        %v645 = vsel %vm619, %v594, 0.0
        %v646 = vsel %vm620, %v593, 0.0
        %v647 = vsel %vm619, %v592, 0.0
        %v648 = vsel %vm620, %v591, 0.0
        %v649 = vsel %vm619, %v590, 0.0
        %v650 = vsel %vm620, %v589, 0.0
        %v651 = vpack.c.bf16 0.0, 0.0
        %v652 = vpack.c.bf16 %v622, %v621
        %v653 = vpack.c.bf16 %v624, %v623
        %v654 = vpack.c.bf16 %v626, %v625
        %v655 = vpack.c.bf16 %v628, %v627
        %v656 = vpack.c.bf16 %v630, %v629
        %v657 = vpack.c.bf16 %v632, %v631
        %v658 = vpack.c.bf16 %v634, %v633
        %v659 = vpack.c.bf16 %v636, %v635
        %v660 = vpack.c.bf16 %v638, %v637
        %v661 = vpack.c.bf16 %v640, %v639
        %v662 = vpack.c.bf16 %v642, %v641
        %v663 = vpack.c.bf16 %v644, %v643
        %v664 = vpack.c.bf16 %v646, %v645
        %v665 = vpack.c.bf16 %v648, %v647
        %v666 = vpack.c.bf16 %v650, %v649
        %v667 = vld [vmem:[#allocation6] sm:$0xf]
        %v668 = vld [vmem:[#allocation6 + $0x4] sm:$0xf]
        %v669 = vld [vmem:[#allocation6 + $0x8] sm:$0xf]
        %v670 = vld [vmem:[#allocation6 + $0xc] sm:$0xf]
        %v675 = vunpack.c.l.b16 %v667
        %v676 = vunpack.c.l.b16 %v668
        %v677 = vunpack.c.l.b16 %v669
        %v678 = vunpack.c.l.b16 %v670
        %v679 = vpack.c.b16 %v676, %v675
        %v680 = vpack.c.b16 %v678, %v677
        %vm683 = vcmask 261120
        %v685 = vsel %vm683, %v651, 0
        %v688 = vsel %vm683, %v652, 0
        %v691 = vsel %vm683, %v653, 0
        %v694 = vsel %vm683, %v654, 0
        %v697 = vsel %vm683, %v655, 0
        %v700 = vsel %vm683, %v656, 0
        %v703 = vsel %vm683, %v657, 0
        %v706 = vsel %vm683, %v658, 0
        %v709 = vsel %vm683, %v659, 0
        %v712 = vsel %vm683, %v660, 0
        %v715 = vsel %vm683, %v661, 0
        %v718 = vsel %vm683, %v662, 0
        %v721 = vsel %vm683, %v663, 0
        %v724 = vsel %vm683, %v664, 0
        %v727 = vsel %vm683, %v665, 0
        %v730 = vsel %vm683, %v666, 0
        %732 = vmatpush.bf16.msra.mxu0 0
        %733 = vmatpush.bf16.msra.mxu0 0
        %734 = vmatpush.bf16.msra.mxu0 0
        %735 = vmatpush.bf16.msra.mxu0 0
        %736 = vmatpush.bf16.msra.mxu0 0
        %737 = vmatpush.bf16.msra.mxu0 0
        %738 = vmatpush.bf16.msra.mxu0 %v680
        %739 = vmatpush.bf16.msra.mxu0 %v679
        %740 = vmatmul.bf16.gmra.mxu0 %v685
        %v741 = vpop.f32.mrf.mxu0
        %v742 = vadd.f32 0.0, %v741
        %v743 = vpop.f32.mrf.mxu0
        %v744 = vadd.f32 0.0, %v743
        %745 = vmatmul.bf16.gmra.mxu0 %v688
        %v746 = vpop.f32.mrf.mxu0
        %v747 = vadd.f32 0.0, %v746
        %v748 = vpop.f32.mrf.mxu0
        %v749 = vadd.f32 0.0, %v748
        %750 = vmatmul.bf16.gmra.mxu0 %v691
        %v751 = vpop.f32.mrf.mxu0
        %v752 = vadd.f32 0.0, %v751
        %v753 = vpop.f32.mrf.mxu0
        %v754 = vadd.f32 0.0, %v753
        %755 = vmatmul.bf16.gmra.mxu0 %v694
        %v756 = vpop.f32.mrf.mxu0
        %v757 = vadd.f32 0.0, %v756
        %v758 = vpop.f32.mrf.mxu0
        %v759 = vadd.f32 0.0, %v758
        %760 = vmatmul.bf16.gmra.mxu0 %v697
        %v761 = vpop.f32.mrf.mxu0
        %v762 = vadd.f32 0.0, %v761
        %v763 = vpop.f32.mrf.mxu0
        %v764 = vadd.f32 0.0, %v763
        %765 = vmatmul.bf16.gmra.mxu0 %v700
        %v766 = vpop.f32.mrf.mxu0
        %v767 = vadd.f32 0.0, %v766
        %v768 = vpop.f32.mrf.mxu0
        %v769 = vadd.f32 0.0, %v768
        %770 = vmatmul.bf16.gmra.mxu0 %v703
        %v771 = vpop.f32.mrf.mxu0
        %v772 = vadd.f32 0.0, %v771
        %v773 = vpop.f32.mrf.mxu0
        %v774 = vadd.f32 0.0, %v773
        %775 = vmatmul.bf16.gmra.mxu0 %v706
        %v776 = vpop.f32.mrf.mxu0
        %v777 = vadd.f32 0.0, %v776
        %v778 = vpop.f32.mrf.mxu0
        %v779 = vadd.f32 0.0, %v778
        %780 = vmatmul.bf16.gmra.mxu0 %v709
        %v781 = vpop.f32.mrf.mxu0
        %v782 = vadd.f32 0.0, %v781
        %v783 = vpop.f32.mrf.mxu0
        %v784 = vadd.f32 0.0, %v783
        %785 = vmatmul.bf16.gmra.mxu0 %v712
        %v786 = vpop.f32.mrf.mxu0
        %v787 = vadd.f32 0.0, %v786
        %v788 = vpop.f32.mrf.mxu0
        %v789 = vadd.f32 0.0, %v788
        %790 = vmatmul.bf16.gmra.mxu0 %v715
        %v791 = vpop.f32.mrf.mxu0
        %v792 = vadd.f32 0.0, %v791
        %v793 = vpop.f32.mrf.mxu0
        %v794 = vadd.f32 0.0, %v793
        %795 = vmatmul.bf16.gmra.mxu0 %v718
        %v796 = vpop.f32.mrf.mxu0
        %v797 = vadd.f32 0.0, %v796
        %v798 = vpop.f32.mrf.mxu0
        %v799 = vadd.f32 0.0, %v798
        %800 = vmatmul.bf16.gmra.mxu0 %v721
        %v801 = vpop.f32.mrf.mxu0
        %v802 = vadd.f32 0.0, %v801
        %v803 = vpop.f32.mrf.mxu0
        %v804 = vadd.f32 0.0, %v803
        %805 = vmatmul.bf16.gmra.mxu0 %v724
        %v806 = vpop.f32.mrf.mxu0
        %v807 = vadd.f32 0.0, %v806
        %v808 = vpop.f32.mrf.mxu0
        %v809 = vadd.f32 0.0, %v808
        %810 = vmatmul.bf16.gmra.mxu0 %v727
        %v811 = vpop.f32.mrf.mxu0
        %v812 = vadd.f32 0.0, %v811
        %v813 = vpop.f32.mrf.mxu0
        %v814 = vadd.f32 0.0, %v813
        %815 = vmatmul.bf16.gmra.mxu0 %v730
        %v816 = vpop.f32.mrf.mxu0
        %v817 = vadd.f32 0.0, %v816
        %v818 = vpop.f32.mrf.mxu0
        %v819 = vadd.f32 0.0, %v818
        %820 = vdwg.mxu0
        %821 = vst.msk [vmem:[#allocation2] sm:$0xff] %vm683, %v742
        %822 = vst.msk [vmem:[#allocation2 + $0x8] sm:$0xff] %vm683, %v744
        %823 = vst.msk [vmem:[#allocation2 + $0x10] sm:$0xff] %vm683, %v747
        %824 = vst.msk [vmem:[#allocation2 + $0x18] sm:$0xff] %vm683, %v749
        %825 = vst.msk [vmem:[#allocation2 + $0x20] sm:$0xff] %vm683, %v752
        %826 = vst.msk [vmem:[#allocation2 + $0x28] sm:$0xff] %vm683, %v754
        %827 = vst.msk [vmem:[#allocation2 + $0x30] sm:$0xff] %vm683, %v757
        %828 = vst.msk [vmem:[#allocation2 + $0x38] sm:$0xff] %vm683, %v759
        %829 = vst.msk [vmem:[#allocation2 + $0x40] sm:$0xff] %vm683, %v762
        %830 = vst.msk [vmem:[#allocation2 + $0x48] sm:$0xff] %vm683, %v764
        %831 = vst.msk [vmem:[#allocation2 + $0x50] sm:$0xff] %vm683, %v767
        %832 = vst.msk [vmem:[#allocation2 + $0x58] sm:$0xff] %vm683, %v769
        %833 = vst.msk [vmem:[#allocation2 + $0x60] sm:$0xff] %vm683, %v772
        %834 = vst.msk [vmem:[#allocation2 + $0x68] sm:$0xff] %vm683, %v774
        %835 = vst.msk [vmem:[#allocation2 + $0x70] sm:$0xff] %vm683, %v777
        %836 = vst.msk [vmem:[#allocation2 + $0x78] sm:$0xff] %vm683, %v779
        %837 = vst.msk [vmem:[#allocation2 + $0x80] sm:$0xff] %vm683, %v782
        %838 = vst.msk [vmem:[#allocation2 + $0x88] sm:$0xff] %vm683, %v784
        %839 = vst.msk [vmem:[#allocation2 + $0x90] sm:$0xff] %vm683, %v787
        %840 = vst.msk [vmem:[#allocation2 + $0x98] sm:$0xff] %vm683, %v789
        %841 = vst.msk [vmem:[#allocation2 + $0xa0] sm:$0xff] %vm683, %v792
        %842 = vst.msk [vmem:[#allocation2 + $0xa8] sm:$0xff] %vm683, %v794
        %843 = vst.msk [vmem:[#allocation2 + $0xb0] sm:$0xff] %vm683, %v797
        %844 = vst.msk [vmem:[#allocation2 + $0xb8] sm:$0xff] %vm683, %v799
        %845 = vst.msk [vmem:[#allocation2 + $0xc0] sm:$0xff] %vm683, %v802
        %846 = vst.msk [vmem:[#allocation2 + $0xc8] sm:$0xff] %vm683, %v804
        %847 = vst.msk [vmem:[#allocation2 + $0xd0] sm:$0xff] %vm683, %v807
        %848 = vst.msk [vmem:[#allocation2 + $0xd8] sm:$0xff] %vm683, %v809
        %849 = vst.msk [vmem:[#allocation2 + $0xe0] sm:$0xff] %vm683, %v812
        %850 = vst.msk [vmem:[#allocation2 + $0xe8] sm:$0xff] %vm683, %v814
        %851 = vst.msk [vmem:[#allocation2 + $0xf0] sm:$0xff] %vm683, %v817
        %852 = vst.msk [vmem:[#allocation2 + $0xf8] sm:$0xff] %vm683, %v819
        %v853 = vpack.c.bf16 %v523, %v522
        %v854 = vpack.c.bf16 %v525, %v524
        %v855 = vpack.c.bf16 %v527, %v526
        %v856 = vpack.c.bf16 %v529, %v528
        %v857 = vpack.c.bf16 %v531, %v530
        %v858 = vpack.c.bf16 %v533, %v532
        %v859 = vpack.c.bf16 %v535, %v534
        %v860 = vpack.c.bf16 %v537, %v536
        %v861 = vpack.c.bf16 %v539, %v538
        %v862 = vpack.c.bf16 %v541, %v540
        %v863 = vpack.c.bf16 %v543, %v542
        %v864 = vpack.c.bf16 %v545, %v544
        %v865 = vpack.c.bf16 %v547, %v546
        %v866 = vpack.c.bf16 %v549, %v548
        %v867 = vpack.c.bf16 %v551, %v550
        %s868 = scalar_lea.vmem [#allocation6], 16
        %v869 = vld [vmem:[%s868] sm:$0xf]
        %v870 = vld [vmem:[%s868 + $0x4] sm:$0xf]
        %v871 = vld [vmem:[%s868 + $0x8] sm:$0xf]
        %v872 = vld [vmem:[%s868 + $0xc] sm:$0xf]
        %v877 = vunpack.c.l.b16 %v869
        %v878 = vunpack.c.l.b16 %v870
        %v879 = vunpack.c.l.b16 %v871
        %v880 = vunpack.c.l.b16 %v872
        %v881 = vpack.c.b16 %v878, %v877
        %v882 = vpack.c.b16 %v880, %v879
        %v886 = vsel %vm683, %v853, 0
        %v889 = vsel %vm683, %v854, 0
        %v892 = vsel %vm683, %v855, 0
        %v895 = vsel %vm683, %v856, 0
        %v898 = vsel %vm683, %v857, 0
        %v901 = vsel %vm683, %v858, 0
        %v904 = vsel %vm683, %v859, 0
        %v907 = vsel %vm683, %v860, 0
        %v910 = vsel %vm683, %v861, 0
        %v913 = vsel %vm683, %v862, 0
        %v916 = vsel %vm683, %v863, 0
        %v919 = vsel %vm683, %v864, 0
        %v922 = vsel %vm683, %v865, 0
        %v925 = vsel %vm683, %v866, 0
        %v928 = vsel %vm683, %v867, 0
        %930 = vmatpush.bf16.msra.mxu0 0
        %931 = vmatpush.bf16.msra.mxu0 0
        %932 = vmatpush.bf16.msra.mxu0 0
        %933 = vmatpush.bf16.msra.mxu0 0
        %934 = vmatpush.bf16.msra.mxu0 0
        %935 = vmatpush.bf16.msra.mxu0 0
        %936 = vmatpush.bf16.msra.mxu0 %v882
        %937 = vmatpush.bf16.msra.mxu0 %v881
        %938 = vmatmul.bf16.gmra.mxu0 %v685
        %v939 = vpop.f32.mrf.mxu0
        %v940 = vadd.f32 0.0, %v939
        %v941 = vpop.f32.mrf.mxu0
        %v942 = vadd.f32 0.0, %v941
        %943 = vmatmul.bf16.gmra.mxu0 %v886
        %v944 = vpop.f32.mrf.mxu0
        %v945 = vadd.f32 0.0, %v944
        %v946 = vpop.f32.mrf.mxu0
        %v947 = vadd.f32 0.0, %v946
        %948 = vmatmul.bf16.gmra.mxu0 %v889
        %v949 = vpop.f32.mrf.mxu0
        %v950 = vadd.f32 0.0, %v949
        %v951 = vpop.f32.mrf.mxu0
        %v952 = vadd.f32 0.0, %v951
        %953 = vmatmul.bf16.gmra.mxu0 %v892
        %v954 = vpop.f32.mrf.mxu0
        %v955 = vadd.f32 0.0, %v954
        %v956 = vpop.f32.mrf.mxu0
        %v957 = vadd.f32 0.0, %v956
        %958 = vmatmul.bf16.gmra.mxu0 %v895
        %v959 = vpop.f32.mrf.mxu0
        %v960 = vadd.f32 0.0, %v959
        %v961 = vpop.f32.mrf.mxu0
        %v962 = vadd.f32 0.0, %v961
        %963 = vmatmul.bf16.gmra.mxu0 %v898
        %v964 = vpop.f32.mrf.mxu0
        %v965 = vadd.f32 0.0, %v964
        %v966 = vpop.f32.mrf.mxu0
        %v967 = vadd.f32 0.0, %v966
        %968 = vmatmul.bf16.gmra.mxu0 %v901
        %v969 = vpop.f32.mrf.mxu0
        %v970 = vadd.f32 0.0, %v969
        %v971 = vpop.f32.mrf.mxu0
        %v972 = vadd.f32 0.0, %v971
        %973 = vmatmul.bf16.gmra.mxu0 %v904
        %v974 = vpop.f32.mrf.mxu0
        %v975 = vadd.f32 0.0, %v974
        %v976 = vpop.f32.mrf.mxu0
        %v977 = vadd.f32 0.0, %v976
        %978 = vmatmul.bf16.gmra.mxu0 %v907
        %v979 = vpop.f32.mrf.mxu0
        %v980 = vadd.f32 0.0, %v979
        %v981 = vpop.f32.mrf.mxu0
        %v982 = vadd.f32 0.0, %v981
        %983 = vmatmul.bf16.gmra.mxu0 %v910
        %v984 = vpop.f32.mrf.mxu0
        %v985 = vadd.f32 0.0, %v984
        %v986 = vpop.f32.mrf.mxu0
        %v987 = vadd.f32 0.0, %v986
        %988 = vmatmul.bf16.gmra.mxu0 %v913
        %v989 = vpop.f32.mrf.mxu0
        %v990 = vadd.f32 0.0, %v989
        %v991 = vpop.f32.mrf.mxu0
        %v992 = vadd.f32 0.0, %v991
        %993 = vmatmul.bf16.gmra.mxu0 %v916
        %v994 = vpop.f32.mrf.mxu0
        %v995 = vadd.f32 0.0, %v994
        %v996 = vpop.f32.mrf.mxu0
        %v997 = vadd.f32 0.0, %v996
        %998 = vmatmul.bf16.gmra.mxu0 %v919
        %v999 = vpop.f32.mrf.mxu0
        %v1000 = vadd.f32 0.0, %v999
        %v1001 = vpop.f32.mrf.mxu0
        %v1002 = vadd.f32 0.0, %v1001
        %1003 = vmatmul.bf16.gmra.mxu0 %v922
        %v1004 = vpop.f32.mrf.mxu0
        %v1005 = vadd.f32 0.0, %v1004
        %v1006 = vpop.f32.mrf.mxu0
        %v1007 = vadd.f32 0.0, %v1006
        %1008 = vmatmul.bf16.gmra.mxu0 %v925
        %v1009 = vpop.f32.mrf.mxu0
        %v1010 = vadd.f32 0.0, %v1009
        %v1011 = vpop.f32.mrf.mxu0
        %v1012 = vadd.f32 0.0, %v1011
        %1013 = vmatmul.bf16.gmra.mxu0 %v928
        %v1014 = vpop.f32.mrf.mxu0
        %v1015 = vadd.f32 0.0, %v1014
        %v1016 = vpop.f32.mrf.mxu0
        %v1017 = vadd.f32 0.0, %v1016
        %1018 = vdwg.mxu0
        %v1019 = vld [vmem:[#allocation2] sm:$0xff]
        %v1020 = vld [vmem:[#allocation2 + $0x8] sm:$0xff]
        %v1021 = vld [vmem:[#allocation2 + $0x10] sm:$0xff]
        %v1022 = vld [vmem:[#allocation2 + $0x18] sm:$0xff]
        %v1023 = vld [vmem:[#allocation2 + $0x20] sm:$0xff]
        %v1024 = vld [vmem:[#allocation2 + $0x28] sm:$0xff]
        %v1025 = vld [vmem:[#allocation2 + $0x30] sm:$0xff]
        %v1026 = vld [vmem:[#allocation2 + $0x38] sm:$0xff]
        %v1027 = vld [vmem:[#allocation2 + $0x40] sm:$0xff]
        %v1028 = vld [vmem:[#allocation2 + $0x48] sm:$0xff]
        %v1029 = vld [vmem:[#allocation2 + $0x50] sm:$0xff]
        %v1030 = vld [vmem:[#allocation2 + $0x58] sm:$0xff]
        %v1031 = vld [vmem:[#allocation2 + $0x60] sm:$0xff]
        %v1032 = vld [vmem:[#allocation2 + $0x68] sm:$0xff]
        %v1033 = vld [vmem:[#allocation2 + $0x70] sm:$0xff]
        %v1034 = vld [vmem:[#allocation2 + $0x78] sm:$0xff]
        %v1035 = vld [vmem:[#allocation2 + $0x80] sm:$0xff]
        %v1036 = vld [vmem:[#allocation2 + $0x88] sm:$0xff]
        %v1037 = vld [vmem:[#allocation2 + $0x90] sm:$0xff]
        %v1038 = vld [vmem:[#allocation2 + $0x98] sm:$0xff]
        %v1039 = vld [vmem:[#allocation2 + $0xa0] sm:$0xff]
        %v1040 = vld [vmem:[#allocation2 + $0xa8] sm:$0xff]
        %v1041 = vld [vmem:[#allocation2 + $0xb0] sm:$0xff]
        %v1042 = vld [vmem:[#allocation2 + $0xb8] sm:$0xff]
        %v1043 = vld [vmem:[#allocation2 + $0xc0] sm:$0xff]
        %v1044 = vld [vmem:[#allocation2 + $0xc8] sm:$0xff]
        %v1045 = vld [vmem:[#allocation2 + $0xd0] sm:$0xff]
        %v1046 = vld [vmem:[#allocation2 + $0xd8] sm:$0xff]
        %v1047 = vld [vmem:[#allocation2 + $0xe0] sm:$0xff]
        %v1048 = vld [vmem:[#allocation2 + $0xe8] sm:$0xff]
        %v1049 = vld [vmem:[#allocation2 + $0xf0] sm:$0xff]
        %v1050 = vld [vmem:[#allocation2 + $0xf8] sm:$0xff]
        %v1051 = vadd.f32 %v1019, %v940
        %v1052 = vadd.f32 %v1020, %v942
        %v1053 = vadd.f32 %v1021, %v945
        %v1054 = vadd.f32 %v1022, %v947
        %v1055 = vadd.f32 %v1023, %v950
        %v1056 = vadd.f32 %v1024, %v952
        %v1057 = vadd.f32 %v1025, %v955
        %v1058 = vadd.f32 %v1026, %v957
        %v1059 = vadd.f32 %v1027, %v960
        %v1060 = vadd.f32 %v1028, %v962
        %v1061 = vadd.f32 %v1029, %v965
        %v1062 = vadd.f32 %v1030, %v967
        %v1063 = vadd.f32 %v1031, %v970
        %v1064 = vadd.f32 %v1032, %v972
        %v1065 = vadd.f32 %v1033, %v975
        %v1066 = vadd.f32 %v1034, %v977
        %v1067 = vadd.f32 %v1035, %v980
        %v1068 = vadd.f32 %v1036, %v982
        %v1069 = vadd.f32 %v1037, %v985
        %v1070 = vadd.f32 %v1038, %v987
        %v1071 = vadd.f32 %v1039, %v990
        %v1072 = vadd.f32 %v1040, %v992
        %v1073 = vadd.f32 %v1041, %v995
        %v1074 = vadd.f32 %v1042, %v997
        %v1075 = vadd.f32 %v1043, %v1000
        %v1076 = vadd.f32 %v1044, %v1002
        %v1077 = vadd.f32 %v1045, %v1005
        %v1078 = vadd.f32 %v1046, %v1007
        %v1079 = vadd.f32 %v1047, %v1010
        %v1080 = vadd.f32 %v1048, %v1012
        %v1081 = vadd.f32 %v1049, %v1015
        %v1082 = vadd.f32 %v1050, %v1017
        %1083 = vst.msk [vmem:[#allocation2] sm:$0xff] %vm683, %v1051
        %1084 = vst.msk [vmem:[#allocation2 + $0x8] sm:$0xff] %vm683, %v1052
        %1085 = vst.msk [vmem:[#allocation2 + $0x10] sm:$0xff] %vm683, %v1053
        %1086 = vst.msk [vmem:[#allocation2 + $0x18] sm:$0xff] %vm683, %v1054
        %1087 = vst.msk [vmem:[#allocation2 + $0x20] sm:$0xff] %vm683, %v1055
        %1088 = vst.msk [vmem:[#allocation2 + $0x28] sm:$0xff] %vm683, %v1056
        %1089 = vst.msk [vmem:[#allocation2 + $0x30] sm:$0xff] %vm683, %v1057
        %1090 = vst.msk [vmem:[#allocation2 + $0x38] sm:$0xff] %vm683, %v1058
        %1091 = vst.msk [vmem:[#allocation2 + $0x40] sm:$0xff] %vm683, %v1059
        %1092 = vst.msk [vmem:[#allocation2 + $0x48] sm:$0xff] %vm683, %v1060
        %1093 = vst.msk [vmem:[#allocation2 + $0x50] sm:$0xff] %vm683, %v1061
        %1094 = vst.msk [vmem:[#allocation2 + $0x58] sm:$0xff] %vm683, %v1062
        %1095 = vst.msk [vmem:[#allocation2 + $0x60] sm:$0xff] %vm683, %v1063
        %1096 = vst.msk [vmem:[#allocation2 + $0x68] sm:$0xff] %vm683, %v1064
        %1097 = vst.msk [vmem:[#allocation2 + $0x70] sm:$0xff] %vm683, %v1065
        %1098 = vst.msk [vmem:[#allocation2 + $0x78] sm:$0xff] %vm683, %v1066
        %1099 = vst.msk [vmem:[#allocation2 + $0x80] sm:$0xff] %vm683, %v1067
        %1100 = vst.msk [vmem:[#allocation2 + $0x88] sm:$0xff] %vm683, %v1068
        %1101 = vst.msk [vmem:[#allocation2 + $0x90] sm:$0xff] %vm683, %v1069
        %1102 = vst.msk [vmem:[#allocation2 + $0x98] sm:$0xff] %vm683, %v1070
        %1103 = vst.msk [vmem:[#allocation2 + $0xa0] sm:$0xff] %vm683, %v1071
        %1104 = vst.msk [vmem:[#allocation2 + $0xa8] sm:$0xff] %vm683, %v1072
        %1105 = vst.msk [vmem:[#allocation2 + $0xb0] sm:$0xff] %vm683, %v1073
        %1106 = vst.msk [vmem:[#allocation2 + $0xb8] sm:$0xff] %vm683, %v1074
        %1107 = vst.msk [vmem:[#allocation2 + $0xc0] sm:$0xff] %vm683, %v1075
        %1108 = vst.msk [vmem:[#allocation2 + $0xc8] sm:$0xff] %vm683, %v1076
        %1109 = vst.msk [vmem:[#allocation2 + $0xd0] sm:$0xff] %vm683, %v1077
        %1110 = vst.msk [vmem:[#allocation2 + $0xd8] sm:$0xff] %vm683, %v1078
        %1111 = vst.msk [vmem:[#allocation2 + $0xe0] sm:$0xff] %vm683, %v1079
        %1112 = vst.msk [vmem:[#allocation2 + $0xe8] sm:$0xff] %vm683, %v1080
        %1113 = vst.msk [vmem:[#allocation2 + $0xf0] sm:$0xff] %vm683, %v1081
        %1114 = vst.msk [vmem:[#allocation2 + $0xf8] sm:$0xff] %vm683, %v1082
        %v1115 = vrot.slane %v522, 1
        %v1116 = vrot.slane %v523, 1
        %v1117 = vrot.slane %v524, 1
        %v1118 = vrot.slane %v525, 1
        %v1119 = vrot.slane %v526, 1
        %v1120 = vrot.slane %v527, 1
        %v1121 = vrot.slane %v528, 1
        %v1122 = vrot.slane %v529, 1
        %v1123 = vrot.slane %v530, 1
        %v1124 = vrot.slane %v531, 1
        %v1125 = vrot.slane %v532, 1
        %v1126 = vrot.slane %v533, 1
        %v1127 = vrot.slane %v534, 1
        %v1128 = vrot.slane %v535, 1
        %v1129 = vrot.slane %v536, 1
        %v1130 = vrot.slane %v537, 1
        %v1131 = vrot.slane %v538, 1
        %v1132 = vrot.slane %v539, 1
        %v1133 = vrot.slane %v540, 1
        %v1134 = vrot.slane %v541, 1
        %v1135 = vrot.slane %v542, 1
        %v1136 = vrot.slane %v543, 1
        %v1137 = vrot.slane %v544, 1
        %v1138 = vrot.slane %v545, 1
        %v1139 = vrot.slane %v546, 1
        %v1140 = vrot.slane %v547, 1
        %v1141 = vrot.slane %v548, 1
        %v1142 = vrot.slane %v549, 1
        %v1143 = vrot.slane %v550, 1
        %v1144 = vrot.slane %v551, 1
        %v1145 = vrot.slane %v552, 1
        %vm1146 = vcmp.lt.s32.totalorder %v555, 7
        %v1147 = vsel %vm1146, %v1144, %v1145
        %v1148 = vsel %vm1146, %v1143, %v1144
        %v1149 = vsel %vm1146, %v1142, %v1143
        %v1150 = vsel %vm1146, %v1141, %v1142
        %v1151 = vsel %vm1146, %v1140, %v1141
        %v1152 = vsel %vm1146, %v1139, %v1140
        %v1153 = vsel %vm1146, %v1138, %v1139
        %v1154 = vsel %vm1146, %v1137, %v1138
        %v1155 = vsel %vm1146, %v1136, %v1137
        %v1156 = vsel %vm1146, %v1135, %v1136
        %v1157 = vsel %vm1146, %v1134, %v1135
        %v1158 = vsel %vm1146, %v1133, %v1134
        %v1159 = vsel %vm1146, %v1132, %v1133
        %v1160 = vsel %vm1146, %v1131, %v1132
        %v1161 = vsel %vm1146, %v1130, %v1131
        %v1162 = vsel %vm1146, %v1129, %v1130
        %v1163 = vsel %vm1146, %v1128, %v1129
        %v1164 = vsel %vm1146, %v1127, %v1128
        %v1165 = vsel %vm1146, %v1126, %v1127
        %v1166 = vsel %vm1146, %v1125, %v1126
        %v1167 = vsel %vm1146, %v1124, %v1125
        %v1168 = vsel %vm1146, %v1123, %v1124
        %v1169 = vsel %vm1146, %v1122, %v1123
        %v1170 = vsel %vm1146, %v1121, %v1122
        %v1171 = vsel %vm1146, %v1120, %v1121
        %v1172 = vsel %vm1146, %v1119, %v1120
        %v1173 = vsel %vm1146, %v1118, %v1119
        %v1174 = vsel %vm1146, %v1117, %v1118
        %v1175 = vsel %vm1146, %v1116, %v1117
        %v1176 = vsel %vm1146, %v1115, %v1116
        %vm1177 = vcmp.le.s32.totalorder %v555, 14
        %vm1178 = vcmp.le.s32.totalorder %v556, 14
        %v1179 = vsel %vm1177, %v1176, 0.0
        %v1180 = vsel %vm1178, %v1175, 0.0
        %v1181 = vsel %vm1177, %v1174, 0.0
        %v1182 = vsel %vm1178, %v1173, 0.0
        %v1183 = vsel %vm1177, %v1172, 0.0
        %v1184 = vsel %vm1178, %v1171, 0.0
        %v1185 = vsel %vm1177, %v1170, 0.0
        %v1186 = vsel %vm1178, %v1169, 0.0
        %v1187 = vsel %vm1177, %v1168, 0.0
        %v1188 = vsel %vm1178, %v1167, 0.0
        %v1189 = vsel %vm1177, %v1166, 0.0
        %v1190 = vsel %vm1178, %v1165, 0.0
        %v1191 = vsel %vm1177, %v1164, 0.0
        %v1192 = vsel %vm1178, %v1163, 0.0
        %v1193 = vsel %vm1177, %v1162, 0.0
        %v1194 = vsel %vm1178, %v1161, 0.0
        %v1195 = vsel %vm1177, %v1160, 0.0
        %v1196 = vsel %vm1178, %v1159, 0.0
        %v1197 = vsel %vm1177, %v1158, 0.0
        %v1198 = vsel %vm1178, %v1157, 0.0
        %v1199 = vsel %vm1177, %v1156, 0.0
        %v1200 = vsel %vm1178, %v1155, 0.0
        %v1201 = vsel %vm1177, %v1154, 0.0
        %v1202 = vsel %vm1178, %v1153, 0.0
        %v1203 = vsel %vm1177, %v1152, 0.0
        %v1204 = vsel %vm1178, %v1151, 0.0
        %v1205 = vsel %vm1177, %v1150, 0.0
        %v1206 = vsel %vm1178, %v1149, 0.0
        %v1207 = vsel %vm1177, %v1148, 0.0
        %v1208 = vsel %vm1178, %v1147, 0.0
        %v1209 = vpack.c.bf16 %v1180, %v1179
        %v1210 = vpack.c.bf16 %v1182, %v1181
        %v1211 = vpack.c.bf16 %v1184, %v1183
        %v1212 = vpack.c.bf16 %v1186, %v1185
        %v1213 = vpack.c.bf16 %v1188, %v1187
        %v1214 = vpack.c.bf16 %v1190, %v1189
        %v1215 = vpack.c.bf16 %v1192, %v1191
        %v1216 = vpack.c.bf16 %v1194, %v1193
        %v1217 = vpack.c.bf16 %v1196, %v1195
        %v1218 = vpack.c.bf16 %v1198, %v1197
        %v1219 = vpack.c.bf16 %v1200, %v1199
        %v1220 = vpack.c.bf16 %v1202, %v1201
        %v1221 = vpack.c.bf16 %v1204, %v1203
        %v1222 = vpack.c.bf16 %v1206, %v1205
        %v1223 = vpack.c.bf16 %v1208, %v1207
        %s1224 = scalar_lea.vmem [#allocation6], 32
        %v1225 = vld [vmem:[%s1224] sm:$0xf]
        %v1226 = vld [vmem:[%s1224 + $0x4] sm:$0xf]
        %v1227 = vld [vmem:[%s1224 + $0x8] sm:$0xf]
        %v1228 = vld [vmem:[%s1224 + $0xc] sm:$0xf]
        %v1233 = vunpack.c.l.b16 %v1225
        %v1234 = vunpack.c.l.b16 %v1226
        %v1235 = vunpack.c.l.b16 %v1227
        %v1236 = vunpack.c.l.b16 %v1228
        %v1237 = vpack.c.b16 %v1234, %v1233
        %v1238 = vpack.c.b16 %v1236, %v1235
        %v1242 = vsel %vm683, %v1209, 0
        %v1245 = vsel %vm683, %v1210, 0
        %v1248 = vsel %vm683, %v1211, 0
        %v1251 = vsel %vm683, %v1212, 0
        %v1254 = vsel %vm683, %v1213, 0
        %v1257 = vsel %vm683, %v1214, 0
        %v1260 = vsel %vm683, %v1215, 0
        %v1263 = vsel %vm683, %v1216, 0
        %v1266 = vsel %vm683, %v1217, 0
        %v1269 = vsel %vm683, %v1218, 0
        %v1272 = vsel %vm683, %v1219, 0
        %v1275 = vsel %vm683, %v1220, 0
        %v1278 = vsel %vm683, %v1221, 0
        %v1281 = vsel %vm683, %v1222, 0
        %v1284 = vsel %vm683, %v1223, 0
        %1286 = vmatpush.bf16.msra.mxu0 0
        %1287 = vmatpush.bf16.msra.mxu0 0
        %1288 = vmatpush.bf16.msra.mxu0 0
        %1289 = vmatpush.bf16.msra.mxu0 0
        %1290 = vmatpush.bf16.msra.mxu0 0
        %1291 = vmatpush.bf16.msra.mxu0 0
        %1292 = vmatpush.bf16.msra.mxu0 %v1238
        %1293 = vmatpush.bf16.msra.mxu0 %v1237
        %1294 = vmatmul.bf16.gmra.mxu0 %v685
        %v1295 = vpop.f32.mrf.mxu0
        %v1296 = vadd.f32 0.0, %v1295
        %v1297 = vpop.f32.mrf.mxu0
        %v1298 = vadd.f32 0.0, %v1297
        %1299 = vmatmul.bf16.gmra.mxu0 %v1242
        %v1300 = vpop.f32.mrf.mxu0
        %v1301 = vadd.f32 0.0, %v1300
        %v1302 = vpop.f32.mrf.mxu0
        %v1303 = vadd.f32 0.0, %v1302
        %1304 = vmatmul.bf16.gmra.mxu0 %v1245
        %v1305 = vpop.f32.mrf.mxu0
        %v1306 = vadd.f32 0.0, %v1305
        %v1307 = vpop.f32.mrf.mxu0
        %v1308 = vadd.f32 0.0, %v1307
        %1309 = vmatmul.bf16.gmra.mxu0 %v1248
        %v1310 = vpop.f32.mrf.mxu0
        %v1311 = vadd.f32 0.0, %v1310
        %v1312 = vpop.f32.mrf.mxu0
        %v1313 = vadd.f32 0.0, %v1312
        %1314 = vmatmul.bf16.gmra.mxu0 %v1251
        %v1315 = vpop.f32.mrf.mxu0
        %v1316 = vadd.f32 0.0, %v1315
        %v1317 = vpop.f32.mrf.mxu0
        %v1318 = vadd.f32 0.0, %v1317
        %1319 = vmatmul.bf16.gmra.mxu0 %v1254
        %v1320 = vpop.f32.mrf.mxu0
        %v1321 = vadd.f32 0.0, %v1320
        %v1322 = vpop.f32.mrf.mxu0
        %v1323 = vadd.f32 0.0, %v1322
        %1324 = vmatmul.bf16.gmra.mxu0 %v1257
        %v1325 = vpop.f32.mrf.mxu0
        %v1326 = vadd.f32 0.0, %v1325
        %v1327 = vpop.f32.mrf.mxu0
        %v1328 = vadd.f32 0.0, %v1327
        %1329 = vmatmul.bf16.gmra.mxu0 %v1260
        %v1330 = vpop.f32.mrf.mxu0
        %v1331 = vadd.f32 0.0, %v1330
        %v1332 = vpop.f32.mrf.mxu0
        %v1333 = vadd.f32 0.0, %v1332
        %1334 = vmatmul.bf16.gmra.mxu0 %v1263
        %v1335 = vpop.f32.mrf.mxu0
        %v1336 = vadd.f32 0.0, %v1335
        %v1337 = vpop.f32.mrf.mxu0
        %v1338 = vadd.f32 0.0, %v1337
        %1339 = vmatmul.bf16.gmra.mxu0 %v1266
        %v1340 = vpop.f32.mrf.mxu0
        %v1341 = vadd.f32 0.0, %v1340
        %v1342 = vpop.f32.mrf.mxu0
        %v1343 = vadd.f32 0.0, %v1342
        %1344 = vmatmul.bf16.gmra.mxu0 %v1269
        %v1345 = vpop.f32.mrf.mxu0
        %v1346 = vadd.f32 0.0, %v1345
        %v1347 = vpop.f32.mrf.mxu0
        %v1348 = vadd.f32 0.0, %v1347
        %1349 = vmatmul.bf16.gmra.mxu0 %v1272
        %v1350 = vpop.f32.mrf.mxu0
        %v1351 = vadd.f32 0.0, %v1350
        %v1352 = vpop.f32.mrf.mxu0
        %v1353 = vadd.f32 0.0, %v1352
        %1354 = vmatmul.bf16.gmra.mxu0 %v1275
        %v1355 = vpop.f32.mrf.mxu0
        %v1356 = vadd.f32 0.0, %v1355
        %v1357 = vpop.f32.mrf.mxu0
        %v1358 = vadd.f32 0.0, %v1357
        %1359 = vmatmul.bf16.gmra.mxu0 %v1278
        %v1360 = vpop.f32.mrf.mxu0
        %v1361 = vadd.f32 0.0, %v1360
        %v1362 = vpop.f32.mrf.mxu0
        %v1363 = vadd.f32 0.0, %v1362
        %1364 = vmatmul.bf16.gmra.mxu0 %v1281
        %v1365 = vpop.f32.mrf.mxu0
        %v1366 = vadd.f32 0.0, %v1365
        %v1367 = vpop.f32.mrf.mxu0
        %v1368 = vadd.f32 0.0, %v1367
        %1369 = vmatmul.bf16.gmra.mxu0 %v1284
        %v1370 = vpop.f32.mrf.mxu0
        %v1371 = vadd.f32 0.0, %v1370
        %v1372 = vpop.f32.mrf.mxu0
        %v1373 = vadd.f32 0.0, %v1372
        %1374 = vdwg.mxu0
        %v1375 = vld [vmem:[#allocation2] sm:$0xff]
        %v1376 = vld [vmem:[#allocation2 + $0x8] sm:$0xff]
        %v1377 = vld [vmem:[#allocation2 + $0x10] sm:$0xff]
        %v1378 = vld [vmem:[#allocation2 + $0x18] sm:$0xff]
        %v1379 = vld [vmem:[#allocation2 + $0x20] sm:$0xff]
        %v1380 = vld [vmem:[#allocation2 + $0x28] sm:$0xff]
        %v1381 = vld [vmem:[#allocation2 + $0x30] sm:$0xff]
        %v1382 = vld [vmem:[#allocation2 + $0x38] sm:$0xff]
        %v1383 = vld [vmem:[#allocation2 + $0x40] sm:$0xff]
        %v1384 = vld [vmem:[#allocation2 + $0x48] sm:$0xff]
        %v1385 = vld [vmem:[#allocation2 + $0x50] sm:$0xff]
        %v1386 = vld [vmem:[#allocation2 + $0x58] sm:$0xff]
        %v1387 = vld [vmem:[#allocation2 + $0x60] sm:$0xff]
        %v1388 = vld [vmem:[#allocation2 + $0x68] sm:$0xff]
        %v1389 = vld [vmem:[#allocation2 + $0x70] sm:$0xff]
        %v1390 = vld [vmem:[#allocation2 + $0x78] sm:$0xff]
        %v1391 = vld [vmem:[#allocation2 + $0x80] sm:$0xff]
        %v1392 = vld [vmem:[#allocation2 + $0x88] sm:$0xff]
        %v1393 = vld [vmem:[#allocation2 + $0x90] sm:$0xff]
        %v1394 = vld [vmem:[#allocation2 + $0x98] sm:$0xff]
        %v1395 = vld [vmem:[#allocation2 + $0xa0] sm:$0xff]
        %v1396 = vld [vmem:[#allocation2 + $0xa8] sm:$0xff]
        %v1397 = vld [vmem:[#allocation2 + $0xb0] sm:$0xff]
        %v1398 = vld [vmem:[#allocation2 + $0xb8] sm:$0xff]
        %v1399 = vld [vmem:[#allocation2 + $0xc0] sm:$0xff]
        %v1400 = vld [vmem:[#allocation2 + $0xc8] sm:$0xff]
        %v1401 = vld [vmem:[#allocation2 + $0xd0] sm:$0xff]
        %v1402 = vld [vmem:[#allocation2 + $0xd8] sm:$0xff]
        %v1403 = vld [vmem:[#allocation2 + $0xe0] sm:$0xff]
        %v1404 = vld [vmem:[#allocation2 + $0xe8] sm:$0xff]
        %v1405 = vld [vmem:[#allocation2 + $0xf0] sm:$0xff]
        %v1406 = vld [vmem:[#allocation2 + $0xf8] sm:$0xff]
        %v1407 = vadd.f32 %v1375, %v1296
        %v1408 = vadd.f32 %v1376, %v1298
        %v1409 = vadd.f32 %v1377, %v1301
        %v1410 = vadd.f32 %v1378, %v1303
        %v1411 = vadd.f32 %v1379, %v1306
        %v1412 = vadd.f32 %v1380, %v1308
        %v1413 = vadd.f32 %v1381, %v1311
        %v1414 = vadd.f32 %v1382, %v1313
        %v1415 = vadd.f32 %v1383, %v1316
        %v1416 = vadd.f32 %v1384, %v1318
        %v1417 = vadd.f32 %v1385, %v1321
        %v1418 = vadd.f32 %v1386, %v1323
        %v1419 = vadd.f32 %v1387, %v1326
        %v1420 = vadd.f32 %v1388, %v1328
        %v1421 = vadd.f32 %v1389, %v1331
        %v1422 = vadd.f32 %v1390, %v1333
        %v1423 = vadd.f32 %v1391, %v1336
        %v1424 = vadd.f32 %v1392, %v1338
        %v1425 = vadd.f32 %v1393, %v1341
        %v1426 = vadd.f32 %v1394, %v1343
        %v1427 = vadd.f32 %v1395, %v1346
        %v1428 = vadd.f32 %v1396, %v1348
        %v1429 = vadd.f32 %v1397, %v1351
        %v1430 = vadd.f32 %v1398, %v1353
        %v1431 = vadd.f32 %v1399, %v1356
        %v1432 = vadd.f32 %v1400, %v1358
        %v1433 = vadd.f32 %v1401, %v1361
        %v1434 = vadd.f32 %v1402, %v1363
        %v1435 = vadd.f32 %v1403, %v1366
        %v1436 = vadd.f32 %v1404, %v1368
        %v1437 = vadd.f32 %v1405, %v1371
        %v1438 = vadd.f32 %v1406, %v1373
        %1439 = vst.msk [vmem:[#allocation2] sm:$0xff] %vm683, %v1407
        %1440 = vst.msk [vmem:[#allocation2 + $0x8] sm:$0xff] %vm683, %v1408
        %1441 = vst.msk [vmem:[#allocation2 + $0x10] sm:$0xff] %vm683, %v1409
        %1442 = vst.msk [vmem:[#allocation2 + $0x18] sm:$0xff] %vm683, %v1410
        %1443 = vst.msk [vmem:[#allocation2 + $0x20] sm:$0xff] %vm683, %v1411
        %1444 = vst.msk [vmem:[#allocation2 + $0x28] sm:$0xff] %vm683, %v1412
        %1445 = vst.msk [vmem:[#allocation2 + $0x30] sm:$0xff] %vm683, %v1413
        %1446 = vst.msk [vmem:[#allocation2 + $0x38] sm:$0xff] %vm683, %v1414
        %1447 = vst.msk [vmem:[#allocation2 + $0x40] sm:$0xff] %vm683, %v1415
        %1448 = vst.msk [vmem:[#allocation2 + $0x48] sm:$0xff] %vm683, %v1416
        %1449 = vst.msk [vmem:[#allocation2 + $0x50] sm:$0xff] %vm683, %v1417
        %1450 = vst.msk [vmem:[#allocation2 + $0x58] sm:$0xff] %vm683, %v1418
        %1451 = vst.msk [vmem:[#allocation2 + $0x60] sm:$0xff] %vm683, %v1419
        %1452 = vst.msk [vmem:[#allocation2 + $0x68] sm:$0xff] %vm683, %v1420
        %1453 = vst.msk [vmem:[#allocation2 + $0x70] sm:$0xff] %vm683, %v1421
        %1454 = vst.msk [vmem:[#allocation2 + $0x78] sm:$0xff] %vm683, %v1422
        %1455 = vst.msk [vmem:[#allocation2 + $0x80] sm:$0xff] %vm683, %v1423
        %1456 = vst.msk [vmem:[#allocation2 + $0x88] sm:$0xff] %vm683, %v1424
        %1457 = vst.msk [vmem:[#allocation2 + $0x90] sm:$0xff] %vm683, %v1425
        %1458 = vst.msk [vmem:[#allocation2 + $0x98] sm:$0xff] %vm683, %v1426
        %1459 = vst.msk [vmem:[#allocation2 + $0xa0] sm:$0xff] %vm683, %v1427
        %1460 = vst.msk [vmem:[#allocation2 + $0xa8] sm:$0xff] %vm683, %v1428
        %1461 = vst.msk [vmem:[#allocation2 + $0xb0] sm:$0xff] %vm683, %v1429
        %1462 = vst.msk [vmem:[#allocation2 + $0xb8] sm:$0xff] %vm683, %v1430
        %1463 = vst.msk [vmem:[#allocation2 + $0xc0] sm:$0xff] %vm683, %v1431
        %1464 = vst.msk [vmem:[#allocation2 + $0xc8] sm:$0xff] %vm683, %v1432
        %1465 = vst.msk [vmem:[#allocation2 + $0xd0] sm:$0xff] %vm683, %v1433
        %1466 = vst.msk [vmem:[#allocation2 + $0xd8] sm:$0xff] %vm683, %v1434
        %1467 = vst.msk [vmem:[#allocation2 + $0xe0] sm:$0xff] %vm683, %v1435
        %1468 = vst.msk [vmem:[#allocation2 + $0xe8] sm:$0xff] %vm683, %v1436
        %1469 = vst.msk [vmem:[#allocation2 + $0xf0] sm:$0xff] %vm683, %v1437
        %1470 = vst.msk [vmem:[#allocation2 + $0xf8] sm:$0xff] %vm683, %v1438
        %v1471 = vrot.slane %v552, 7
        %v1472 = vsel %vm588, %v1471, %v587
        %v1473 = vsel %vm588, %v586, %v1471
        %v1474 = vsel %vm619, %v1473, 0.0
        %v1475 = vsel %vm620, %v1472, 0.0
        %v1476 = vpack.c.bf16 %v1475, %v1474
        %s1477 = scalar_lea.vmem [#allocation6], 48
        %v1478 = vld [vmem:[%s1477] sm:$0xf]
        %v1479 = vld [vmem:[%s1477 + $0x4] sm:$0xf]
        %v1480 = vld [vmem:[%s1477 + $0x8] sm:$0xf]
        %v1481 = vld [vmem:[%s1477 + $0xc] sm:$0xf]
        %v1486 = vunpack.c.l.b16 %v1478
        %v1487 = vunpack.c.l.b16 %v1479
        %v1488 = vunpack.c.l.b16 %v1480
        %v1489 = vunpack.c.l.b16 %v1481
        %v1490 = vpack.c.b16 %v1487, %v1486
        %v1491 = vpack.c.b16 %v1489, %v1488
        %v1495 = vsel %vm683, %v1476, 0
        %1497 = vmatpush.bf16.msra.mxu0 0
        %1498 = vmatpush.bf16.msra.mxu0 0
        %1499 = vmatpush.bf16.msra.mxu0 0
        %1500 = vmatpush.bf16.msra.mxu0 0
        %1501 = vmatpush.bf16.msra.mxu0 0
        %1502 = vmatpush.bf16.msra.mxu0 0
        %1503 = vmatpush.bf16.msra.mxu0 %v1491
        %1504 = vmatpush.bf16.msra.mxu0 %v1490
        %1505 = vmatmul.bf16.gmra.mxu0 %v688
        %v1506 = vpop.f32.mrf.mxu0
        %v1507 = vadd.f32 0.0, %v1506
        %v1508 = vpop.f32.mrf.mxu0
        %v1509 = vadd.f32 0.0, %v1508
        %1510 = vmatmul.bf16.gmra.mxu0 %v691
        %v1511 = vpop.f32.mrf.mxu0
        %v1512 = vadd.f32 0.0, %v1511
        %v1513 = vpop.f32.mrf.mxu0
        %v1514 = vadd.f32 0.0, %v1513
        %1515 = vmatmul.bf16.gmra.mxu0 %v694
        %v1516 = vpop.f32.mrf.mxu0
        %v1517 = vadd.f32 0.0, %v1516
        %v1518 = vpop.f32.mrf.mxu0
        %v1519 = vadd.f32 0.0, %v1518
        %1520 = vmatmul.bf16.gmra.mxu0 %v697
        %v1521 = vpop.f32.mrf.mxu0
        %v1522 = vadd.f32 0.0, %v1521
        %v1523 = vpop.f32.mrf.mxu0
        %v1524 = vadd.f32 0.0, %v1523
        %1525 = vmatmul.bf16.gmra.mxu0 %v700
        %v1526 = vpop.f32.mrf.mxu0
        %v1527 = vadd.f32 0.0, %v1526
        %v1528 = vpop.f32.mrf.mxu0
        %v1529 = vadd.f32 0.0, %v1528
        %1530 = vmatmul.bf16.gmra.mxu0 %v703
        %v1531 = vpop.f32.mrf.mxu0
        %v1532 = vadd.f32 0.0, %v1531
        %v1533 = vpop.f32.mrf.mxu0
        %v1534 = vadd.f32 0.0, %v1533
        %1535 = vmatmul.bf16.gmra.mxu0 %v706
        %v1536 = vpop.f32.mrf.mxu0
        %v1537 = vadd.f32 0.0, %v1536
        %v1538 = vpop.f32.mrf.mxu0
        %v1539 = vadd.f32 0.0, %v1538
        %1540 = vmatmul.bf16.gmra.mxu0 %v709
        %v1541 = vpop.f32.mrf.mxu0
        %v1542 = vadd.f32 0.0, %v1541
        %v1543 = vpop.f32.mrf.mxu0
        %v1544 = vadd.f32 0.0, %v1543
        %1545 = vmatmul.bf16.gmra.mxu0 %v712
        %v1546 = vpop.f32.mrf.mxu0
        %v1547 = vadd.f32 0.0, %v1546
        %v1548 = vpop.f32.mrf.mxu0
        %v1549 = vadd.f32 0.0, %v1548
        %1550 = vmatmul.bf16.gmra.mxu0 %v715
        %v1551 = vpop.f32.mrf.mxu0
        %v1552 = vadd.f32 0.0, %v1551
        %v1553 = vpop.f32.mrf.mxu0
        %v1554 = vadd.f32 0.0, %v1553
        %1555 = vmatmul.bf16.gmra.mxu0 %v718
        %v1556 = vpop.f32.mrf.mxu0
        %v1557 = vadd.f32 0.0, %v1556
        %v1558 = vpop.f32.mrf.mxu0
        %v1559 = vadd.f32 0.0, %v1558
        %1560 = vmatmul.bf16.gmra.mxu0 %v721
        %v1561 = vpop.f32.mrf.mxu0
        %v1562 = vadd.f32 0.0, %v1561
        %v1563 = vpop.f32.mrf.mxu0
        %v1564 = vadd.f32 0.0, %v1563
        %1565 = vmatmul.bf16.gmra.mxu0 %v724
        %v1566 = vpop.f32.mrf.mxu0
        %v1567 = vadd.f32 0.0, %v1566
        %v1568 = vpop.f32.mrf.mxu0
        %v1569 = vadd.f32 0.0, %v1568
        %1570 = vmatmul.bf16.gmra.mxu0 %v727
        %v1571 = vpop.f32.mrf.mxu0
        %v1572 = vadd.f32 0.0, %v1571
        %v1573 = vpop.f32.mrf.mxu0
        %v1574 = vadd.f32 0.0, %v1573
        %1575 = vmatmul.bf16.gmra.mxu0 %v730
        %v1576 = vpop.f32.mrf.mxu0
        %v1577 = vadd.f32 0.0, %v1576
        %v1578 = vpop.f32.mrf.mxu0
        %v1579 = vadd.f32 0.0, %v1578
        %1580 = vmatmul.bf16.gmra.mxu0 %v1495
        %v1581 = vpop.f32.mrf.mxu0
        %v1582 = vadd.f32 0.0, %v1581
        %v1583 = vpop.f32.mrf.mxu0
        %v1584 = vadd.f32 0.0, %v1583
        %1585 = vdwg.mxu0
        %v1586 = vld [vmem:[#allocation2] sm:$0xff]
        %v1587 = vld [vmem:[#allocation2 + $0x8] sm:$0xff]
        %v1588 = vld [vmem:[#allocation2 + $0x10] sm:$0xff]
        %v1589 = vld [vmem:[#allocation2 + $0x18] sm:$0xff]
        %v1590 = vld [vmem:[#allocation2 + $0x20] sm:$0xff]
        %v1591 = vld [vmem:[#allocation2 + $0x28] sm:$0xff]
        %v1592 = vld [vmem:[#allocation2 + $0x30] sm:$0xff]
        %v1593 = vld [vmem:[#allocation2 + $0x38] sm:$0xff]
        %v1594 = vld [vmem:[#allocation2 + $0x40] sm:$0xff]
        %v1595 = vld [vmem:[#allocation2 + $0x48] sm:$0xff]
        %v1596 = vld [vmem:[#allocation2 + $0x50] sm:$0xff]
        %v1597 = vld [vmem:[#allocation2 + $0x58] sm:$0xff]
        %v1598 = vld [vmem:[#allocation2 + $0x60] sm:$0xff]
        %v1599 = vld [vmem:[#allocation2 + $0x68] sm:$0xff]
        %v1600 = vld [vmem:[#allocation2 + $0x70] sm:$0xff]
        %v1601 = vld [vmem:[#allocation2 + $0x78] sm:$0xff]
        %v1602 = vld [vmem:[#allocation2 + $0x80] sm:$0xff]
        %v1603 = vld [vmem:[#allocation2 + $0x88] sm:$0xff]
        %v1604 = vld [vmem:[#allocation2 + $0x90] sm:$0xff]
        %v1605 = vld [vmem:[#allocation2 + $0x98] sm:$0xff]
        %v1606 = vld [vmem:[#allocation2 + $0xa0] sm:$0xff]
        %v1607 = vld [vmem:[#allocation2 + $0xa8] sm:$0xff]
        %v1608 = vld [vmem:[#allocation2 + $0xb0] sm:$0xff]
        %v1609 = vld [vmem:[#allocation2 + $0xb8] sm:$0xff]
        %v1610 = vld [vmem:[#allocation2 + $0xc0] sm:$0xff]
        %v1611 = vld [vmem:[#allocation2 + $0xc8] sm:$0xff]
        %v1612 = vld [vmem:[#allocation2 + $0xd0] sm:$0xff]
        %v1613 = vld [vmem:[#allocation2 + $0xd8] sm:$0xff]
        %v1614 = vld [vmem:[#allocation2 + $0xe0] sm:$0xff]
        %v1615 = vld [vmem:[#allocation2 + $0xe8] sm:$0xff]
        %v1616 = vld [vmem:[#allocation2 + $0xf0] sm:$0xff]
        %v1617 = vld [vmem:[#allocation2 + $0xf8] sm:$0xff]
        %v1618 = vadd.f32 %v1586, %v1507
        %v1619 = vadd.f32 %v1587, %v1509
        %v1620 = vadd.f32 %v1588, %v1512
        %v1621 = vadd.f32 %v1589, %v1514
        %v1622 = vadd.f32 %v1590, %v1517
        %v1623 = vadd.f32 %v1591, %v1519
        %v1624 = vadd.f32 %v1592, %v1522
        %v1625 = vadd.f32 %v1593, %v1524
        %v1626 = vadd.f32 %v1594, %v1527
        %v1627 = vadd.f32 %v1595, %v1529
        %v1628 = vadd.f32 %v1596, %v1532
        %v1629 = vadd.f32 %v1597, %v1534
        %v1630 = vadd.f32 %v1598, %v1537
        %v1631 = vadd.f32 %v1599, %v1539
        %v1632 = vadd.f32 %v1600, %v1542
        %v1633 = vadd.f32 %v1601, %v1544
        %v1634 = vadd.f32 %v1602, %v1547
        %v1635 = vadd.f32 %v1603, %v1549
        %v1636 = vadd.f32 %v1604, %v1552
        %v1637 = vadd.f32 %v1605, %v1554
        %v1638 = vadd.f32 %v1606, %v1557
        %v1639 = vadd.f32 %v1607, %v1559
        %v1640 = vadd.f32 %v1608, %v1562
        %v1641 = vadd.f32 %v1609, %v1564
        %v1642 = vadd.f32 %v1610, %v1567
        %v1643 = vadd.f32 %v1611, %v1569
        %v1644 = vadd.f32 %v1612, %v1572
        %v1645 = vadd.f32 %v1613, %v1574
        %v1646 = vadd.f32 %v1614, %v1577
        %v1647 = vadd.f32 %v1615, %v1579
        %v1648 = vadd.f32 %v1616, %v1582
        %v1649 = vadd.f32 %v1617, %v1584
        %1650 = vst.msk [vmem:[#allocation2] sm:$0xff] %vm683, %v1618
        %1651 = vst.msk [vmem:[#allocation2 + $0x8] sm:$0xff] %vm683, %v1619
        %1652 = vst.msk [vmem:[#allocation2 + $0x10] sm:$0xff] %vm683, %v1620
        %1653 = vst.msk [vmem:[#allocation2 + $0x18] sm:$0xff] %vm683, %v1621
        %1654 = vst.msk [vmem:[#allocation2 + $0x20] sm:$0xff] %vm683, %v1622
        %1655 = vst.msk [vmem:[#allocation2 + $0x28] sm:$0xff] %vm683, %v1623
        %1656 = vst.msk [vmem:[#allocation2 + $0x30] sm:$0xff] %vm683, %v1624
        %1657 = vst.msk [vmem:[#allocation2 + $0x38] sm:$0xff] %vm683, %v1625
        %1658 = vst.msk [vmem:[#allocation2 + $0x40] sm:$0xff] %vm683, %v1626
        %1659 = vst.msk [vmem:[#allocation2 + $0x48] sm:$0xff] %vm683, %v1627
        %1660 = vst.msk [vmem:[#allocation2 + $0x50] sm:$0xff] %vm683, %v1628
        %1661 = vst.msk [vmem:[#allocation2 + $0x58] sm:$0xff] %vm683, %v1629
        %1662 = vst.msk [vmem:[#allocation2 + $0x60] sm:$0xff] %vm683, %v1630
        %1663 = vst.msk [vmem:[#allocation2 + $0x68] sm:$0xff] %vm683, %v1631
        %1664 = vst.msk [vmem:[#allocation2 + $0x70] sm:$0xff] %vm683, %v1632
        %1665 = vst.msk [vmem:[#allocation2 + $0x78] sm:$0xff] %vm683, %v1633
        %1666 = vst.msk [vmem:[#allocation2 + $0x80] sm:$0xff] %vm683, %v1634
        %1667 = vst.msk [vmem:[#allocation2 + $0x88] sm:$0xff] %vm683, %v1635
        %1668 = vst.msk [vmem:[#allocation2 + $0x90] sm:$0xff] %vm683, %v1636
        %1669 = vst.msk [vmem:[#allocation2 + $0x98] sm:$0xff] %vm683, %v1637
        %1670 = vst.msk [vmem:[#allocation2 + $0xa0] sm:$0xff] %vm683, %v1638
        %1671 = vst.msk [vmem:[#allocation2 + $0xa8] sm:$0xff] %vm683, %v1639
        %1672 = vst.msk [vmem:[#allocation2 + $0xb0] sm:$0xff] %vm683, %v1640
        %1673 = vst.msk [vmem:[#allocation2 + $0xb8] sm:$0xff] %vm683, %v1641
        %1674 = vst.msk [vmem:[#allocation2 + $0xc0] sm:$0xff] %vm683, %v1642
        %1675 = vst.msk [vmem:[#allocation2 + $0xc8] sm:$0xff] %vm683, %v1643
        %1676 = vst.msk [vmem:[#allocation2 + $0xd0] sm:$0xff] %vm683, %v1644
        %1677 = vst.msk [vmem:[#allocation2 + $0xd8] sm:$0xff] %vm683, %v1645
        %1678 = vst.msk [vmem:[#allocation2 + $0xe0] sm:$0xff] %vm683, %v1646
        %1679 = vst.msk [vmem:[#allocation2 + $0xe8] sm:$0xff] %vm683, %v1647
        %1680 = vst.msk [vmem:[#allocation2 + $0xf0] sm:$0xff] %vm683, %v1648
        %1681 = vst.msk [vmem:[#allocation2 + $0xf8] sm:$0xff] %vm683, %v1649
        %v1682 = vpack.c.bf16 %v553, %v552
        %s1683 = scalar_lea.vmem [#allocation6], 64
        %v1684 = vld [vmem:[%s1683] sm:$0xf]
        %v1685 = vld [vmem:[%s1683 + $0x4] sm:$0xf]
        %v1686 = vld [vmem:[%s1683 + $0x8] sm:$0xf]
        %v1687 = vld [vmem:[%s1683 + $0xc] sm:$0xf]
        %v1692 = vunpack.c.l.b16 %v1684
        %v1693 = vunpack.c.l.b16 %v1685
        %v1694 = vunpack.c.l.b16 %v1686
        %v1695 = vunpack.c.l.b16 %v1687
        %v1696 = vpack.c.b16 %v1693, %v1692
        %v1697 = vpack.c.b16 %v1695, %v1694
        %v1701 = vsel %vm683, %v1682, 0
        %1703 = vmatpush.bf16.msra.mxu0 0
        %1704 = vmatpush.bf16.msra.mxu0 0
        %1705 = vmatpush.bf16.msra.mxu0 0
        %1706 = vmatpush.bf16.msra.mxu0 0
        %1707 = vmatpush.bf16.msra.mxu0 0
        %1708 = vmatpush.bf16.msra.mxu0 0
        %1709 = vmatpush.bf16.msra.mxu0 %v1697
        %1710 = vmatpush.bf16.msra.mxu0 %v1696
        %1711 = vmatmul.bf16.gmra.mxu0 %v886
        %v1712 = vpop.f32.mrf.mxu0
        %v1713 = vadd.f32 0.0, %v1712
        %v1714 = vpop.f32.mrf.mxu0
        %v1715 = vadd.f32 0.0, %v1714
        %1716 = vmatmul.bf16.gmra.mxu0 %v889
        %v1717 = vpop.f32.mrf.mxu0
        %v1718 = vadd.f32 0.0, %v1717
        %v1719 = vpop.f32.mrf.mxu0
        %v1720 = vadd.f32 0.0, %v1719
        %1721 = vmatmul.bf16.gmra.mxu0 %v892
        %v1722 = vpop.f32.mrf.mxu0
        %v1723 = vadd.f32 0.0, %v1722
        %v1724 = vpop.f32.mrf.mxu0
        %v1725 = vadd.f32 0.0, %v1724
        %1726 = vmatmul.bf16.gmra.mxu0 %v895
        %v1727 = vpop.f32.mrf.mxu0
        %v1728 = vadd.f32 0.0, %v1727
        %v1729 = vpop.f32.mrf.mxu0
        %v1730 = vadd.f32 0.0, %v1729
        %1731 = vmatmul.bf16.gmra.mxu0 %v898
        %v1732 = vpop.f32.mrf.mxu0
        %v1733 = vadd.f32 0.0, %v1732
        %v1734 = vpop.f32.mrf.mxu0
        %v1735 = vadd.f32 0.0, %v1734
        %1736 = vmatmul.bf16.gmra.mxu0 %v901
        %v1737 = vpop.f32.mrf.mxu0
        %v1738 = vadd.f32 0.0, %v1737
        %v1739 = vpop.f32.mrf.mxu0
        %v1740 = vadd.f32 0.0, %v1739
        %1741 = vmatmul.bf16.gmra.mxu0 %v904
        %v1742 = vpop.f32.mrf.mxu0
        %v1743 = vadd.f32 0.0, %v1742
        %v1744 = vpop.f32.mrf.mxu0
        %v1745 = vadd.f32 0.0, %v1744
        %1746 = vmatmul.bf16.gmra.mxu0 %v907
        %v1747 = vpop.f32.mrf.mxu0
        %v1748 = vadd.f32 0.0, %v1747
        %v1749 = vpop.f32.mrf.mxu0
        %v1750 = vadd.f32 0.0, %v1749
        %1751 = vmatmul.bf16.gmra.mxu0 %v910
        %v1752 = vpop.f32.mrf.mxu0
        %v1753 = vadd.f32 0.0, %v1752
        %v1754 = vpop.f32.mrf.mxu0
        %v1755 = vadd.f32 0.0, %v1754
        %1756 = vmatmul.bf16.gmra.mxu0 %v913
        %v1757 = vpop.f32.mrf.mxu0
        %v1758 = vadd.f32 0.0, %v1757
        %v1759 = vpop.f32.mrf.mxu0
        %v1760 = vadd.f32 0.0, %v1759
        %1761 = vmatmul.bf16.gmra.mxu0 %v916
        %v1762 = vpop.f32.mrf.mxu0
        %v1763 = vadd.f32 0.0, %v1762
        %v1764 = vpop.f32.mrf.mxu0
        %v1765 = vadd.f32 0.0, %v1764
        %1766 = vmatmul.bf16.gmra.mxu0 %v919
        %v1767 = vpop.f32.mrf.mxu0
        %v1768 = vadd.f32 0.0, %v1767
        %v1769 = vpop.f32.mrf.mxu0
        %v1770 = vadd.f32 0.0, %v1769
        %1771 = vmatmul.bf16.gmra.mxu0 %v922
        %v1772 = vpop.f32.mrf.mxu0
        %v1773 = vadd.f32 0.0, %v1772
        %v1774 = vpop.f32.mrf.mxu0
        %v1775 = vadd.f32 0.0, %v1774
        %1776 = vmatmul.bf16.gmra.mxu0 %v925
        %v1777 = vpop.f32.mrf.mxu0
        %v1778 = vadd.f32 0.0, %v1777
        %v1779 = vpop.f32.mrf.mxu0
        %v1780 = vadd.f32 0.0, %v1779
        %1781 = vmatmul.bf16.gmra.mxu0 %v928
        %v1782 = vpop.f32.mrf.mxu0
        %v1783 = vadd.f32 0.0, %v1782
        %v1784 = vpop.f32.mrf.mxu0
        %v1785 = vadd.f32 0.0, %v1784
        %1786 = vmatmul.bf16.gmra.mxu0 %v1701
        %v1787 = vpop.f32.mrf.mxu0
        %v1788 = vadd.f32 0.0, %v1787
        %v1789 = vpop.f32.mrf.mxu0
        %v1790 = vadd.f32 0.0, %v1789
        %1791 = vdwg.mxu0
        %v1792 = vld [vmem:[#allocation2] sm:$0xff]
        %v1793 = vld [vmem:[#allocation2 + $0x8] sm:$0xff]
        %v1794 = vld [vmem:[#allocation2 + $0x10] sm:$0xff]
        %v1795 = vld [vmem:[#allocation2 + $0x18] sm:$0xff]
        %v1796 = vld [vmem:[#allocation2 + $0x20] sm:$0xff]
        %v1797 = vld [vmem:[#allocation2 + $0x28] sm:$0xff]
        %v1798 = vld [vmem:[#allocation2 + $0x30] sm:$0xff]
        %v1799 = vld [vmem:[#allocation2 + $0x38] sm:$0xff]
        %v1800 = vld [vmem:[#allocation2 + $0x40] sm:$0xff]
        %v1801 = vld [vmem:[#allocation2 + $0x48] sm:$0xff]
        %v1802 = vld [vmem:[#allocation2 + $0x50] sm:$0xff]
        %v1803 = vld [vmem:[#allocation2 + $0x58] sm:$0xff]
        %v1804 = vld [vmem:[#allocation2 + $0x60] sm:$0xff]
        %v1805 = vld [vmem:[#allocation2 + $0x68] sm:$0xff]
        %v1806 = vld [vmem:[#allocation2 + $0x70] sm:$0xff]
        %v1807 = vld [vmem:[#allocation2 + $0x78] sm:$0xff]
        %v1808 = vld [vmem:[#allocation2 + $0x80] sm:$0xff]
        %v1809 = vld [vmem:[#allocation2 + $0x88] sm:$0xff]
        %v1810 = vld [vmem:[#allocation2 + $0x90] sm:$0xff]
        %v1811 = vld [vmem:[#allocation2 + $0x98] sm:$0xff]
        %v1812 = vld [vmem:[#allocation2 + $0xa0] sm:$0xff]
        %v1813 = vld [vmem:[#allocation2 + $0xa8] sm:$0xff]
        %v1814 = vld [vmem:[#allocation2 + $0xb0] sm:$0xff]
        %v1815 = vld [vmem:[#allocation2 + $0xb8] sm:$0xff]
        %v1816 = vld [vmem:[#allocation2 + $0xc0] sm:$0xff]
        %v1817 = vld [vmem:[#allocation2 + $0xc8] sm:$0xff]
        %v1818 = vld [vmem:[#allocation2 + $0xd0] sm:$0xff]
        %v1819 = vld [vmem:[#allocation2 + $0xd8] sm:$0xff]
        %v1820 = vld [vmem:[#allocation2 + $0xe0] sm:$0xff]
        %v1821 = vld [vmem:[#allocation2 + $0xe8] sm:$0xff]
        %v1822 = vld [vmem:[#allocation2 + $0xf0] sm:$0xff]
        %v1823 = vld [vmem:[#allocation2 + $0xf8] sm:$0xff]
        %v1824 = vadd.f32 %v1792, %v1713
        %v1825 = vadd.f32 %v1793, %v1715
        %v1826 = vadd.f32 %v1794, %v1718
        %v1827 = vadd.f32 %v1795, %v1720
        %v1828 = vadd.f32 %v1796, %v1723
        %v1829 = vadd.f32 %v1797, %v1725
        %v1830 = vadd.f32 %v1798, %v1728
        %v1831 = vadd.f32 %v1799, %v1730
        %v1832 = vadd.f32 %v1800, %v1733
        %v1833 = vadd.f32 %v1801, %v1735
        %v1834 = vadd.f32 %v1802, %v1738
        %v1835 = vadd.f32 %v1803, %v1740
        %v1836 = vadd.f32 %v1804, %v1743
        %v1837 = vadd.f32 %v1805, %v1745
        %v1838 = vadd.f32 %v1806, %v1748
        %v1839 = vadd.f32 %v1807, %v1750
        %v1840 = vadd.f32 %v1808, %v1753
        %v1841 = vadd.f32 %v1809, %v1755
        %v1842 = vadd.f32 %v1810, %v1758
        %v1843 = vadd.f32 %v1811, %v1760
        %v1844 = vadd.f32 %v1812, %v1763
        %v1845 = vadd.f32 %v1813, %v1765
        %v1846 = vadd.f32 %v1814, %v1768
        %v1847 = vadd.f32 %v1815, %v1770
        %v1848 = vadd.f32 %v1816, %v1773
        %v1849 = vadd.f32 %v1817, %v1775
        %v1850 = vadd.f32 %v1818, %v1778
        %v1851 = vadd.f32 %v1819, %v1780
        %v1852 = vadd.f32 %v1820, %v1783
        %v1853 = vadd.f32 %v1821, %v1785
        %v1854 = vadd.f32 %v1822, %v1788
        %v1855 = vadd.f32 %v1823, %v1790
        %1856 = vst.msk [vmem:[#allocation2] sm:$0xff] %vm683, %v1824
        %1857 = vst.msk [vmem:[#allocation2 + $0x8] sm:$0xff] %vm683, %v1825
        %1858 = vst.msk [vmem:[#allocation2 + $0x10] sm:$0xff] %vm683, %v1826
        %1859 = vst.msk [vmem:[#allocation2 + $0x18] sm:$0xff] %vm683, %v1827
        %1860 = vst.msk [vmem:[#allocation2 + $0x20] sm:$0xff] %vm683, %v1828
        %1861 = vst.msk [vmem:[#allocation2 + $0x28] sm:$0xff] %vm683, %v1829
        %1862 = vst.msk [vmem:[#allocation2 + $0x30] sm:$0xff] %vm683, %v1830
        %1863 = vst.msk [vmem:[#allocation2 + $0x38] sm:$0xff] %vm683, %v1831
        %1864 = vst.msk [vmem:[#allocation2 + $0x40] sm:$0xff] %vm683, %v1832
        %1865 = vst.msk [vmem:[#allocation2 + $0x48] sm:$0xff] %vm683, %v1833
        %1866 = vst.msk [vmem:[#allocation2 + $0x50] sm:$0xff] %vm683, %v1834
        %1867 = vst.msk [vmem:[#allocation2 + $0x58] sm:$0xff] %vm683, %v1835
        %1868 = vst.msk [vmem:[#allocation2 + $0x60] sm:$0xff] %vm683, %v1836
        %1869 = vst.msk [vmem:[#allocation2 + $0x68] sm:$0xff] %vm683, %v1837
        %1870 = vst.msk [vmem:[#allocation2 + $0x70] sm:$0xff] %vm683, %v1838
        %1871 = vst.msk [vmem:[#allocation2 + $0x78] sm:$0xff] %vm683, %v1839
        %1872 = vst.msk [vmem:[#allocation2 + $0x80] sm:$0xff] %vm683, %v1840
        %1873 = vst.msk [vmem:[#allocation2 + $0x88] sm:$0xff] %vm683, %v1841
        %1874 = vst.msk [vmem:[#allocation2 + $0x90] sm:$0xff] %vm683, %v1842
        %1875 = vst.msk [vmem:[#allocation2 + $0x98] sm:$0xff] %vm683, %v1843
        %1876 = vst.msk [vmem:[#allocation2 + $0xa0] sm:$0xff] %vm683, %v1844
        %1877 = vst.msk [vmem:[#allocation2 + $0xa8] sm:$0xff] %vm683, %v1845
        %1878 = vst.msk [vmem:[#allocation2 + $0xb0] sm:$0xff] %vm683, %v1846
        %1879 = vst.msk [vmem:[#allocation2 + $0xb8] sm:$0xff] %vm683, %v1847
        %1880 = vst.msk [vmem:[#allocation2 + $0xc0] sm:$0xff] %vm683, %v1848
        %1881 = vst.msk [vmem:[#allocation2 + $0xc8] sm:$0xff] %vm683, %v1849
        %1882 = vst.msk [vmem:[#allocation2 + $0xd0] sm:$0xff] %vm683, %v1850
        %1883 = vst.msk [vmem:[#allocation2 + $0xd8] sm:$0xff] %vm683, %v1851
        %1884 = vst.msk [vmem:[#allocation2 + $0xe0] sm:$0xff] %vm683, %v1852
        %1885 = vst.msk [vmem:[#allocation2 + $0xe8] sm:$0xff] %vm683, %v1853
        %1886 = vst.msk [vmem:[#allocation2 + $0xf0] sm:$0xff] %vm683, %v1854
        %1887 = vst.msk [vmem:[#allocation2 + $0xf8] sm:$0xff] %vm683, %v1855
        %v1888 = vrot.slane %v553, 1
        %v1889 = vsel %vm1146, %v1145, %v1888
        %v1890 = vsel %vm1146, %v1888, %v1115
        %v1891 = vsel %vm1177, %v1889, 0.0
        %v1892 = vsel %vm1178, %v1890, 0.0
        %v1893 = vpack.c.bf16 %v1892, %v1891
        %s1894 = scalar_lea.vmem [#allocation6], 80
        %v1895 = vld [vmem:[%s1894] sm:$0xf]
        %v1896 = vld [vmem:[%s1894 + $0x4] sm:$0xf]
        %v1897 = vld [vmem:[%s1894 + $0x8] sm:$0xf]
        %v1898 = vld [vmem:[%s1894 + $0xc] sm:$0xf]
        %v1903 = vunpack.c.l.b16 %v1895
        %v1904 = vunpack.c.l.b16 %v1896
        %v1905 = vunpack.c.l.b16 %v1897
        %v1906 = vunpack.c.l.b16 %v1898
        %v1907 = vpack.c.b16 %v1904, %v1903
        %v1908 = vpack.c.b16 %v1906, %v1905
        %v1912 = vsel %vm683, %v1893, 0
        %1914 = vmatpush.bf16.msra.mxu0 0
        %1915 = vmatpush.bf16.msra.mxu0 0
        %1916 = vmatpush.bf16.msra.mxu0 0
        %1917 = vmatpush.bf16.msra.mxu0 0
        %1918 = vmatpush.bf16.msra.mxu0 0
        %1919 = vmatpush.bf16.msra.mxu0 0
        %1920 = vmatpush.bf16.msra.mxu0 %v1908
        %1921 = vmatpush.bf16.msra.mxu0 %v1907
        %1922 = vmatmul.bf16.gmra.mxu0 %v1242
        %v1923 = vpop.f32.mrf.mxu0
        %v1924 = vadd.f32 0.0, %v1923
        %v1925 = vpop.f32.mrf.mxu0
        %v1926 = vadd.f32 0.0, %v1925
        %1927 = vmatmul.bf16.gmra.mxu0 %v1245
        %v1928 = vpop.f32.mrf.mxu0
        %v1929 = vadd.f32 0.0, %v1928
        %v1930 = vpop.f32.mrf.mxu0
        %v1931 = vadd.f32 0.0, %v1930
        %1932 = vmatmul.bf16.gmra.mxu0 %v1248
        %v1933 = vpop.f32.mrf.mxu0
        %v1934 = vadd.f32 0.0, %v1933
        %v1935 = vpop.f32.mrf.mxu0
        %v1936 = vadd.f32 0.0, %v1935
        %1937 = vmatmul.bf16.gmra.mxu0 %v1251
        %v1938 = vpop.f32.mrf.mxu0
        %v1939 = vadd.f32 0.0, %v1938
        %v1940 = vpop.f32.mrf.mxu0
        %v1941 = vadd.f32 0.0, %v1940
        %1942 = vmatmul.bf16.gmra.mxu0 %v1254
        %v1943 = vpop.f32.mrf.mxu0
        %v1944 = vadd.f32 0.0, %v1943
        %v1945 = vpop.f32.mrf.mxu0
        %v1946 = vadd.f32 0.0, %v1945
        %1947 = vmatmul.bf16.gmra.mxu0 %v1257
        %v1948 = vpop.f32.mrf.mxu0
        %v1949 = vadd.f32 0.0, %v1948
        %v1950 = vpop.f32.mrf.mxu0
        %v1951 = vadd.f32 0.0, %v1950
        %1952 = vmatmul.bf16.gmra.mxu0 %v1260
        %v1953 = vpop.f32.mrf.mxu0
        %v1954 = vadd.f32 0.0, %v1953
        %v1955 = vpop.f32.mrf.mxu0
        %v1956 = vadd.f32 0.0, %v1955
        %1957 = vmatmul.bf16.gmra.mxu0 %v1263
        %v1958 = vpop.f32.mrf.mxu0
        %v1959 = vadd.f32 0.0, %v1958
        %v1960 = vpop.f32.mrf.mxu0
        %v1961 = vadd.f32 0.0, %v1960
        %1962 = vmatmul.bf16.gmra.mxu0 %v1266
        %v1963 = vpop.f32.mrf.mxu0
        %v1964 = vadd.f32 0.0, %v1963
        %v1965 = vpop.f32.mrf.mxu0
        %v1966 = vadd.f32 0.0, %v1965
        %1967 = vmatmul.bf16.gmra.mxu0 %v1269
        %v1968 = vpop.f32.mrf.mxu0
        %v1969 = vadd.f32 0.0, %v1968
        %v1970 = vpop.f32.mrf.mxu0
        %v1971 = vadd.f32 0.0, %v1970
        %1972 = vmatmul.bf16.gmra.mxu0 %v1272
        %v1973 = vpop.f32.mrf.mxu0
        %v1974 = vadd.f32 0.0, %v1973
        %v1975 = vpop.f32.mrf.mxu0
        %v1976 = vadd.f32 0.0, %v1975
        %1977 = vmatmul.bf16.gmra.mxu0 %v1275
        %v1978 = vpop.f32.mrf.mxu0
        %v1979 = vadd.f32 0.0, %v1978
        %v1980 = vpop.f32.mrf.mxu0
        %v1981 = vadd.f32 0.0, %v1980
        %1982 = vmatmul.bf16.gmra.mxu0 %v1278
        %v1983 = vpop.f32.mrf.mxu0
        %v1984 = vadd.f32 0.0, %v1983
        %v1985 = vpop.f32.mrf.mxu0
        %v1986 = vadd.f32 0.0, %v1985
        %1987 = vmatmul.bf16.gmra.mxu0 %v1281
        %v1988 = vpop.f32.mrf.mxu0
        %v1989 = vadd.f32 0.0, %v1988
        %v1990 = vpop.f32.mrf.mxu0
        %v1991 = vadd.f32 0.0, %v1990
        %1992 = vmatmul.bf16.gmra.mxu0 %v1284
        %v1993 = vpop.f32.mrf.mxu0
        %v1994 = vadd.f32 0.0, %v1993
        %v1995 = vpop.f32.mrf.mxu0
        %v1996 = vadd.f32 0.0, %v1995
        %1997 = vmatmul.bf16.gmra.mxu0 %v1912
        %v1998 = vpop.f32.mrf.mxu0
        %v1999 = vadd.f32 0.0, %v1998
        %v2000 = vpop.f32.mrf.mxu0
        %v2001 = vadd.f32 0.0, %v2000
        %2002 = vdwg.mxu0
        %v2003 = vld [vmem:[#allocation2] sm:$0xff]
        %v2004 = vld [vmem:[#allocation2 + $0x8] sm:$0xff]
        %v2005 = vld [vmem:[#allocation2 + $0x10] sm:$0xff]
        %v2006 = vld [vmem:[#allocation2 + $0x18] sm:$0xff]
        %v2007 = vld [vmem:[#allocation2 + $0x20] sm:$0xff]
        %v2008 = vld [vmem:[#allocation2 + $0x28] sm:$0xff]
        %v2009 = vld [vmem:[#allocation2 + $0x30] sm:$0xff]
        %v2010 = vld [vmem:[#allocation2 + $0x38] sm:$0xff]
        %v2011 = vld [vmem:[#allocation2 + $0x40] sm:$0xff]
        %v2012 = vld [vmem:[#allocation2 + $0x48] sm:$0xff]
        %v2013 = vld [vmem:[#allocation2 + $0x50] sm:$0xff]
        %v2014 = vld [vmem:[#allocation2 + $0x58] sm:$0xff]
        %v2015 = vld [vmem:[#allocation2 + $0x60] sm:$0xff]
        %v2016 = vld [vmem:[#allocation2 + $0x68] sm:$0xff]
        %v2017 = vld [vmem:[#allocation2 + $0x70] sm:$0xff]
        %v2018 = vld [vmem:[#allocation2 + $0x78] sm:$0xff]
        %v2019 = vld [vmem:[#allocation2 + $0x80] sm:$0xff]
        %v2020 = vld [vmem:[#allocation2 + $0x88] sm:$0xff]
        %v2021 = vld [vmem:[#allocation2 + $0x90] sm:$0xff]
        %v2022 = vld [vmem:[#allocation2 + $0x98] sm:$0xff]
        %v2023 = vld [vmem:[#allocation2 + $0xa0] sm:$0xff]
        %v2024 = vld [vmem:[#allocation2 + $0xa8] sm:$0xff]
        %v2025 = vld [vmem:[#allocation2 + $0xb0] sm:$0xff]
        %v2026 = vld [vmem:[#allocation2 + $0xb8] sm:$0xff]
        %v2027 = vld [vmem:[#allocation2 + $0xc0] sm:$0xff]
        %v2028 = vld [vmem:[#allocation2 + $0xc8] sm:$0xff]
        %v2029 = vld [vmem:[#allocation2 + $0xd0] sm:$0xff]
        %v2030 = vld [vmem:[#allocation2 + $0xd8] sm:$0xff]
        %v2031 = vld [vmem:[#allocation2 + $0xe0] sm:$0xff]
        %v2032 = vld [vmem:[#allocation2 + $0xe8] sm:$0xff]
        %v2033 = vld [vmem:[#allocation2 + $0xf0] sm:$0xff]
        %v2034 = vld [vmem:[#allocation2 + $0xf8] sm:$0xff]
        %v2035 = vadd.f32 %v2003, %v1924
        %v2036 = vadd.f32 %v2004, %v1926
        %v2037 = vadd.f32 %v2005, %v1929
        %v2038 = vadd.f32 %v2006, %v1931
        %v2039 = vadd.f32 %v2007, %v1934
        %v2040 = vadd.f32 %v2008, %v1936
        %v2041 = vadd.f32 %v2009, %v1939
        %v2042 = vadd.f32 %v2010, %v1941
        %v2043 = vadd.f32 %v2011, %v1944
        %v2044 = vadd.f32 %v2012, %v1946
        %v2045 = vadd.f32 %v2013, %v1949
        %v2046 = vadd.f32 %v2014, %v1951
        %v2047 = vadd.f32 %v2015, %v1954
        %v2048 = vadd.f32 %v2016, %v1956
        %v2049 = vadd.f32 %v2017, %v1959
        %v2050 = vadd.f32 %v2018, %v1961
        %v2051 = vadd.f32 %v2019, %v1964
        %v2052 = vadd.f32 %v2020, %v1966
        %v2053 = vadd.f32 %v2021, %v1969
        %v2054 = vadd.f32 %v2022, %v1971
        %v2055 = vadd.f32 %v2023, %v1974
        %v2056 = vadd.f32 %v2024, %v1976
        %v2057 = vadd.f32 %v2025, %v1979
        %v2058 = vadd.f32 %v2026, %v1981
        %v2059 = vadd.f32 %v2027, %v1984
        %v2060 = vadd.f32 %v2028, %v1986
        %v2061 = vadd.f32 %v2029, %v1989
        %v2062 = vadd.f32 %v2030, %v1991
        %v2063 = vadd.f32 %v2031, %v1994
        %v2064 = vadd.f32 %v2032, %v1996
        %v2065 = vadd.f32 %v2033, %v1999
        %v2066 = vadd.f32 %v2034, %v2001
        %2067 = vst.msk [vmem:[#allocation2] sm:$0xff] %vm683, %v2035
        %2068 = vst.msk [vmem:[#allocation2 + $0x8] sm:$0xff] %vm683, %v2036
        %2069 = vst.msk [vmem:[#allocation2 + $0x10] sm:$0xff] %vm683, %v2037
        %2070 = vst.msk [vmem:[#allocation2 + $0x18] sm:$0xff] %vm683, %v2038
        %2071 = vst.msk [vmem:[#allocation2 + $0x20] sm:$0xff] %vm683, %v2039
        %2072 = vst.msk [vmem:[#allocation2 + $0x28] sm:$0xff] %vm683, %v2040
        %2073 = vst.msk [vmem:[#allocation2 + $0x30] sm:$0xff] %vm683, %v2041
        %2074 = vst.msk [vmem:[#allocation2 + $0x38] sm:$0xff] %vm683, %v2042
        %2075 = vst.msk [vmem:[#allocation2 + $0x40] sm:$0xff] %vm683, %v2043
        %2076 = vst.msk [vmem:[#allocation2 + $0x48] sm:$0xff] %vm683, %v2044
        %2077 = vst.msk [vmem:[#allocation2 + $0x50] sm:$0xff] %vm683, %v2045
        %2078 = vst.msk [vmem:[#allocation2 + $0x58] sm:$0xff] %vm683, %v2046
        %2079 = vst.msk [vmem:[#allocation2 + $0x60] sm:$0xff] %vm683, %v2047
        %2080 = vst.msk [vmem:[#allocation2 + $0x68] sm:$0xff] %vm683, %v2048
        %2081 = vst.msk [vmem:[#allocation2 + $0x70] sm:$0xff] %vm683, %v2049
        %2082 = vst.msk [vmem:[#allocation2 + $0x78] sm:$0xff] %vm683, %v2050
        %2083 = vst.msk [vmem:[#allocation2 + $0x80] sm:$0xff] %vm683, %v2051
        %2084 = vst.msk [vmem:[#allocation2 + $0x88] sm:$0xff] %vm683, %v2052
        %2085 = vst.msk [vmem:[#allocation2 + $0x90] sm:$0xff] %vm683, %v2053
        %2086 = vst.msk [vmem:[#allocation2 + $0x98] sm:$0xff] %vm683, %v2054
        %2087 = vst.msk [vmem:[#allocation2 + $0xa0] sm:$0xff] %vm683, %v2055
        %2088 = vst.msk [vmem:[#allocation2 + $0xa8] sm:$0xff] %vm683, %v2056
        %2089 = vst.msk [vmem:[#allocation2 + $0xb0] sm:$0xff] %vm683, %v2057
        %2090 = vst.msk [vmem:[#allocation2 + $0xb8] sm:$0xff] %vm683, %v2058
        %2091 = vst.msk [vmem:[#allocation2 + $0xc0] sm:$0xff] %vm683, %v2059
        %2092 = vst.msk [vmem:[#allocation2 + $0xc8] sm:$0xff] %vm683, %v2060
        %2093 = vst.msk [vmem:[#allocation2 + $0xd0] sm:$0xff] %vm683, %v2061
        %2094 = vst.msk [vmem:[#allocation2 + $0xd8] sm:$0xff] %vm683, %v2062
        %2095 = vst.msk [vmem:[#allocation2 + $0xe0] sm:$0xff] %vm683, %v2063
        %2096 = vst.msk [vmem:[#allocation2 + $0xe8] sm:$0xff] %vm683, %v2064
        %2097 = vst.msk [vmem:[#allocation2 + $0xf0] sm:$0xff] %vm683, %v2065
        %2098 = vst.msk [vmem:[#allocation2 + $0xf8] sm:$0xff] %vm683, %v2066
        %s2099 = scalar_lea.vmem [#allocation6], 96
        %v2100 = vld [vmem:[%s2099] sm:$0xf]
        %v2101 = vld [vmem:[%s2099 + $0x4] sm:$0xf]
        %v2102 = vld [vmem:[%s2099 + $0x8] sm:$0xf]
        %v2103 = vld [vmem:[%s2099 + $0xc] sm:$0xf]
        %v2108 = vunpack.c.l.b16 %v2100
        %v2109 = vunpack.c.l.b16 %v2101
        %v2110 = vunpack.c.l.b16 %v2102
        %v2111 = vunpack.c.l.b16 %v2103
        %v2112 = vpack.c.b16 %v2109, %v2108
        %v2113 = vpack.c.b16 %v2111, %v2110
        %2116 = vmatpush.bf16.msra.mxu0 0
        %2117 = vmatpush.bf16.msra.mxu0 0
        %2118 = vmatpush.bf16.msra.mxu0 0
        %2119 = vmatpush.bf16.msra.mxu0 0
        %2120 = vmatpush.bf16.msra.mxu0 0
        %2121 = vmatpush.bf16.msra.mxu0 0
        %2122 = vmatpush.bf16.msra.mxu0 %v2113
        %2123 = vmatpush.bf16.msra.mxu0 %v2112
        %2124 = vmatmul.bf16.gmra.mxu0 %v691
        %v2125 = vpop.f32.mrf.mxu0
        %v2126 = vadd.f32 0.0, %v2125
        %v2127 = vpop.f32.mrf.mxu0
        %v2128 = vadd.f32 0.0, %v2127
        %2129 = vmatmul.bf16.gmra.mxu0 %v694
        %v2130 = vpop.f32.mrf.mxu0
        %v2131 = vadd.f32 0.0, %v2130
        %v2132 = vpop.f32.mrf.mxu0
        %v2133 = vadd.f32 0.0, %v2132
        %2134 = vmatmul.bf16.gmra.mxu0 %v697
        %v2135 = vpop.f32.mrf.mxu0
        %v2136 = vadd.f32 0.0, %v2135
        %v2137 = vpop.f32.mrf.mxu0
        %v2138 = vadd.f32 0.0, %v2137
        %2139 = vmatmul.bf16.gmra.mxu0 %v700
        %v2140 = vpop.f32.mrf.mxu0
        %v2141 = vadd.f32 0.0, %v2140
        %v2142 = vpop.f32.mrf.mxu0
        %v2143 = vadd.f32 0.0, %v2142
        %2144 = vmatmul.bf16.gmra.mxu0 %v703
        %v2145 = vpop.f32.mrf.mxu0
        %v2146 = vadd.f32 0.0, %v2145
        %v2147 = vpop.f32.mrf.mxu0
        %v2148 = vadd.f32 0.0, %v2147
        %2149 = vmatmul.bf16.gmra.mxu0 %v706
        %v2150 = vpop.f32.mrf.mxu0
        %v2151 = vadd.f32 0.0, %v2150
        %v2152 = vpop.f32.mrf.mxu0
        %v2153 = vadd.f32 0.0, %v2152
        %2154 = vmatmul.bf16.gmra.mxu0 %v709
        %v2155 = vpop.f32.mrf.mxu0
        %v2156 = vadd.f32 0.0, %v2155
        %v2157 = vpop.f32.mrf.mxu0
        %v2158 = vadd.f32 0.0, %v2157
        %2159 = vmatmul.bf16.gmra.mxu0 %v712
        %v2160 = vpop.f32.mrf.mxu0
        %v2161 = vadd.f32 0.0, %v2160
        %v2162 = vpop.f32.mrf.mxu0
        %v2163 = vadd.f32 0.0, %v2162
        %2164 = vmatmul.bf16.gmra.mxu0 %v715
        %v2165 = vpop.f32.mrf.mxu0
        %v2166 = vadd.f32 0.0, %v2165
        %v2167 = vpop.f32.mrf.mxu0
        %v2168 = vadd.f32 0.0, %v2167
        %2169 = vmatmul.bf16.gmra.mxu0 %v718
        %v2170 = vpop.f32.mrf.mxu0
        %v2171 = vadd.f32 0.0, %v2170
        %v2172 = vpop.f32.mrf.mxu0
        %v2173 = vadd.f32 0.0, %v2172
        %2174 = vmatmul.bf16.gmra.mxu0 %v721
        %v2175 = vpop.f32.mrf.mxu0
        %v2176 = vadd.f32 0.0, %v2175
        %v2177 = vpop.f32.mrf.mxu0
        %v2178 = vadd.f32 0.0, %v2177
        %2179 = vmatmul.bf16.gmra.mxu0 %v724
        %v2180 = vpop.f32.mrf.mxu0
        %v2181 = vadd.f32 0.0, %v2180
        %v2182 = vpop.f32.mrf.mxu0
        %v2183 = vadd.f32 0.0, %v2182
        %2184 = vmatmul.bf16.gmra.mxu0 %v727
        %v2185 = vpop.f32.mrf.mxu0
        %v2186 = vadd.f32 0.0, %v2185
        %v2187 = vpop.f32.mrf.mxu0
        %v2188 = vadd.f32 0.0, %v2187
        %2189 = vmatmul.bf16.gmra.mxu0 %v730
        %v2190 = vpop.f32.mrf.mxu0
        %v2191 = vadd.f32 0.0, %v2190
        %v2192 = vpop.f32.mrf.mxu0
        %v2193 = vadd.f32 0.0, %v2192
        %2194 = vmatmul.bf16.gmra.mxu0 %v1495
        %v2195 = vpop.f32.mrf.mxu0
        %v2196 = vadd.f32 0.0, %v2195
        %v2197 = vpop.f32.mrf.mxu0
        %v2198 = vadd.f32 0.0, %v2197
        %2199 = vmatmul.bf16.gmra.mxu0 %v685
        %v2200 = vpop.f32.mrf.mxu0
        %v2201 = vadd.f32 0.0, %v2200
        %v2202 = vpop.f32.mrf.mxu0
        %v2203 = vadd.f32 0.0, %v2202
        %2204 = vdwg.mxu0
        %v2205 = vld [vmem:[#allocation2] sm:$0xff]
        %v2206 = vld [vmem:[#allocation2 + $0x8] sm:$0xff]
        %v2207 = vld [vmem:[#allocation2 + $0x10] sm:$0xff]
        %v2208 = vld [vmem:[#allocation2 + $0x18] sm:$0xff]
        %v2209 = vld [vmem:[#allocation2 + $0x20] sm:$0xff]
        %v2210 = vld [vmem:[#allocation2 + $0x28] sm:$0xff]
        %v2211 = vld [vmem:[#allocation2 + $0x30] sm:$0xff]
        %v2212 = vld [vmem:[#allocation2 + $0x38] sm:$0xff]
        %v2213 = vld [vmem:[#allocation2 + $0x40] sm:$0xff]
        %v2214 = vld [vmem:[#allocation2 + $0x48] sm:$0xff]
        %v2215 = vld [vmem:[#allocation2 + $0x50] sm:$0xff]
        %v2216 = vld [vmem:[#allocation2 + $0x58] sm:$0xff]
        %v2217 = vld [vmem:[#allocation2 + $0x60] sm:$0xff]
        %v2218 = vld [vmem:[#allocation2 + $0x68] sm:$0xff]
        %v2219 = vld [vmem:[#allocation2 + $0x70] sm:$0xff]
        %v2220 = vld [vmem:[#allocation2 + $0x78] sm:$0xff]
        %v2221 = vld [vmem:[#allocation2 + $0x80] sm:$0xff]
        %v2222 = vld [vmem:[#allocation2 + $0x88] sm:$0xff]
        %v2223 = vld [vmem:[#allocation2 + $0x90] sm:$0xff]
        %v2224 = vld [vmem:[#allocation2 + $0x98] sm:$0xff]
        %v2225 = vld [vmem:[#allocation2 + $0xa0] sm:$0xff]
        %v2226 = vld [vmem:[#allocation2 + $0xa8] sm:$0xff]
        %v2227 = vld [vmem:[#allocation2 + $0xb0] sm:$0xff]
        %v2228 = vld [vmem:[#allocation2 + $0xb8] sm:$0xff]
        %v2229 = vld [vmem:[#allocation2 + $0xc0] sm:$0xff]
        %v2230 = vld [vmem:[#allocation2 + $0xc8] sm:$0xff]
        %v2231 = vld [vmem:[#allocation2 + $0xd0] sm:$0xff]
        %v2232 = vld [vmem:[#allocation2 + $0xd8] sm:$0xff]
        %v2233 = vld [vmem:[#allocation2 + $0xe0] sm:$0xff]
        %v2234 = vld [vmem:[#allocation2 + $0xe8] sm:$0xff]
        %v2235 = vld [vmem:[#allocation2 + $0xf0] sm:$0xff]
        %v2236 = vld [vmem:[#allocation2 + $0xf8] sm:$0xff]
        %v2237 = vadd.f32 %v2205, %v2126
        %v2238 = vadd.f32 %v2206, %v2128
        %v2239 = vadd.f32 %v2207, %v2131
        %v2240 = vadd.f32 %v2208, %v2133
        %v2241 = vadd.f32 %v2209, %v2136
        %v2242 = vadd.f32 %v2210, %v2138
        %v2243 = vadd.f32 %v2211, %v2141
        %v2244 = vadd.f32 %v2212, %v2143
        %v2245 = vadd.f32 %v2213, %v2146
        %v2246 = vadd.f32 %v2214, %v2148
        %v2247 = vadd.f32 %v2215, %v2151
        %v2248 = vadd.f32 %v2216, %v2153
        %v2249 = vadd.f32 %v2217, %v2156
        %v2250 = vadd.f32 %v2218, %v2158
        %v2251 = vadd.f32 %v2219, %v2161
        %v2252 = vadd.f32 %v2220, %v2163
        %v2253 = vadd.f32 %v2221, %v2166
        %v2254 = vadd.f32 %v2222, %v2168
        %v2255 = vadd.f32 %v2223, %v2171
        %v2256 = vadd.f32 %v2224, %v2173
        %v2257 = vadd.f32 %v2225, %v2176
        %v2258 = vadd.f32 %v2226, %v2178
        %v2259 = vadd.f32 %v2227, %v2181
        %v2260 = vadd.f32 %v2228, %v2183
        %v2261 = vadd.f32 %v2229, %v2186
        %v2262 = vadd.f32 %v2230, %v2188
        %v2263 = vadd.f32 %v2231, %v2191
        %v2264 = vadd.f32 %v2232, %v2193
        %v2265 = vadd.f32 %v2233, %v2196
        %v2266 = vadd.f32 %v2234, %v2198
        %v2267 = vadd.f32 %v2235, %v2201
        %v2268 = vadd.f32 %v2236, %v2203
        %2269 = vst.msk [vmem:[#allocation2] sm:$0xff] %vm683, %v2237
        %2270 = vst.msk [vmem:[#allocation2 + $0x8] sm:$0xff] %vm683, %v2238
        %2271 = vst.msk [vmem:[#allocation2 + $0x10] sm:$0xff] %vm683, %v2239
        %2272 = vst.msk [vmem:[#allocation2 + $0x18] sm:$0xff] %vm683, %v2240
        %2273 = vst.msk [vmem:[#allocation2 + $0x20] sm:$0xff] %vm683, %v2241
        %2274 = vst.msk [vmem:[#allocation2 + $0x28] sm:$0xff] %vm683, %v2242
        %2275 = vst.msk [vmem:[#allocation2 + $0x30] sm:$0xff] %vm683, %v2243
        %2276 = vst.msk [vmem:[#allocation2 + $0x38] sm:$0xff] %vm683, %v2244
        %2277 = vst.msk [vmem:[#allocation2 + $0x40] sm:$0xff] %vm683, %v2245
        %2278 = vst.msk [vmem:[#allocation2 + $0x48] sm:$0xff] %vm683, %v2246
        %2279 = vst.msk [vmem:[#allocation2 + $0x50] sm:$0xff] %vm683, %v2247
        %2280 = vst.msk [vmem:[#allocation2 + $0x58] sm:$0xff] %vm683, %v2248
        %2281 = vst.msk [vmem:[#allocation2 + $0x60] sm:$0xff] %vm683, %v2249
        %2282 = vst.msk [vmem:[#allocation2 + $0x68] sm:$0xff] %vm683, %v2250
        %2283 = vst.msk [vmem:[#allocation2 + $0x70] sm:$0xff] %vm683, %v2251
        %2284 = vst.msk [vmem:[#allocation2 + $0x78] sm:$0xff] %vm683, %v2252
        %2285 = vst.msk [vmem:[#allocation2 + $0x80] sm:$0xff] %vm683, %v2253
        %2286 = vst.msk [vmem:[#allocation2 + $0x88] sm:$0xff] %vm683, %v2254
        %2287 = vst.msk [vmem:[#allocation2 + $0x90] sm:$0xff] %vm683, %v2255
        %2288 = vst.msk [vmem:[#allocation2 + $0x98] sm:$0xff] %vm683, %v2256
        %2289 = vst.msk [vmem:[#allocation2 + $0xa0] sm:$0xff] %vm683, %v2257
        %2290 = vst.msk [vmem:[#allocation2 + $0xa8] sm:$0xff] %vm683, %v2258
        %2291 = vst.msk [vmem:[#allocation2 + $0xb0] sm:$0xff] %vm683, %v2259
        %2292 = vst.msk [vmem:[#allocation2 + $0xb8] sm:$0xff] %vm683, %v2260
        %2293 = vst.msk [vmem:[#allocation2 + $0xc0] sm:$0xff] %vm683, %v2261
        %2294 = vst.msk [vmem:[#allocation2 + $0xc8] sm:$0xff] %vm683, %v2262
        %2295 = vst.msk [vmem:[#allocation2 + $0xd0] sm:$0xff] %vm683, %v2263
        %2296 = vst.msk [vmem:[#allocation2 + $0xd8] sm:$0xff] %vm683, %v2264
        %2297 = vst.msk [vmem:[#allocation2 + $0xe0] sm:$0xff] %vm683, %v2265
        %2298 = vst.msk [vmem:[#allocation2 + $0xe8] sm:$0xff] %vm683, %v2266
        %2299 = vst.msk [vmem:[#allocation2 + $0xf0] sm:$0xff] %vm683, %v2267
        %2300 = vst.msk [vmem:[#allocation2 + $0xf8] sm:$0xff] %vm683, %v2268
        %s2301 = scalar_lea.vmem [#allocation6], 112
        %v2302 = vld [vmem:[%s2301] sm:$0xf]
        %v2303 = vld [vmem:[%s2301 + $0x4] sm:$0xf]
        %v2304 = vld [vmem:[%s2301 + $0x8] sm:$0xf]
        %v2305 = vld [vmem:[%s2301 + $0xc] sm:$0xf]
        %v2310 = vunpack.c.l.b16 %v2302
        %v2311 = vunpack.c.l.b16 %v2303
        %v2312 = vunpack.c.l.b16 %v2304
        %v2313 = vunpack.c.l.b16 %v2305
        %v2314 = vpack.c.b16 %v2311, %v2310
        %v2315 = vpack.c.b16 %v2313, %v2312
        %2318 = vmatpush.bf16.msra.mxu0 0
        %2319 = vmatpush.bf16.msra.mxu0 0
        %2320 = vmatpush.bf16.msra.mxu0 0
        %2321 = vmatpush.bf16.msra.mxu0 0
        %2322 = vmatpush.bf16.msra.mxu0 0
        %2323 = vmatpush.bf16.msra.mxu0 0
        %2324 = vmatpush.bf16.msra.mxu0 %v2315
        %2325 = vmatpush.bf16.msra.mxu0 %v2314
        %2326 = vmatmul.bf16.gmra.mxu0 %v889
        %v2327 = vpop.f32.mrf.mxu0
        %v2328 = vadd.f32 0.0, %v2327
        %v2329 = vpop.f32.mrf.mxu0
        %v2330 = vadd.f32 0.0, %v2329
        %2331 = vmatmul.bf16.gmra.mxu0 %v892
        %v2332 = vpop.f32.mrf.mxu0
        %v2333 = vadd.f32 0.0, %v2332
        %v2334 = vpop.f32.mrf.mxu0
        %v2335 = vadd.f32 0.0, %v2334
        %2336 = vmatmul.bf16.gmra.mxu0 %v895
        %v2337 = vpop.f32.mrf.mxu0
        %v2338 = vadd.f32 0.0, %v2337
        %v2339 = vpop.f32.mrf.mxu0
        %v2340 = vadd.f32 0.0, %v2339
        %2341 = vmatmul.bf16.gmra.mxu0 %v898
        %v2342 = vpop.f32.mrf.mxu0
        %v2343 = vadd.f32 0.0, %v2342
        %v2344 = vpop.f32.mrf.mxu0
        %v2345 = vadd.f32 0.0, %v2344
        %2346 = vmatmul.bf16.gmra.mxu0 %v901
        %v2347 = vpop.f32.mrf.mxu0
        %v2348 = vadd.f32 0.0, %v2347
        %v2349 = vpop.f32.mrf.mxu0
        %v2350 = vadd.f32 0.0, %v2349
        %2351 = vmatmul.bf16.gmra.mxu0 %v904
        %v2352 = vpop.f32.mrf.mxu0
        %v2353 = vadd.f32 0.0, %v2352
        %v2354 = vpop.f32.mrf.mxu0
        %v2355 = vadd.f32 0.0, %v2354
        %2356 = vmatmul.bf16.gmra.mxu0 %v907
        %v2357 = vpop.f32.mrf.mxu0
        %v2358 = vadd.f32 0.0, %v2357
        %v2359 = vpop.f32.mrf.mxu0
        %v2360 = vadd.f32 0.0, %v2359
        %2361 = vmatmul.bf16.gmra.mxu0 %v910
        %v2362 = vpop.f32.mrf.mxu0
        %v2363 = vadd.f32 0.0, %v2362
        %v2364 = vpop.f32.mrf.mxu0
        %v2365 = vadd.f32 0.0, %v2364
        %2366 = vmatmul.bf16.gmra.mxu0 %v913
        %v2367 = vpop.f32.mrf.mxu0
        %v2368 = vadd.f32 0.0, %v2367
        %v2369 = vpop.f32.mrf.mxu0
        %v2370 = vadd.f32 0.0, %v2369
        %2371 = vmatmul.bf16.gmra.mxu0 %v916
        %v2372 = vpop.f32.mrf.mxu0
        %v2373 = vadd.f32 0.0, %v2372
        %v2374 = vpop.f32.mrf.mxu0
        %v2375 = vadd.f32 0.0, %v2374
        %2376 = vmatmul.bf16.gmra.mxu0 %v919
        %v2377 = vpop.f32.mrf.mxu0
        %v2378 = vadd.f32 0.0, %v2377
        %v2379 = vpop.f32.mrf.mxu0
        %v2380 = vadd.f32 0.0, %v2379
        %2381 = vmatmul.bf16.gmra.mxu0 %v922
        %v2382 = vpop.f32.mrf.mxu0
        %v2383 = vadd.f32 0.0, %v2382
        %v2384 = vpop.f32.mrf.mxu0
        %v2385 = vadd.f32 0.0, %v2384
        %2386 = vmatmul.bf16.gmra.mxu0 %v925
        %v2387 = vpop.f32.mrf.mxu0
        %v2388 = vadd.f32 0.0, %v2387
        %v2389 = vpop.f32.mrf.mxu0
        %v2390 = vadd.f32 0.0, %v2389
        %2391 = vmatmul.bf16.gmra.mxu0 %v928
        %v2392 = vpop.f32.mrf.mxu0
        %v2393 = vadd.f32 0.0, %v2392
        %v2394 = vpop.f32.mrf.mxu0
        %v2395 = vadd.f32 0.0, %v2394
        %2396 = vmatmul.bf16.gmra.mxu0 %v1701
        %v2397 = vpop.f32.mrf.mxu0
        %v2398 = vadd.f32 0.0, %v2397
        %v2399 = vpop.f32.mrf.mxu0
        %v2400 = vadd.f32 0.0, %v2399
        %2401 = vmatmul.bf16.gmra.mxu0 %v685
        %v2402 = vpop.f32.mrf.mxu0
        %v2403 = vadd.f32 0.0, %v2402
        %v2404 = vpop.f32.mrf.mxu0
        %v2405 = vadd.f32 0.0, %v2404
        %2406 = vdwg.mxu0
        %v2407 = vld [vmem:[#allocation2] sm:$0xff]
        %v2408 = vld [vmem:[#allocation2 + $0x8] sm:$0xff]
        %v2409 = vld [vmem:[#allocation2 + $0x10] sm:$0xff]
        %v2410 = vld [vmem:[#allocation2 + $0x18] sm:$0xff]
        %v2411 = vld [vmem:[#allocation2 + $0x20] sm:$0xff]
        %v2412 = vld [vmem:[#allocation2 + $0x28] sm:$0xff]
        %v2413 = vld [vmem:[#allocation2 + $0x30] sm:$0xff]
        %v2414 = vld [vmem:[#allocation2 + $0x38] sm:$0xff]
        %v2415 = vld [vmem:[#allocation2 + $0x40] sm:$0xff]
        %v2416 = vld [vmem:[#allocation2 + $0x48] sm:$0xff]
        %v2417 = vld [vmem:[#allocation2 + $0x50] sm:$0xff]
        %v2418 = vld [vmem:[#allocation2 + $0x58] sm:$0xff]
        %v2419 = vld [vmem:[#allocation2 + $0x60] sm:$0xff]
        %v2420 = vld [vmem:[#allocation2 + $0x68] sm:$0xff]
        %v2421 = vld [vmem:[#allocation2 + $0x70] sm:$0xff]
        %v2422 = vld [vmem:[#allocation2 + $0x78] sm:$0xff]
        %v2423 = vld [vmem:[#allocation2 + $0x80] sm:$0xff]
        %v2424 = vld [vmem:[#allocation2 + $0x88] sm:$0xff]
        %v2425 = vld [vmem:[#allocation2 + $0x90] sm:$0xff]
        %v2426 = vld [vmem:[#allocation2 + $0x98] sm:$0xff]
        %v2427 = vld [vmem:[#allocation2 + $0xa0] sm:$0xff]
        %v2428 = vld [vmem:[#allocation2 + $0xa8] sm:$0xff]
        %v2429 = vld [vmem:[#allocation2 + $0xb0] sm:$0xff]
        %v2430 = vld [vmem:[#allocation2 + $0xb8] sm:$0xff]
        %v2431 = vld [vmem:[#allocation2 + $0xc0] sm:$0xff]
        %v2432 = vld [vmem:[#allocation2 + $0xc8] sm:$0xff]
        %v2433 = vld [vmem:[#allocation2 + $0xd0] sm:$0xff]
        %v2434 = vld [vmem:[#allocation2 + $0xd8] sm:$0xff]
        %v2435 = vld [vmem:[#allocation2 + $0xe0] sm:$0xff]
        %v2436 = vld [vmem:[#allocation2 + $0xe8] sm:$0xff]
        %v2437 = vld [vmem:[#allocation2 + $0xf0] sm:$0xff]
        %v2438 = vld [vmem:[#allocation2 + $0xf8] sm:$0xff]
        %v2439 = vadd.f32 %v2407, %v2328
        %v2440 = vadd.f32 %v2408, %v2330
        %v2441 = vadd.f32 %v2409, %v2333
        %v2442 = vadd.f32 %v2410, %v2335
        %v2443 = vadd.f32 %v2411, %v2338
        %v2444 = vadd.f32 %v2412, %v2340
        %v2445 = vadd.f32 %v2413, %v2343
        %v2446 = vadd.f32 %v2414, %v2345
        %v2447 = vadd.f32 %v2415, %v2348
        %v2448 = vadd.f32 %v2416, %v2350
        %v2449 = vadd.f32 %v2417, %v2353
        %v2450 = vadd.f32 %v2418, %v2355
        %v2451 = vadd.f32 %v2419, %v2358
        %v2452 = vadd.f32 %v2420, %v2360
        %v2453 = vadd.f32 %v2421, %v2363
        %v2454 = vadd.f32 %v2422, %v2365
        %v2455 = vadd.f32 %v2423, %v2368
        %v2456 = vadd.f32 %v2424, %v2370
        %v2457 = vadd.f32 %v2425, %v2373
        %v2458 = vadd.f32 %v2426, %v2375
        %v2459 = vadd.f32 %v2427, %v2378
        %v2460 = vadd.f32 %v2428, %v2380
        %v2461 = vadd.f32 %v2429, %v2383
        %v2462 = vadd.f32 %v2430, %v2385
        %v2463 = vadd.f32 %v2431, %v2388
        %v2464 = vadd.f32 %v2432, %v2390
        %v2465 = vadd.f32 %v2433, %v2393
        %v2466 = vadd.f32 %v2434, %v2395
        %v2467 = vadd.f32 %v2435, %v2398
        %v2468 = vadd.f32 %v2436, %v2400
        %v2469 = vadd.f32 %v2437, %v2403
        %v2470 = vadd.f32 %v2438, %v2405
        %2471 = vst.msk [vmem:[#allocation2] sm:$0xff] %vm683, %v2439
        %2472 = vst.msk [vmem:[#allocation2 + $0x8] sm:$0xff] %vm683, %v2440
        %2473 = vst.msk [vmem:[#allocation2 + $0x10] sm:$0xff] %vm683, %v2441
        %2474 = vst.msk [vmem:[#allocation2 + $0x18] sm:$0xff] %vm683, %v2442
        %2475 = vst.msk [vmem:[#allocation2 + $0x20] sm:$0xff] %vm683, %v2443
        %2476 = vst.msk [vmem:[#allocation2 + $0x28] sm:$0xff] %vm683, %v2444
        %2477 = vst.msk [vmem:[#allocation2 + $0x30] sm:$0xff] %vm683, %v2445
        %2478 = vst.msk [vmem:[#allocation2 + $0x38] sm:$0xff] %vm683, %v2446
        %2479 = vst.msk [vmem:[#allocation2 + $0x40] sm:$0xff] %vm683, %v2447
        %2480 = vst.msk [vmem:[#allocation2 + $0x48] sm:$0xff] %vm683, %v2448
        %2481 = vst.msk [vmem:[#allocation2 + $0x50] sm:$0xff] %vm683, %v2449
        %2482 = vst.msk [vmem:[#allocation2 + $0x58] sm:$0xff] %vm683, %v2450
        %2483 = vst.msk [vmem:[#allocation2 + $0x60] sm:$0xff] %vm683, %v2451
        %2484 = vst.msk [vmem:[#allocation2 + $0x68] sm:$0xff] %vm683, %v2452
        %2485 = vst.msk [vmem:[#allocation2 + $0x70] sm:$0xff] %vm683, %v2453
        %2486 = vst.msk [vmem:[#allocation2 + $0x78] sm:$0xff] %vm683, %v2454
        %2487 = vst.msk [vmem:[#allocation2 + $0x80] sm:$0xff] %vm683, %v2455
        %2488 = vst.msk [vmem:[#allocation2 + $0x88] sm:$0xff] %vm683, %v2456
        %2489 = vst.msk [vmem:[#allocation2 + $0x90] sm:$0xff] %vm683, %v2457
        %2490 = vst.msk [vmem:[#allocation2 + $0x98] sm:$0xff] %vm683, %v2458
        %2491 = vst.msk [vmem:[#allocation2 + $0xa0] sm:$0xff] %vm683, %v2459
        %2492 = vst.msk [vmem:[#allocation2 + $0xa8] sm:$0xff] %vm683, %v2460
        %2493 = vst.msk [vmem:[#allocation2 + $0xb0] sm:$0xff] %vm683, %v2461
        %2494 = vst.msk [vmem:[#allocation2 + $0xb8] sm:$0xff] %vm683, %v2462
        %2495 = vst.msk [vmem:[#allocation2 + $0xc0] sm:$0xff] %vm683, %v2463
        %2496 = vst.msk [vmem:[#allocation2 + $0xc8] sm:$0xff] %vm683, %v2464
        %2497 = vst.msk [vmem:[#allocation2 + $0xd0] sm:$0xff] %vm683, %v2465
        %2498 = vst.msk [vmem:[#allocation2 + $0xd8] sm:$0xff] %vm683, %v2466
        %2499 = vst.msk [vmem:[#allocation2 + $0xe0] sm:$0xff] %vm683, %v2467
        %2500 = vst.msk [vmem:[#allocation2 + $0xe8] sm:$0xff] %vm683, %v2468
        %2501 = vst.msk [vmem:[#allocation2 + $0xf0] sm:$0xff] %vm683, %v2469
        %2502 = vst.msk [vmem:[#allocation2 + $0xf8] sm:$0xff] %vm683, %v2470
        %s2503 = scalar_lea.vmem [#allocation6], 128
        %v2504 = vld [vmem:[%s2503] sm:$0xf]
        %v2505 = vld [vmem:[%s2503 + $0x4] sm:$0xf]
        %v2506 = vld [vmem:[%s2503 + $0x8] sm:$0xf]
        %v2507 = vld [vmem:[%s2503 + $0xc] sm:$0xf]
        %v2512 = vunpack.c.l.b16 %v2504
        %v2513 = vunpack.c.l.b16 %v2505
        %v2514 = vunpack.c.l.b16 %v2506
        %v2515 = vunpack.c.l.b16 %v2507
        %v2516 = vpack.c.b16 %v2513, %v2512
        %v2517 = vpack.c.b16 %v2515, %v2514
        %2520 = vmatpush.bf16.msra.mxu0 0
        %2521 = vmatpush.bf16.msra.mxu0 0
        %2522 = vmatpush.bf16.msra.mxu0 0
        %2523 = vmatpush.bf16.msra.mxu0 0
        %2524 = vmatpush.bf16.msra.mxu0 0
        %2525 = vmatpush.bf16.msra.mxu0 0
        %2526 = vmatpush.bf16.msra.mxu0 %v2517
        %2527 = vmatpush.bf16.msra.mxu0 %v2516
        %2528 = vmatmul.bf16.gmra.mxu0 %v1245
        %v2529 = vpop.f32.mrf.mxu0
        %v2530 = vadd.f32 0.0, %v2529
        %v2531 = vpop.f32.mrf.mxu0
        %v2532 = vadd.f32 0.0, %v2531
        %2533 = vmatmul.bf16.gmra.mxu0 %v1248
        %v2534 = vpop.f32.mrf.mxu0
        %v2535 = vadd.f32 0.0, %v2534
        %v2536 = vpop.f32.mrf.mxu0
        %v2537 = vadd.f32 0.0, %v2536
        %2538 = vmatmul.bf16.gmra.mxu0 %v1251
        %v2539 = vpop.f32.mrf.mxu0
        %v2540 = vadd.f32 0.0, %v2539
        %v2541 = vpop.f32.mrf.mxu0
        %v2542 = vadd.f32 0.0, %v2541
        %2543 = vmatmul.bf16.gmra.mxu0 %v1254
        %v2544 = vpop.f32.mrf.mxu0
        %v2545 = vadd.f32 0.0, %v2544
        %v2546 = vpop.f32.mrf.mxu0
        %v2547 = vadd.f32 0.0, %v2546
        %2548 = vmatmul.bf16.gmra.mxu0 %v1257
        %v2549 = vpop.f32.mrf.mxu0
        %v2550 = vadd.f32 0.0, %v2549
        %v2551 = vpop.f32.mrf.mxu0
        %v2552 = vadd.f32 0.0, %v2551
        %2553 = vmatmul.bf16.gmra.mxu0 %v1260
        %v2554 = vpop.f32.mrf.mxu0
        %v2555 = vadd.f32 0.0, %v2554
        %v2556 = vpop.f32.mrf.mxu0
        %v2557 = vadd.f32 0.0, %v2556
        %2558 = vmatmul.bf16.gmra.mxu0 %v1263
        %v2559 = vpop.f32.mrf.mxu0
        %v2560 = vadd.f32 0.0, %v2559
        %v2561 = vpop.f32.mrf.mxu0
        %v2562 = vadd.f32 0.0, %v2561
        %2563 = vmatmul.bf16.gmra.mxu0 %v1266
        %v2564 = vpop.f32.mrf.mxu0
        %v2565 = vadd.f32 0.0, %v2564
        %v2566 = vpop.f32.mrf.mxu0
        %v2567 = vadd.f32 0.0, %v2566
        %2568 = vmatmul.bf16.gmra.mxu0 %v1269
        %v2569 = vpop.f32.mrf.mxu0
        %v2570 = vadd.f32 0.0, %v2569
        %v2571 = vpop.f32.mrf.mxu0
        %v2572 = vadd.f32 0.0, %v2571
        %2573 = vmatmul.bf16.gmra.mxu0 %v1272
        %v2574 = vpop.f32.mrf.mxu0
        %v2575 = vadd.f32 0.0, %v2574
        %v2576 = vpop.f32.mrf.mxu0
        %v2577 = vadd.f32 0.0, %v2576
        %2578 = vmatmul.bf16.gmra.mxu0 %v1275
        %v2579 = vpop.f32.mrf.mxu0
        %v2580 = vadd.f32 0.0, %v2579
        %v2581 = vpop.f32.mrf.mxu0
        %v2582 = vadd.f32 0.0, %v2581
        %2583 = vmatmul.bf16.gmra.mxu0 %v1278
        %v2584 = vpop.f32.mrf.mxu0
        %v2585 = vadd.f32 0.0, %v2584
        %v2586 = vpop.f32.mrf.mxu0
        %v2587 = vadd.f32 0.0, %v2586
        %2588 = vmatmul.bf16.gmra.mxu0 %v1281
        %v2589 = vpop.f32.mrf.mxu0
        %v2590 = vadd.f32 0.0, %v2589
        %v2591 = vpop.f32.mrf.mxu0
        %v2592 = vadd.f32 0.0, %v2591
        %2593 = vmatmul.bf16.gmra.mxu0 %v1284
        %v2594 = vpop.f32.mrf.mxu0
        %v2595 = vadd.f32 0.0, %v2594
        %v2596 = vpop.f32.mrf.mxu0
        %v2597 = vadd.f32 0.0, %v2596
        %2598 = vmatmul.bf16.gmra.mxu0 %v1912
        %v2599 = vpop.f32.mrf.mxu0
        %v2600 = vadd.f32 0.0, %v2599
        %v2601 = vpop.f32.mrf.mxu0
        %v2602 = vadd.f32 0.0, %v2601
        %2603 = vmatmul.bf16.gmra.mxu0 %v685
        %v2604 = vpop.f32.mrf.mxu0
        %v2605 = vadd.f32 0.0, %v2604
        %v2606 = vpop.f32.mrf.mxu0
        %v2607 = vadd.f32 0.0, %v2606
        %2608 = vdwg.mxu0
        %v2609 = vld [vmem:[#allocation2] sm:$0xff]
        %v2610 = vld [vmem:[#allocation2 + $0x8] sm:$0xff]
        %v2611 = vld [vmem:[#allocation2 + $0x10] sm:$0xff]
        %v2612 = vld [vmem:[#allocation2 + $0x18] sm:$0xff]
        %v2613 = vld [vmem:[#allocation2 + $0x20] sm:$0xff]
        %v2614 = vld [vmem:[#allocation2 + $0x28] sm:$0xff]
        %v2615 = vld [vmem:[#allocation2 + $0x30] sm:$0xff]
        %v2616 = vld [vmem:[#allocation2 + $0x38] sm:$0xff]
        %v2617 = vld [vmem:[#allocation2 + $0x40] sm:$0xff]
        %v2618 = vld [vmem:[#allocation2 + $0x48] sm:$0xff]
        %v2619 = vld [vmem:[#allocation2 + $0x50] sm:$0xff]
        %v2620 = vld [vmem:[#allocation2 + $0x58] sm:$0xff]
        %v2621 = vld [vmem:[#allocation2 + $0x60] sm:$0xff]
        %v2622 = vld [vmem:[#allocation2 + $0x68] sm:$0xff]
        %v2623 = vld [vmem:[#allocation2 + $0x70] sm:$0xff]
        %v2624 = vld [vmem:[#allocation2 + $0x78] sm:$0xff]
        %v2625 = vld [vmem:[#allocation2 + $0x80] sm:$0xff]
        %v2626 = vld [vmem:[#allocation2 + $0x88] sm:$0xff]
        %v2627 = vld [vmem:[#allocation2 + $0x90] sm:$0xff]
        %v2628 = vld [vmem:[#allocation2 + $0x98] sm:$0xff]
        %v2629 = vld [vmem:[#allocation2 + $0xa0] sm:$0xff]
        %v2630 = vld [vmem:[#allocation2 + $0xa8] sm:$0xff]
        %v2631 = vld [vmem:[#allocation2 + $0xb0] sm:$0xff]
        %v2632 = vld [vmem:[#allocation2 + $0xb8] sm:$0xff]
        %v2633 = vld [vmem:[#allocation2 + $0xc0] sm:$0xff]
        %v2634 = vld [vmem:[#allocation2 + $0xc8] sm:$0xff]
        %v2635 = vld [vmem:[#allocation2 + $0xd0] sm:$0xff]
        %v2636 = vld [vmem:[#allocation2 + $0xd8] sm:$0xff]
        %v2637 = vld [vmem:[#allocation2 + $0xe0] sm:$0xff]
        %v2638 = vld [vmem:[#allocation2 + $0xe8] sm:$0xff]
        %v2639 = vld [vmem:[#allocation2 + $0xf0] sm:$0xff]
        %v2640 = vld [vmem:[#allocation2 + $0xf8] sm:$0xff]
        %v2641 = vadd.f32 %v2609, %v2530
        %v2642 = vadd.f32 %v2610, %v2532
        %v2643 = vadd.f32 %v2611, %v2535
        %v2644 = vadd.f32 %v2612, %v2537
        %v2645 = vadd.f32 %v2613, %v2540
        %v2646 = vadd.f32 %v2614, %v2542
        %v2647 = vadd.f32 %v2615, %v2545
        %v2648 = vadd.f32 %v2616, %v2547
        %v2649 = vadd.f32 %v2617, %v2550
        %v2650 = vadd.f32 %v2618, %v2552
        %v2651 = vadd.f32 %v2619, %v2555
        %v2652 = vadd.f32 %v2620, %v2557
        %v2653 = vadd.f32 %v2621, %v2560
        %v2654 = vadd.f32 %v2622, %v2562
        %v2655 = vadd.f32 %v2623, %v2565
        %v2656 = vadd.f32 %v2624, %v2567
        %v2657 = vadd.f32 %v2625, %v2570
        %v2658 = vadd.f32 %v2626, %v2572
        %v2659 = vadd.f32 %v2627, %v2575
        %v2660 = vadd.f32 %v2628, %v2577
        %v2661 = vadd.f32 %v2629, %v2580
        %v2662 = vadd.f32 %v2630, %v2582
        %v2663 = vadd.f32 %v2631, %v2585
        %v2664 = vadd.f32 %v2632, %v2587
        %v2665 = vadd.f32 %v2633, %v2590
        %v2666 = vadd.f32 %v2634, %v2592
        %v2667 = vadd.f32 %v2635, %v2595
        %v2668 = vadd.f32 %v2636, %v2597
        %v2669 = vadd.f32 %v2637, %v2600
        %v2670 = vadd.f32 %v2638, %v2602
        %v2671 = vadd.f32 %v2639, %v2605
        %v2672 = vadd.f32 %v2640, %v2607
        %2673 = vst.msk [vmem:[#allocation2] sm:$0xff] %vm683, %v2641
        %2674 = vst.msk [vmem:[#allocation2 + $0x8] sm:$0xff] %vm683, %v2642
        %2675 = vst.msk [vmem:[#allocation2 + $0x10] sm:$0xff] %vm683, %v2643
        %2676 = vst.msk [vmem:[#allocation2 + $0x18] sm:$0xff] %vm683, %v2644
        %2677 = vst.msk [vmem:[#allocation2 + $0x20] sm:$0xff] %vm683, %v2645
        %2678 = vst.msk [vmem:[#allocation2 + $0x28] sm:$0xff] %vm683, %v2646
        %2679 = vst.msk [vmem:[#allocation2 + $0x30] sm:$0xff] %vm683, %v2647
        %2680 = vst.msk [vmem:[#allocation2 + $0x38] sm:$0xff] %vm683, %v2648
        %2681 = vst.msk [vmem:[#allocation2 + $0x40] sm:$0xff] %vm683, %v2649
        %2682 = vst.msk [vmem:[#allocation2 + $0x48] sm:$0xff] %vm683, %v2650
        %2683 = vst.msk [vmem:[#allocation2 + $0x50] sm:$0xff] %vm683, %v2651
        %2684 = vst.msk [vmem:[#allocation2 + $0x58] sm:$0xff] %vm683, %v2652
        %2685 = vst.msk [vmem:[#allocation2 + $0x60] sm:$0xff] %vm683, %v2653
        %2686 = vst.msk [vmem:[#allocation2 + $0x68] sm:$0xff] %vm683, %v2654
        %2687 = vst.msk [vmem:[#allocation2 + $0x70] sm:$0xff] %vm683, %v2655
        %2688 = vst.msk [vmem:[#allocation2 + $0x78] sm:$0xff] %vm683, %v2656
        %2689 = vst.msk [vmem:[#allocation2 + $0x80] sm:$0xff] %vm683, %v2657
        %2690 = vst.msk [vmem:[#allocation2 + $0x88] sm:$0xff] %vm683, %v2658
        %2691 = vst.msk [vmem:[#allocation2 + $0x90] sm:$0xff] %vm683, %v2659
        %2692 = vst.msk [vmem:[#allocation2 + $0x98] sm:$0xff] %vm683, %v2660
        %2693 = vst.msk [vmem:[#allocation2 + $0xa0] sm:$0xff] %vm683, %v2661
        %2694 = vst.msk [vmem:[#allocation2 + $0xa8] sm:$0xff] %vm683, %v2662
        %2695 = vst.msk [vmem:[#allocation2 + $0xb0] sm:$0xff] %vm683, %v2663
        %2696 = vst.msk [vmem:[#allocation2 + $0xb8] sm:$0xff] %vm683, %v2664
        %2697 = vst.msk [vmem:[#allocation2 + $0xc0] sm:$0xff] %vm683, %v2665
        %2698 = vst.msk [vmem:[#allocation2 + $0xc8] sm:$0xff] %vm683, %v2666
        %2699 = vst.msk [vmem:[#allocation2 + $0xd0] sm:$0xff] %vm683, %v2667
        %2700 = vst.msk [vmem:[#allocation2 + $0xd8] sm:$0xff] %vm683, %v2668
        %2701 = vst.msk [vmem:[#allocation2 + $0xe0] sm:$0xff] %vm683, %v2669
        %2702 = vst.msk [vmem:[#allocation2 + $0xe8] sm:$0xff] %vm683, %v2670
        %2703 = vst.msk [vmem:[#allocation2 + $0xf0] sm:$0xff] %vm683, %v2671
        %2704 = vst.msk [vmem:[#allocation2 + $0xf8] sm:$0xff] %vm683, %v2672
        %v2705 = vld [vmem:[#allocation2] sm:$0xff]
        %v2706 = vld [vmem:[#allocation2 + $0x8] sm:$0xff]
        %v2707 = vld [vmem:[#allocation2 + $0x10] sm:$0xff]
        %v2708 = vld [vmem:[#allocation2 + $0x18] sm:$0xff]
        %v2709 = vld [vmem:[#allocation2 + $0x20] sm:$0xff]
        %v2710 = vld [vmem:[#allocation2 + $0x28] sm:$0xff]
        %v2711 = vld [vmem:[#allocation2 + $0x30] sm:$0xff]
        %v2712 = vld [vmem:[#allocation2 + $0x38] sm:$0xff]
        %v2713 = vld [vmem:[#allocation2 + $0x40] sm:$0xff]
        %v2714 = vld [vmem:[#allocation2 + $0x48] sm:$0xff]
        %v2715 = vld [vmem:[#allocation2 + $0x50] sm:$0xff]
        %v2716 = vld [vmem:[#allocation2 + $0x58] sm:$0xff]
        %v2717 = vld [vmem:[#allocation2 + $0x60] sm:$0xff]
        %v2718 = vld [vmem:[#allocation2 + $0x68] sm:$0xff]
        %v2719 = vld [vmem:[#allocation2 + $0x70] sm:$0xff]
        %v2720 = vld [vmem:[#allocation2 + $0x78] sm:$0xff]
        %v2721 = vld [vmem:[#allocation2 + $0x80] sm:$0xff]
        %v2722 = vld [vmem:[#allocation2 + $0x88] sm:$0xff]
        %v2723 = vld [vmem:[#allocation2 + $0x90] sm:$0xff]
        %v2724 = vld [vmem:[#allocation2 + $0x98] sm:$0xff]
        %v2725 = vld [vmem:[#allocation2 + $0xa0] sm:$0xff]
        %v2726 = vld [vmem:[#allocation2 + $0xa8] sm:$0xff]
        %v2727 = vld [vmem:[#allocation2 + $0xb0] sm:$0xff]
        %v2728 = vld [vmem:[#allocation2 + $0xb8] sm:$0xff]
        %v2729 = vld [vmem:[#allocation2 + $0xc0] sm:$0xff]
        %v2730 = vld [vmem:[#allocation2 + $0xc8] sm:$0xff]
        %v2731 = vld [vmem:[#allocation2 + $0xd0] sm:$0xff]
        %v2732 = vld [vmem:[#allocation2 + $0xd8] sm:$0xff]
        %v2733 = vld [vmem:[#allocation2 + $0xe0] sm:$0xff]
        %v2734 = vld [vmem:[#allocation2 + $0xe8] sm:$0xff]
        %v2735 = vld [vmem:[#allocation2 + $0xf0] sm:$0xff]
        %v2736 = vld [vmem:[#allocation2 + $0xf8] sm:$0xff]
        %v2737 = vld [vmem:[%s5] sm:$0x1]
        %v2739 = vperm.slane %v2737, 0
        %v2741 = vadd.f32 %v2705, %v2739
        %v2742 = vadd.f32 %v2706, %v2739
        %v2743 = vadd.f32 %v2707, %v2739
        %v2744 = vadd.f32 %v2708, %v2739
        %v2745 = vadd.f32 %v2709, %v2739
        %v2746 = vadd.f32 %v2710, %v2739
        %v2747 = vadd.f32 %v2711, %v2739
        %v2748 = vadd.f32 %v2712, %v2739
        %v2749 = vadd.f32 %v2713, %v2739
        %v2750 = vadd.f32 %v2714, %v2739
        %v2751 = vadd.f32 %v2715, %v2739
        %v2752 = vadd.f32 %v2716, %v2739
        %v2753 = vadd.f32 %v2717, %v2739
        %v2754 = vadd.f32 %v2718, %v2739
        %v2755 = vadd.f32 %v2719, %v2739
        %v2756 = vadd.f32 %v2720, %v2739
        %v2757 = vadd.f32 %v2721, %v2739
        %v2758 = vadd.f32 %v2722, %v2739
        %v2759 = vadd.f32 %v2723, %v2739
        %v2760 = vadd.f32 %v2724, %v2739
        %v2761 = vadd.f32 %v2725, %v2739
        %v2762 = vadd.f32 %v2726, %v2739
        %v2763 = vadd.f32 %v2727, %v2739
        %v2764 = vadd.f32 %v2728, %v2739
        %v2765 = vadd.f32 %v2729, %v2739
        %v2766 = vadd.f32 %v2730, %v2739
        %v2767 = vadd.f32 %v2731, %v2739
        %v2768 = vadd.f32 %v2732, %v2739
        %v2769 = vadd.f32 %v2733, %v2739
        %v2770 = vadd.f32 %v2734, %v2739
        %v2771 = vadd.f32 %v2735, %v2739
        %v2772 = vadd.f32 %v2736, %v2739
        %v2773 = vmax.f32 %v2741, 0.0
        %v2774 = vmax.f32 %v2742, 0.0
        %v2775 = vmax.f32 %v2743, 0.0
        %v2776 = vmax.f32 %v2744, 0.0
        %v2777 = vmax.f32 %v2745, 0.0
        %v2778 = vmax.f32 %v2746, 0.0
        %v2779 = vmax.f32 %v2747, 0.0
        %v2780 = vmax.f32 %v2748, 0.0
        %v2781 = vmax.f32 %v2749, 0.0
        %v2782 = vmax.f32 %v2750, 0.0
        %v2783 = vmax.f32 %v2751, 0.0
        %v2784 = vmax.f32 %v2752, 0.0
        %v2785 = vmax.f32 %v2753, 0.0
        %v2786 = vmax.f32 %v2754, 0.0
        %v2787 = vmax.f32 %v2755, 0.0
        %v2788 = vmax.f32 %v2756, 0.0
        %v2789 = vmax.f32 %v2757, 0.0
        %v2790 = vmax.f32 %v2758, 0.0
        %v2791 = vmax.f32 %v2759, 0.0
        %v2792 = vmax.f32 %v2760, 0.0
        %v2793 = vmax.f32 %v2761, 0.0
        %v2794 = vmax.f32 %v2762, 0.0
        %v2795 = vmax.f32 %v2763, 0.0
        %v2796 = vmax.f32 %v2764, 0.0
        %v2797 = vmax.f32 %v2765, 0.0
        %v2798 = vmax.f32 %v2766, 0.0
        %v2799 = vmax.f32 %v2767, 0.0
        %v2800 = vmax.f32 %v2768, 0.0
        %v2801 = vmax.f32 %v2769, 0.0
        %v2802 = vmax.f32 %v2770, 0.0
        %v2803 = vmax.f32 %v2771, 0.0
        %v2804 = vmax.f32 %v2772, 0.0
        %v2805 = vpack.c.bf16 %v2774, %v2773
        %v2806 = vpack.c.bf16 %v2776, %v2775
        %v2807 = vpack.c.bf16 %v2778, %v2777
        %v2808 = vpack.c.bf16 %v2780, %v2779
        %v2809 = vpack.c.bf16 %v2782, %v2781
        %v2810 = vpack.c.bf16 %v2784, %v2783
        %v2811 = vpack.c.bf16 %v2786, %v2785
        %v2812 = vpack.c.bf16 %v2788, %v2787
        %v2813 = vpack.c.bf16 %v2790, %v2789
        %v2814 = vpack.c.bf16 %v2792, %v2791
        %v2815 = vpack.c.bf16 %v2794, %v2793
        %v2816 = vpack.c.bf16 %v2796, %v2795
        %v2817 = vpack.c.bf16 %v2798, %v2797
        %v2818 = vpack.c.bf16 %v2800, %v2799
        %v2819 = vpack.c.bf16 %v2802, %v2801
        %v2820 = vpack.c.bf16 %v2804, %v2803
        %v2821 = vld [vmem:[%s3] sm:$0xf]
        %v2822 = vld [vmem:[%s3 + $0x4] sm:$0xf]
        %v2823 = vld [vmem:[%s3 + $0x8] sm:$0xf]
        %v2824 = vld [vmem:[%s3 + $0xc] sm:$0xf]
        %v2825 = vld [vmem:[%s6] sm:$0x1]
        %v2827 = vperm.slane %v2825, 0
        %v2833 = vunpack.c.l.b16 %v2821
        %v2834 = vunpack.c.l.b16 %v2822
        %v2835 = vunpack.c.l.b16 %v2823
        %v2836 = vunpack.c.l.b16 %v2824
        %v2837 = vpack.c.b16 %v2834, %v2833
        %v2838 = vpack.c.b16 %v2836, %v2835
        %v2842 = vsel %vm683, %v2805, 0
        %v2845 = vsel %vm683, %v2806, 0
        %v2848 = vsel %vm683, %v2807, 0
        %v2851 = vsel %vm683, %v2808, 0
        %v2854 = vsel %vm683, %v2809, 0
        %v2857 = vsel %vm683, %v2810, 0
        %v2860 = vsel %vm683, %v2811, 0
        %v2863 = vsel %vm683, %v2812, 0
        %v2866 = vsel %vm683, %v2813, 0
        %v2869 = vsel %vm683, %v2814, 0
        %v2872 = vsel %vm683, %v2815, 0
        %v2875 = vsel %vm683, %v2816, 0
        %v2878 = vsel %vm683, %v2817, 0
        %v2881 = vsel %vm683, %v2818, 0
        %v2884 = vsel %vm683, %v2819, 0
        %v2887 = vsel %vm683, %v2820, 0
        %2889 = vmatpush.bf16.msra.mxu0 0
        %2890 = vmatpush.bf16.msra.mxu0 0
        %2891 = vmatpush.bf16.msra.mxu0 0
        %2892 = vmatpush.bf16.msra.mxu0 0
        %2893 = vmatpush.bf16.msra.mxu0 0
        %2894 = vmatpush.bf16.msra.mxu0 0
        %2895 = vmatpush.bf16.msra.mxu0 %v2838
        %2896 = vmatpush.bf16.msra.mxu0 %v2837
        %2897 = vmatmul.bf16.gmra.mxu0 %v2842
        %v2898 = vpop.f32.mrf.mxu0
        %v2899 = vadd.f32 %v2827, %v2898
        %v2900 = vpop.f32.mrf.mxu0
        %v2901 = vadd.f32 %v2827, %v2900
        %2902 = vmatmul.bf16.gmra.mxu0 %v2845
        %v2903 = vpop.f32.mrf.mxu0
        %v2904 = vadd.f32 %v2827, %v2903
        %v2905 = vpop.f32.mrf.mxu0
        %v2906 = vadd.f32 %v2827, %v2905
        %2907 = vmatmul.bf16.gmra.mxu0 %v2848
        %v2908 = vpop.f32.mrf.mxu0
        %v2909 = vadd.f32 %v2827, %v2908
        %v2910 = vpop.f32.mrf.mxu0
        %v2911 = vadd.f32 %v2827, %v2910
        %2912 = vmatmul.bf16.gmra.mxu0 %v2851
        %v2913 = vpop.f32.mrf.mxu0
        %v2914 = vadd.f32 %v2827, %v2913
        %v2915 = vpop.f32.mrf.mxu0
        %v2916 = vadd.f32 %v2827, %v2915
        %2917 = vmatmul.bf16.gmra.mxu0 %v2854
        %v2918 = vpop.f32.mrf.mxu0
        %v2919 = vadd.f32 %v2827, %v2918
        %v2920 = vpop.f32.mrf.mxu0
        %v2921 = vadd.f32 %v2827, %v2920
        %2922 = vmatmul.bf16.gmra.mxu0 %v2857
        %v2923 = vpop.f32.mrf.mxu0
        %v2924 = vadd.f32 %v2827, %v2923
        %v2925 = vpop.f32.mrf.mxu0
        %v2926 = vadd.f32 %v2827, %v2925
        %2927 = vmatmul.bf16.gmra.mxu0 %v2860
        %v2928 = vpop.f32.mrf.mxu0
        %v2929 = vadd.f32 %v2827, %v2928
        %v2930 = vpop.f32.mrf.mxu0
        %v2931 = vadd.f32 %v2827, %v2930
        %2932 = vmatmul.bf16.gmra.mxu0 %v2863
        %v2933 = vpop.f32.mrf.mxu0
        %v2934 = vadd.f32 %v2827, %v2933
        %v2935 = vpop.f32.mrf.mxu0
        %v2936 = vadd.f32 %v2827, %v2935
        %2937 = vmatmul.bf16.gmra.mxu0 %v2866
        %v2938 = vpop.f32.mrf.mxu0
        %v2939 = vadd.f32 %v2827, %v2938
        %v2940 = vpop.f32.mrf.mxu0
        %v2941 = vadd.f32 %v2827, %v2940
        %2942 = vmatmul.bf16.gmra.mxu0 %v2869
        %v2943 = vpop.f32.mrf.mxu0
        %v2944 = vadd.f32 %v2827, %v2943
        %v2945 = vpop.f32.mrf.mxu0
        %v2946 = vadd.f32 %v2827, %v2945
        %2947 = vmatmul.bf16.gmra.mxu0 %v2872
        %v2948 = vpop.f32.mrf.mxu0
        %v2949 = vadd.f32 %v2827, %v2948
        %v2950 = vpop.f32.mrf.mxu0
        %v2951 = vadd.f32 %v2827, %v2950
        %2952 = vmatmul.bf16.gmra.mxu0 %v2875
        %v2953 = vpop.f32.mrf.mxu0
        %v2954 = vadd.f32 %v2827, %v2953
        %v2955 = vpop.f32.mrf.mxu0
        %v2956 = vadd.f32 %v2827, %v2955
        %2957 = vmatmul.bf16.gmra.mxu0 %v2878
        %v2958 = vpop.f32.mrf.mxu0
        %v2959 = vadd.f32 %v2827, %v2958
        %v2960 = vpop.f32.mrf.mxu0
        %v2961 = vadd.f32 %v2827, %v2960
        %2962 = vmatmul.bf16.gmra.mxu0 %v2881
        %v2963 = vpop.f32.mrf.mxu0
        %v2964 = vadd.f32 %v2827, %v2963
        %v2965 = vpop.f32.mrf.mxu0
        %v2966 = vadd.f32 %v2827, %v2965
        %2967 = vmatmul.bf16.gmra.mxu0 %v2884
        %v2968 = vpop.f32.mrf.mxu0
        %v2969 = vadd.f32 %v2827, %v2968
        %v2970 = vpop.f32.mrf.mxu0
        %v2971 = vadd.f32 %v2827, %v2970
        %2972 = vmatmul.bf16.gmra.mxu0 %v2887
        %v2973 = vpop.f32.mrf.mxu0
        %v2974 = vadd.f32 %v2827, %v2973
        %v2975 = vpop.f32.mrf.mxu0
        %v2976 = vadd.f32 %v2827, %v2975
        %2977 = vdwg.mxu0
        %v2978 = vld [vmem:[%s279] sm:$0xff]
        %v2979 = vld [vmem:[%s279 + $0x8] sm:$0xff]
        %v2980 = vld [vmem:[%s279 + $0x10] sm:$0xff]
        %v2981 = vld [vmem:[%s279 + $0x18] sm:$0xff]
        %v2982 = vld [vmem:[%s279 + $0x20] sm:$0xff]
        %v2983 = vld [vmem:[%s279 + $0x28] sm:$0xff]
        %v2984 = vld [vmem:[%s279 + $0x30] sm:$0xff]
        %v2985 = vld [vmem:[%s279 + $0x38] sm:$0xff]
        %v2986 = vld [vmem:[%s279 + $0x40] sm:$0xff]
        %v2987 = vld [vmem:[%s279 + $0x48] sm:$0xff]
        %v2988 = vld [vmem:[%s279 + $0x50] sm:$0xff]
        %v2989 = vld [vmem:[%s279 + $0x58] sm:$0xff]
        %v2990 = vld [vmem:[%s279 + $0x60] sm:$0xff]
        %v2991 = vld [vmem:[%s279 + $0x68] sm:$0xff]
        %v2992 = vld [vmem:[%s279 + $0x70] sm:$0xff]
        %v2993 = vld [vmem:[%s279 + $0x78] sm:$0xff]
        %v2994 = vld [vmem:[%s279 + $0x80] sm:$0xff]
        %v2995 = vld [vmem:[%s279 + $0x88] sm:$0xff]
        %v2996 = vld [vmem:[%s279 + $0x90] sm:$0xff]
        %v2997 = vld [vmem:[%s279 + $0x98] sm:$0xff]
        %v2998 = vld [vmem:[%s279 + $0xa0] sm:$0xff]
        %v2999 = vld [vmem:[%s279 + $0xa8] sm:$0xff]
        %v3000 = vld [vmem:[%s279 + $0xb0] sm:$0xff]
        %v3001 = vld [vmem:[%s279 + $0xb8] sm:$0xff]
        %v3002 = vld [vmem:[%s279 + $0xc0] sm:$0xff]
        %v3003 = vld [vmem:[%s279 + $0xc8] sm:$0xff]
        %v3004 = vld [vmem:[%s279 + $0xd0] sm:$0xff]
        %v3005 = vld [vmem:[%s279 + $0xd8] sm:$0xff]
        %v3006 = vld [vmem:[%s279 + $0xe0] sm:$0xff]
        %v3007 = vld [vmem:[%s279 + $0xe8] sm:$0xff]
        %v3008 = vld [vmem:[%s279 + $0xf0] sm:$0xff]
        %v3009 = vld [vmem:[%s279 + $0xf8] sm:$0xff]
        %v3010 = vadd.f32 %v2899, %v2978
        %v3011 = vadd.f32 %v2901, %v2979
        %v3012 = vadd.f32 %v2904, %v2980
        %v3013 = vadd.f32 %v2906, %v2981
        %v3014 = vadd.f32 %v2909, %v2982
        %v3015 = vadd.f32 %v2911, %v2983
        %v3016 = vadd.f32 %v2914, %v2984
        %v3017 = vadd.f32 %v2916, %v2985
        %v3018 = vadd.f32 %v2919, %v2986
        %v3019 = vadd.f32 %v2921, %v2987
        %v3020 = vadd.f32 %v2924, %v2988
        %v3021 = vadd.f32 %v2926, %v2989
        %v3022 = vadd.f32 %v2929, %v2990
        %v3023 = vadd.f32 %v2931, %v2991
        %v3024 = vadd.f32 %v2934, %v2992
        %v3025 = vadd.f32 %v2936, %v2993
        %v3026 = vadd.f32 %v2939, %v2994
        %v3027 = vadd.f32 %v2941, %v2995
        %v3028 = vadd.f32 %v2944, %v2996
        %v3029 = vadd.f32 %v2946, %v2997
        %v3030 = vadd.f32 %v2949, %v2998
        %v3031 = vadd.f32 %v2951, %v2999
        %v3032 = vadd.f32 %v2954, %v3000
        %v3033 = vadd.f32 %v2956, %v3001
        %v3034 = vadd.f32 %v2959, %v3002
        %v3035 = vadd.f32 %v2961, %v3003
        %v3036 = vadd.f32 %v2964, %v3004
        %v3037 = vadd.f32 %v2966, %v3005
        %v3038 = vadd.f32 %v2969, %v3006
        %v3039 = vadd.f32 %v2971, %v3007
        %v3040 = vadd.f32 %v2974, %v3008
        %v3041 = vadd.f32 %v2976, %v3009
        %v3042 = vmax.f32 %v3010, 0.0
        %v3043 = vmax.f32 %v3011, 0.0
        %v3044 = vmax.f32 %v3012, 0.0
        %v3045 = vmax.f32 %v3013, 0.0
        %v3046 = vmax.f32 %v3014, 0.0
        %v3047 = vmax.f32 %v3015, 0.0
        %v3048 = vmax.f32 %v3016, 0.0
        %v3049 = vmax.f32 %v3017, 0.0
        %v3050 = vmax.f32 %v3018, 0.0
        %v3051 = vmax.f32 %v3019, 0.0
        %v3052 = vmax.f32 %v3020, 0.0
        %v3053 = vmax.f32 %v3021, 0.0
        %v3054 = vmax.f32 %v3022, 0.0
        %v3055 = vmax.f32 %v3023, 0.0
        %v3056 = vmax.f32 %v3024, 0.0
        %v3057 = vmax.f32 %v3025, 0.0
        %v3058 = vmax.f32 %v3026, 0.0
        %v3059 = vmax.f32 %v3027, 0.0
        %v3060 = vmax.f32 %v3028, 0.0
        %v3061 = vmax.f32 %v3029, 0.0
        %v3062 = vmax.f32 %v3030, 0.0
        %v3063 = vmax.f32 %v3031, 0.0
        %v3064 = vmax.f32 %v3032, 0.0
        %v3065 = vmax.f32 %v3033, 0.0
        %v3066 = vmax.f32 %v3034, 0.0
        %v3067 = vmax.f32 %v3035, 0.0
        %v3068 = vmax.f32 %v3036, 0.0
        %v3069 = vmax.f32 %v3037, 0.0
        %v3070 = vmax.f32 %v3038, 0.0
        %v3071 = vmax.f32 %v3039, 0.0
        %v3072 = vmax.f32 %v3040, 0.0
        %v3073 = vmax.f32 %v3041, 0.0
        %3074 = vst [vmem:[%s315] sm:$0xff] %v3042
        %3075 = vst [vmem:[%s315 + $0x8] sm:$0xff] %v3043
        %3076 = vst [vmem:[%s315 + $0x10] sm:$0xff] %v3044
        %3077 = vst [vmem:[%s315 + $0x18] sm:$0xff] %v3045
        %3078 = vst [vmem:[%s315 + $0x20] sm:$0xff] %v3046
        %3079 = vst [vmem:[%s315 + $0x28] sm:$0xff] %v3047
        %3080 = vst [vmem:[%s315 + $0x30] sm:$0xff] %v3048
        %3081 = vst [vmem:[%s315 + $0x38] sm:$0xff] %v3049
        %3082 = vst [vmem:[%s315 + $0x40] sm:$0xff] %v3050
        %3083 = vst [vmem:[%s315 + $0x48] sm:$0xff] %v3051
        %3084 = vst [vmem:[%s315 + $0x50] sm:$0xff] %v3052
        %3085 = vst [vmem:[%s315 + $0x58] sm:$0xff] %v3053
        %3086 = vst [vmem:[%s315 + $0x60] sm:$0xff] %v3054
        %3087 = vst [vmem:[%s315 + $0x68] sm:$0xff] %v3055
        %3088 = vst [vmem:[%s315 + $0x70] sm:$0xff] %v3056
        %3089 = vst [vmem:[%s315 + $0x78] sm:$0xff] %v3057
        %3090 = vst [vmem:[%s315 + $0x80] sm:$0xff] %v3058
        %3091 = vst [vmem:[%s315 + $0x88] sm:$0xff] %v3059
        %3092 = vst [vmem:[%s315 + $0x90] sm:$0xff] %v3060
        %3093 = vst [vmem:[%s315 + $0x98] sm:$0xff] %v3061
        %3094 = vst [vmem:[%s315 + $0xa0] sm:$0xff] %v3062
        %3095 = vst [vmem:[%s315 + $0xa8] sm:$0xff] %v3063
        %3096 = vst [vmem:[%s315 + $0xb0] sm:$0xff] %v3064
        %3097 = vst [vmem:[%s315 + $0xb8] sm:$0xff] %v3065
        %3098 = vst [vmem:[%s315 + $0xc0] sm:$0xff] %v3066
        %3099 = vst [vmem:[%s315 + $0xc8] sm:$0xff] %v3067
        %3100 = vst [vmem:[%s315 + $0xd0] sm:$0xff] %v3068
        %3101 = vst [vmem:[%s315 + $0xd8] sm:$0xff] %v3069
        %3102 = vst [vmem:[%s315 + $0xe0] sm:$0xff] %v3070
        %3103 = vst [vmem:[%s315 + $0xe8] sm:$0xff] %v3071
        %3104 = vst [vmem:[%s315 + $0xf0] sm:$0xff] %v3072
        %3105 = vst [vmem:[%s315 + $0xf8] sm:$0xff] %v3073
        %s3106 = sand.u32 %s185, 1
        %s3107 = scalar_lea.sflag [#allocation5], %s3106
        %s3108 = sand.u32 %s185, 1
        %s3109 = smul.addr %s3108, 256
        %s3110 = scalar_lea.vmem [#allocation8], %s3109
        // Predicated region
        $region57: #{tpu_custom_call.1} parent=47 // pred_check
          %p3111 = pneg %p195
        $region58: #{tpu_custom_call.1} parent=47 // pred_check_branch
          %3113 = sbr.rel (%p3111) target = $region60
        $region59: #{tpu_custom_call.1} parent=47 // pred_region
          %3115 = vsyncadd %s3107, 0
          %s3116 = smul.addr %s25, 32
          %s3117 = smul.addr %s3116, 8
          %s3118 = scalar_lea.hbm %s7, %s3117
          %s3119 = sshll.u32 %s3110, 4
          %s3120 = int_to_ptr.vmem [resolvable:$true] %s3119
          %s3121 = sshll.u32 %s3118, 4
          %s3122 = int_to_ptr.hbm [resolvable:$true] %s3121
          %3127 = dma.vmem_to_hbm [thread:$0]  %s3120, 4096, %s3122, %s3107, 128, 128, 8
        $region60: #{tpu_custom_call.1} parent=47 // pred_fallthru
          _
      $region48: #{tpu_custom_call.1} parent=5 // pred_fallthru
        _
      %p3128 = scmp.le.s32.totalorder 2, %s20
      // Predicated region
      $region61: #{tpu_custom_call.1} parent=5 // pred_check
        %p3129 = pneg %p3128
      $region62: #{tpu_custom_call.1} parent=5 // pred_check_branch
        %3131 = sbr.rel (%p3129) target = $region64
      $region63: #{tpu_custom_call.1} parent=5 // pred_region
        %s3132 = ssub.s32 %s20, 2
        // Predicated region
        $region65: #{tpu_custom_call.1} parent=63 // pred_check
          %p3133 = pneg %p201
        $region66: #{tpu_custom_call.1} parent=63 // pred_check_branch
          %3135 = sbr.rel (%p3133) target = $region68
        $region67: #{tpu_custom_call.1} parent=63 // pred_region
          %s3136 = sand.u32 %s186, 1
          %s3137 = scalar_lea.sflag [#allocation5], %s3136
          %s3138 = sand.u32 %s186, 1
          %s3139 = smul.addr %s3138, 256
          %s3140 = scalar_lea.vmem [#allocation8], %s3139
          %3142 = dma.done %s3137, 4096
        $region68: #{tpu_custom_call.1} parent=63 // pred_fallthru
          _
      $region64: #{tpu_custom_call.1} parent=5 // pred_fallthru
        _
    $region6: #{tpu_custom_call.1} parent=1 // loop_footer
      %s24 = sadd.s32 1, %s20
    $region7: #{tpu_custom_call.1} parent=1 // loop_footer_branch
      %19 = sbr.rel target = $region3
    $region8: #{tpu_custom_call.1} parent=1 // loop_exit
      _
    %3143 = vsyncpa [#allocation4], 1
    %s3144 = scalar_lea.sflag [#allocation4], 1
    %3145 = vsyncpa %s3144, 1
    %3146 = vsyncpa [#allocation7], 1
    %3147 = vsyncpa [#allocation5], 1
    %s3148 = scalar_lea.sflag [#allocation5], 1
    %3149 = vsyncpa %s3148, 1

</llo_original>
